<compile_context>
chip_gen: v6e
topology: v6e:2x2x1
jax: 0.10.0
libtpu: 0.0.40
codegen_flags: <defaults>
</compile_context>

<pallas_src>
import jax
import jax.numpy as jnp
import numpy as np
from jax.experimental import pallas as pl
from jax.experimental.pallas import tpu as pltpu

EOS_IDX = 3


def _make_kernel(weights, latent_dim, total_b):
    w_cmd = float(weights["loss_cmd_weight"])
    w_args = float(weights["loss_args_weight"])
    w_kl = float(weights["loss_kl_weight"])
    w_phys = float(weights.get("loss_phys_weight", 1.0))
    inv_latent = 1.0 / float(latent_dim)
    inv_b = 1.0 / float(total_b)

    def kernel(tgt_cmd_ref, tgt_args_ref, cmd_logits_ref, args_logits_ref,
               cam_ref, mu_ref, logvar_ref, cond_ref, dens_ref,
               wct_ref, wat_ref, bp_ref,
               out_ref, acc_ref):
        # ---- init running sums on the first batch tile ----
        @pl.when(pl.program_id(0) == 0)
        def _init():
            acc_ref[...] = jnp.zeros_like(acc_ref)

        tgt_cmd = tgt_cmd_ref[...]            # (TB, S) i32
        tgt_args = tgt_args_ref[...]          # (TB, S, A) i32
        cmd_logits = cmd_logits_ref[...]      # (TB, S, C) f32
        args_logits = args_logits_ref[...]    # (TB, S, A, D) f32

        TB, S = tgt_cmd.shape
        C = cmd_logits.shape[-1]
        A = tgt_args.shape[-1]
        D = args_logits.shape[-1]

        # ---- padding / visibility masks (no (S,S) matmuls): first-EOS position ----
        pos = jax.lax.broadcasted_iota(jnp.int32, (TB, S), 1)
        is_eos = (tgt_cmd == EOS_IDX)
        first_eos = jnp.min(jnp.where(is_eos, pos, S), axis=1, keepdims=True)   # (TB,1)
        pad = pos < first_eos
        ext = jnp.logical_or(pad, jnp.logical_and(pos >= 1, pos <= first_eos))
        vis = jnp.sum(is_eos.astype(jnp.float32), axis=1, keepdims=True) < float(S)
        pm = ext.astype(jnp.float32) * vis.astype(jnp.float32)                  # (TB,S)

        # ---- command cross-entropy (fused target pick, no one-hot tensor) ----
        m_c = jnp.max(cmd_logits, axis=-1, keepdims=True)
        e_c = jnp.exp(cmd_logits - m_c)
        z_c = jnp.sum(e_c, axis=-1, keepdims=True)
        lse_c = m_c + jnp.log(z_c)                                              # (TB,S,1)
        iota_c = jax.lax.broadcasted_iota(jnp.int32, (TB, S, C), 2)
        picked_c = jnp.sum(jnp.where(iota_c == tgt_cmd[..., None], cmd_logits, 0.0),
                           axis=-1, keepdims=True)
        s_ce_cmd = jnp.sum(pm[..., None] * (lse_c - picked_c))
        s_pm = jnp.sum(pm)

        # ---- args mask = CMD_ARGS_MASK[tgt_commands], unrolled VPU sum over C ----
        cam = cam_ref[...]                                                      # (C, A)
        amask = jnp.zeros((TB, S, A), jnp.float32)
        for c in range(C):
            amask = amask + (tgt_cmd == c).astype(jnp.float32)[..., None] \
                          * cam[c:c + 1, :][None, :, :]

        # ---- args cross-entropy ----
        m_a = jnp.max(args_logits, axis=-1, keepdims=True)
        e_a = jnp.exp(args_logits - m_a)
        z_a = jnp.sum(e_a, axis=-1, keepdims=True)
        lse_a = m_a + jnp.log(z_a)                                              # (TB,S,A,1)
        iota_a = jax.lax.broadcasted_iota(jnp.int32, (TB, S, A, D), 3)
        picked_a = jnp.sum(jnp.where(iota_a == (tgt_args + 1)[..., None],
                                     args_logits, 0.0), axis=-1, keepdims=True)
        s_ce_args = jnp.sum(amask * (lse_a - picked_a)[..., 0])
        s_amask = jnp.sum(amask)

        # ---- KL partial sum ----
        mu = mu_ref[...]
        logvar = logvar_ref[...]
        s_kl = jnp.sum(1.0 + logvar - mu * mu - jnp.exp(logvar))

        # ---- physical loss partials (softmax probs reuse e/z; no extra big copy) ----
        pooled_cmd = jnp.sum(e_c * (1.0 / z_c), axis=1) * (1.0 / float(S))      # (TB,C)
        p_args = e_a * (1.0 / z_a)                                              # (TB,S,A,D)
        pooled_args = jnp.sum(jnp.sum(p_args, axis=1), axis=1) * (1.0 / float(S * A))  # (TB,D)

        wct = wct_ref[...]                                                      # (2, C)
        wat = wat_ref[...]                                                      # (2, D)
        bp = bp_ref[...]                                                        # (1, 2)
        # Kx2 "matmuls" as VPU broadcast-multiply + lane reduce (2 active lanes only).
        pred0 = (jnp.sum(pooled_cmd * wct[0:1, :], axis=-1, keepdims=True)
                 + jnp.sum(pooled_args * wat[0:1, :], axis=-1, keepdims=True)
                 + bp[0:1, 0:1])                                                # (TB,1)
        pred1 = (jnp.sum(pooled_cmd * wct[1:2, :], axis=-1, keepdims=True)
                 + jnp.sum(pooled_args * wat[1:2, :], axis=-1, keepdims=True)
                 + bp[0:1, 1:2])                                                # (TB,1)

        cond = cond_ref[...]                                                    # (TB, 3+M)
        density = jnp.sum(cond[:, 3:] * dens_ref[...], axis=-1, keepdims=True)  # (TB,1)
        min_vol = jnp.minimum(cond[:, 0:1], cond[:, 1:2] / (density + 1e-6))
        min_thick = cond[:, 2:3]
        s_vol = jnp.sum(jnp.maximum(pred0 - min_vol, 0.0))
        s_thick = jnp.sum(jnp.maximum(min_thick - pred1, 0.0))

        # ---- accumulate partial sums into lanes of the (1,8) VMEM scratch ----
        lane = jax.lax.broadcasted_iota(jnp.int32, (1, 8), 1)
        contrib = (jnp.where(lane == 0, s_ce_cmd, 0.0)
                   + jnp.where(lane == 1, s_pm, 0.0)
                   + jnp.where(lane == 2, s_ce_args, 0.0)
                   + jnp.where(lane == 3, s_amask, 0.0)
                   + jnp.where(lane == 4, s_kl, 0.0)
                   + jnp.where(lane == 5, s_vol, 0.0)
                   + jnp.where(lane == 6, s_thick, 0.0))
        acc_ref[...] = acc_ref[...] + contrib

        # ---- finalize on the last batch tile: packed (1,8) loss vector ----
        @pl.when(pl.program_id(0) == pl.num_programs(0) - 1)
        def _finalize():
            acc = acc_ref[...]

            def lane_val(k):
                return jnp.sum(jnp.where(lane == k, acc, 0.0))

            loss_cmd = w_cmd * lane_val(0) / lane_val(1)
            loss_args = w_args * lane_val(2) / lane_val(3)
            loss_kl = w_kl * (-0.5) * lane_val(4) * inv_latent
            loss_phys = w_phys * (lane_val(5) + lane_val(6)) * inv_b
            total = loss_cmd + loss_args + loss_kl + loss_phys
            out_ref[...] = (jnp.where(lane == 0, loss_cmd, 0.0)
                            + jnp.where(lane == 1, loss_args, 0.0)
                            + jnp.where(lane == 2, loss_kl, 0.0)
                            + jnp.where(lane == 3, loss_phys, 0.0)
                            + jnp.where(lane == 4, total, 0.0))

    return kernel


def cad_loss_pallas(output, cmd_args_mask, densities, phys_w_cmd, phys_w_args,
                    phys_b, weights, block_b=8):
    tgt_commands = output["tgt_commands"].astype(jnp.int32)
    tgt_args = output["tgt_args"].astype(jnp.int32)
    command_logits = output["command_logits"].astype(jnp.float32)
    args_logits = output["args_logits"].astype(jnp.float32)
    mu = output["mu"].astype(jnp.float32)
    logvar = output["logvar"].astype(jnp.float32)
    cond = output["cond"].astype(jnp.float32)

    B, S = tgt_commands.shape
    A = tgt_args.shape[-1]
    C = command_logits.shape[-1]
    D = args_logits.shape[-1]
    L = mu.shape[-1]
    CW = cond.shape[-1]

    # Batch tile: must divide B, and keep 2-D blocks sublane-aligned (mult of 8) or == B.
    # Per-generation tuning: larger tiles on v6e (128 MiB VMEM), smaller on v7x (64 MiB).
    if B % block_b == 0 and (block_b % 8 == 0 or block_b == B):
        tb = block_b
    elif B % 8 == 0:
        tb = 8
    else:
        tb = B
    grid = (B // tb,)
    # TODO(synk): add a 'parallel' leading axis + per-core partial reduce for v7x's 2 TCs.

    wct = jnp.asarray(phys_w_cmd, jnp.float32).T            # (2, C)
    wat = jnp.asarray(phys_w_args, jnp.float32).T            # (2, D)
    bp = jnp.asarray(phys_b, jnp.float32).reshape(1, 2)
    cam = jnp.asarray(cmd_args_mask, jnp.float32)             # (C, A)
    dens = jnp.asarray(densities, jnp.float32).reshape(1, -1)  # (1, M)
    M = dens.shape[-1]

    kernel = _make_kernel(weights, latent_dim=L, total_b=B)

    def const(shape):
        n = len(shape)
        return pl.BlockSpec(shape, lambda i: (0,) * n)   # resident across grid steps

    in_specs = [
        pl.BlockSpec((tb, S), lambda i: (i, 0)),
        pl.BlockSpec((tb, S, A), lambda i: (i, 0, 0)),
        pl.BlockSpec((tb, S, C), lambda i: (i, 0, 0)),
        pl.BlockSpec((tb, S, A, D), lambda i: (i, 0, 0, 0)),
        const((C, A)),
        pl.BlockSpec((tb, L), lambda i: (i, 0)),
        pl.BlockSpec((tb, L), lambda i: (i, 0)),
        pl.BlockSpec((tb, CW), lambda i: (i, 0)),
        const((1, M)),
        const((2, C)),
        const((2, D)),
        const((1, 2)),
    ]
    out_spec = pl.BlockSpec((1, 8), lambda i: (0, 0))

    out = pl.pallas_call(
        kernel,
        out_shape=jax.ShapeDtypeStruct((1, 8), jnp.float32),
        grid_spec=pltpu.PrefetchScalarGridSpec(
            num_scalar_prefetch=0,
            grid=grid,
            in_specs=in_specs,
            out_specs=out_spec,
            scratch_shapes=[pltpu.VMEM((1, 8), jnp.float32)],
        ),
        compiler_params=pltpu.CompilerParams(
            dimension_semantics=("arbitrary",)),
    )(tgt_commands, tgt_args, command_logits, args_logits,
      cam, mu, logvar, cond, dens, wct, wat, bp)

    names = ["loss_cmd", "loss_args", "loss_kl", "loss_phys", "loss_total"]
    return {k: out[0, i] for i, k in enumerate(names)}


def cad_loss_reference(output, cmd_args_mask, densities, wpc, wpa, bp, weights):
    """Pure-JAX reference mirroring the PyTorch forward."""
    tc = output["tgt_commands"]
    ta = output["tgt_args"]
    cl = output["command_logits"]
    al = output["args_logits"]
    B, S = tc.shape

    is_eos = (tc == EOS_IDX)
    pad = (jnp.cumsum(is_eos.astype(jnp.int32), axis=-1) == 0).astype(jnp.float32)
    ext = jnp.concatenate([pad[:, :1], jnp.minimum(pad[:, 1:] + pad[:, :-1], 1.0)], axis=1)
    vis = (is_eos.sum(-1) < S).astype(jnp.float32)
    pm = ext * vis[:, None]

    ce_cmd = -jnp.take_along_axis(jax.nn.log_softmax(cl, -1), tc[..., None], axis=-1)[..., 0]
    loss_cmd = weights["loss_cmd_weight"] * jnp.sum(pm * ce_cmd) / jnp.sum(pm)

    amask = cmd_args_mask[tc]
    ce_args = -jnp.take_along_axis(jax.nn.log_softmax(al, -1), (ta + 1)[..., None], axis=-1)[..., 0]
    loss_args = weights["loss_args_weight"] * jnp.sum(amask * ce_args) / jnp.sum(amask)

    mu, logvar = output["mu"], output["logvar"]
    loss_kl = weights["loss_kl_weight"] * (
        -0.5 * jnp.sum(1.0 + logvar - mu ** 2 - jnp.exp(logvar)) / mu.shape[1])

    cmd_prob = jax.nn.softmax(cl, -1)
    args_prob = jax.nn.softmax(al, -1)
    pooled_cmd = cmd_prob.mean(axis=1)
    pooled_args = args_prob.reshape(B, -1, al.shape[-1]).mean(axis=1)
    pred = pooled_cmd @ wpc + pooled_args @ wpa + bp

    cond = output["cond"]
    density = jnp.sum(cond[:, 3:] * densities[0], axis=-1)
    inferred = cond[:, 1] / (density + 1e-6)
    min_vol = jnp.minimum(cond[:, 0], inferred)
    min_thick = cond[:, 2]
    loss_vol = jnp.mean(jnp.maximum(pred[:, 0] - min_vol, 0.0))
    loss_thick = jnp.mean(jnp.maximum(min_thick - pred[:, 1], 0.0))
    loss_phys = weights.get("loss_phys_weight", 1.0) * (loss_vol + loss_thick)

    total = loss_cmd + loss_args + loss_kl + loss_phys
    return {"loss_cmd": loss_cmd, "loss_args": loss_args, "loss_kl": loss_kl,
            "loss_phys": loss_phys, "loss_total": total}


if __name__ == "__main__":
    B, S = 16, 8
    n_commands, n_args = 6, 4
    args_dim_raw = 8
    args_dim = args_dim_raw + 1           # +1 as in the module
    latent_dim = 32
    n_materials = 6

    key = jax.random.PRNGKey(0)
    ks = jax.random.split(key, 12)

    base_cmd = jax.random.randint(ks[0], (B, S), 0, 3)            # drawing cmds {0,1,2}
    lengths = jax.random.randint(ks[10], (B,), 2, S)
    lengths = lengths.at[0].set(S)   # one sequence with no EOS (visibility edge case)
    lengths = lengths.at[1].set(0)   # one fully-EOS sequence (masked out)
    pos = jnp.arange(S)[None, :]
    tgt_commands = jnp.where(pos < lengths[:, None], base_cmd, EOS_IDX).astype(jnp.int32)
    tgt_args = jax.random.randint(ks[1], (B, S, n_args), -1, args_dim_raw).astype(jnp.int32)

    command_logits = jax.random.normal(ks[2], (B, S, n_commands), jnp.float32)
    args_logits = jax.random.normal(ks[3], (B, S, n_args, args_dim), jnp.float32)
    mu = jax.random.normal(ks[4], (B, latent_dim), jnp.float32)
    logvar = 0.1 * jax.random.normal(ks[5], (B, latent_dim), jnp.float32)

    vol = jax.random.uniform(ks[6], (B, 1), minval=0.5, maxval=2.0)
    mass = jax.random.uniform(ks[7], (B, 1), minval=1.0, maxval=5.0)
    thick = jax.random.uniform(ks[8], (B, 1), minval=0.01, maxval=0.1)
    mat = jax.nn.softmax(jax.random.normal(ks[9], (B, n_materials)), axis=-1)
    cond = jnp.concatenate([vol, mass, thick, mat], axis=-1).astype(jnp.float32)

    # deterministic CMD_ARGS_MASK (n_commands, n_args); EOS/SOL rows have no args
    cmd_args_mask = jnp.array(
        [[1, 1, 0, 0],
         [1, 1, 1, 0],
         [1, 0, 1, 0],
         [0, 0, 0, 0],
         [0, 0, 0, 0],
         [1, 1, 1, 1]], jnp.float32)

    densities = jnp.array([[2700., 7850., 8900., 7190., 8960., 19300.]], jnp.float32)

    # deterministic frozen "physical regressor": linear head on pooled probabilities
    phys_w_cmd = ((jnp.arange(n_commands * 2, dtype=jnp.float32)
                   .reshape(n_commands, 2) % 5.0) - 2.0) * 0.05
    phys_w_args = ((jnp.arange(args_dim * 2, dtype=jnp.float32)
                    .reshape(args_dim, 2) % 7.0) - 3.0) * 0.02
    phys_b = jnp.array([[0.6, 0.03]], jnp.float32)

    loss_weights = {"loss_cmd_weight": 1.0, "loss_args_weight": 2.0,
                    "loss_kl_weight": 0.5, "loss_phys_weight": 1.0}

    output = {"tgt_commands": tgt_commands, "tgt_args": tgt_args,
              "command_logits": command_logits, "args_logits": args_logits,
              "mu": mu, "logvar": logvar, "cond": cond}

    res = cad_loss_pallas(output, cmd_args_mask, densities,
                          phys_w_cmd, phys_w_args, phys_b, loss_weights,
                          block_b=8)   # -> grid of 2 batch tiles (exercises accumulation)
    jax.block_until_ready(res)

    ref = cad_loss_reference(output, cmd_args_mask, densities,
                             phys_w_cmd, phys_w_args, phys_b, loss_weights)
    for k in res:
        np.testing.assert_allclose(np.asarray(res[k]), np.asarray(ref[k]),
                                   rtol=2e-4, atol=1e-5)

    print("KERNEL_OK")
</pallas_src>

<mosaic_0001>
module attributes {stable_mosaic.version = 11 : i64} {
  func.func @kernel(%arg0: i32, %arg1: memref<8x8xi32, #tpu.memory_space<vmem>>, %arg2: memref<8x8x4xi32, #tpu.memory_space<vmem>>, %arg3: memref<8x8x6xf32, #tpu.memory_space<vmem>>, %arg4: memref<8x8x4x9xf32, #tpu.memory_space<vmem>>, %arg5: memref<6x4xf32, #tpu.memory_space<vmem>>, %arg6: memref<8x32xf32, #tpu.memory_space<vmem>>, %arg7: memref<8x32xf32, #tpu.memory_space<vmem>>, %arg8: memref<8x9xf32, #tpu.memory_space<vmem>>, %arg9: memref<1x6xf32, #tpu.memory_space<vmem>>, %arg10: memref<2x6xf32, #tpu.memory_space<vmem>>, %arg11: memref<2x9xf32, #tpu.memory_space<vmem>>, %arg12: memref<1x2xf32, #tpu.memory_space<vmem>>, %arg13: memref<1x8xf32, #tpu.memory_space<vmem>>, %arg14: memref<1x8xf32, #tpu.memory_space<vmem>>) attributes {dimension_semantics = [#tpu.dimension_semantics<arbitrary>], iteration_bounds = array<i64: 2>, scalar_prefetch = 0 : i64, scratch_operands = 1 : i64, tpu.core_type = #tpu.core_type<tc>, window_params = [{transform_indices = @transform_0, window_bounds = array<i64: 8, 8>}, {transform_indices = @transform_1, window_bounds = array<i64: 8, 8, 4>}, {transform_indices = @transform_2, window_bounds = array<i64: 8, 8, 6>}, {transform_indices = @transform_3, window_bounds = array<i64: 8, 8, 4, 9>}, {pipeline_mode = #tpu.pipeline_mode<synchronous>, transform_indices = @transform_4, window_bounds = array<i64: 6, 4>}, {transform_indices = @transform_5, window_bounds = array<i64: 8, 32>}, {transform_indices = @transform_6, window_bounds = array<i64: 8, 32>}, {transform_indices = @transform_7, window_bounds = array<i64: 8, 9>}, {pipeline_mode = #tpu.pipeline_mode<synchronous>, transform_indices = @transform_8, window_bounds = array<i64: 1, 6>}, {pipeline_mode = #tpu.pipeline_mode<synchronous>, transform_indices = @transform_9, window_bounds = array<i64: 2, 6>}, {pipeline_mode = #tpu.pipeline_mode<synchronous>, transform_indices = @transform_10, window_bounds = array<i64: 2, 9>}, {pipeline_mode = #tpu.pipeline_mode<synchronous>, transform_indices = @transform_11, window_bounds = array<i64: 1, 2>}, {pipeline_mode = #tpu.pipeline_mode<synchronous>, transform_indices = @transform_12, window_bounds = array<i64: 1, 8>}]} {
    %c0_i32 = arith.constant 0 : i32
    %0 = arith.cmpi eq, %arg0, %c0_i32 : i32
    %1 = arith.extui %0 : i1 to i32
    %c0_i32_0 = arith.constant 0 : i32
    %2 = arith.cmpi ne, %1, %c0_i32_0 : i32
    scf.if %2 {
      %cst_85 = arith.constant 0.000000e+00 : f32
      %294 = vector.broadcast %cst_85 : f32 to vector<1x8xf32>
      %c0_86 = arith.constant 0 : index
      %c0_87 = arith.constant 0 : index
      %295 = vector.load %arg14[%c0_86, %c0_87] : memref<1x8xf32, #tpu.memory_space<vmem>>, vector<1x8xf32>
      tpu.vector_store %arg14[%c0_86, %c0_87], %294 {strides = array<i32>} : memref<1x8xf32, #tpu.memory_space<vmem>>, vector<1x8xf32>,
    } else {
    }
    %c0 = arith.constant 0 : index
    %c0_1 = arith.constant 0 : index
    %3 = vector.load %arg1[%c0, %c0_1] : memref<8x8xi32, #tpu.memory_space<vmem>>, vector<8x8xi32>
    %c0_2 = arith.constant 0 : index
    %c0_3 = arith.constant 0 : index
    %c0_4 = arith.constant 0 : index
    %4 = vector.load %arg2[%c0_2, %c0_3, %c0_4] : memref<8x8x4xi32, #tpu.memory_space<vmem>>, vector<8x8x4xi32>
    %c0_5 = arith.constant 0 : index
    %c0_6 = arith.constant 0 : index
    %c0_7 = arith.constant 0 : index
    %5 = vector.load %arg3[%c0_5, %c0_6, %c0_7] : memref<8x8x6xf32, #tpu.memory_space<vmem>>, vector<8x8x6xf32>
    %c0_8 = arith.constant 0 : index
    %c0_9 = arith.constant 0 : index
    %c0_10 = arith.constant 0 : index
    %c0_11 = arith.constant 0 : index
    %6 = vector.load %arg4[%c0_8, %c0_9, %c0_10, %c0_11] : memref<8x8x4x9xf32, #tpu.memory_space<vmem>>, vector<8x8x4x9xf32>
    %7 = tpu.iota {dimensions = array<i32: 1>} : vector<8x8xi32>
    %c3_i32 = arith.constant 3 : i32
    %8 = vector.broadcast %c3_i32 : i32 to vector<8x8xi32>
    %9 = arith.cmpi eq, %3, %8 : vector<8x8xi32>
    %c8_i32 = arith.constant 8 : i32
    %10 = vector.broadcast %c8_i32 : i32 to vector<8x8xi32>
    %11 = arith.select %9, %7, %10 : vector<8x8xi1>, vector<8x8xi32>
    %cst = arith.constant dense<2147483647> : vector<8xi32>
    %12 = vector.multi_reduction <minsi>, %11, %cst [1] : vector<8x8xi32> to vector<8xi32>
    %13 = vector.shape_cast %12 : vector<8xi32> to vector<8x1xi32>
    %14 = vector.broadcast %13 : vector<8x1xi32> to vector<8x8xi32>
    %15 = arith.cmpi slt, %7, %14 : vector<8x8xi32>
    %c1_i32 = arith.constant 1 : i32
    %16 = vector.broadcast %c1_i32 : i32 to vector<8x8xi32>
    %17 = arith.cmpi sge, %7, %16 : vector<8x8xi32>
    %18 = vector.broadcast %13 : vector<8x1xi32> to vector<8x8xi32>
    %19 = arith.cmpi sle, %7, %18 : vector<8x8xi32>
    %20 = arith.andi %17, %19 : vector<8x8xi1>
    %21 = arith.ori %15, %20 : vector<8x8xi1>
    %22 = arith.extui %9 : vector<8x8xi1> to vector<8x8xi32>
    %23 = arith.sitofp %22 : vector<8x8xi32> to vector<8x8xf32>
    %cst_12 = arith.constant dense<0.000000e+00> : vector<8xf32>
    %24 = vector.multi_reduction <add>, %23, %cst_12 [1] : vector<8x8xf32> to vector<8xf32>
    %25 = vector.shape_cast %24 : vector<8xf32> to vector<8x1xf32>
    %cst_13 = arith.constant 8.000000e+00 : f32
    %26 = vector.broadcast %cst_13 : f32 to vector<8x1xf32>
    %27 = arith.cmpf olt, %25, %26 : vector<8x1xf32>
    %28 = arith.extui %21 : vector<8x8xi1> to vector<8x8xi32>
    %29 = arith.sitofp %28 : vector<8x8xi32> to vector<8x8xf32>
    %30 = arith.extui %27 : vector<8x1xi1> to vector<8x1xi32>
    %31 = arith.sitofp %30 : vector<8x1xi32> to vector<8x1xf32>
    %32 = vector.broadcast %31 : vector<8x1xf32> to vector<8x8xf32>
    %33 = arith.mulf %29, %32 : vector<8x8xf32>
    %cst_14 = arith.constant dense<0xFF800000> : vector<8x8xf32>
    %34 = vector.multi_reduction <maximumf>, %5, %cst_14 [2] : vector<8x8x6xf32> to vector<8x8xf32>
    %35 = vector.shape_cast %34 : vector<8x8xf32> to vector<8x8x1xf32>
    %36 = vector.broadcast %35 : vector<8x8x1xf32> to vector<8x8x6xf32>
    %37 = arith.subf %5, %36 : vector<8x8x6xf32>
    %38 = math.exp %37 : vector<8x8x6xf32>
    %cst_15 = arith.constant dense<0.000000e+00> : vector<8x8xf32>
    %39 = vector.multi_reduction <add>, %38, %cst_15 [2] : vector<8x8x6xf32> to vector<8x8xf32>
    %40 = vector.shape_cast %39 : vector<8x8xf32> to vector<8x8x1xf32>
    %41 = math.log %40 : vector<8x8x1xf32>
    %42 = arith.addf %35, %41 : vector<8x8x1xf32>
    %43 = tpu.iota {dimensions = array<i32: 2>} : vector<8x8x6xi32>
    %44 = vector.shape_cast %3 : vector<8x8xi32> to vector<8x8x1xi32>
    %45 = vector.broadcast %44 : vector<8x8x1xi32> to vector<8x8x6xi32>
    %46 = arith.cmpi eq, %43, %45 : vector<8x8x6xi32>
    %cst_16 = arith.constant 0.000000e+00 : f32
    %47 = vector.broadcast %cst_16 : f32 to vector<8x8x6xf32>
    %48 = arith.select %46, %5, %47 : vector<8x8x6xi1>, vector<8x8x6xf32>
    %cst_17 = arith.constant dense<0.000000e+00> : vector<8x8xf32>
    %49 = vector.multi_reduction <add>, %48, %cst_17 [2] : vector<8x8x6xf32> to vector<8x8xf32>
    %50 = vector.shape_cast %49 : vector<8x8xf32> to vector<8x8x1xf32>
    %51 = vector.shape_cast %33 : vector<8x8xf32> to vector<8x8x1xf32>
    %52 = arith.subf %42, %50 : vector<8x8x1xf32>
    %53 = arith.mulf %51, %52 : vector<8x8x1xf32>
    %54 = vector.shape_cast %53 : vector<8x8x1xf32> to vector<1x8x8x1xf32>
    %cst_18 = arith.constant dense<0.000000e+00> : vector<1xf32>
    %55 = vector.multi_reduction <add>, %54, %cst_18 [1, 2, 3] : vector<1x8x8x1xf32> to vector<1xf32>
    %56 = vector.shape_cast %55 : vector<1xf32> to vector<1x1x1x1xf32>
    %57 = vector.extract %56[0, 0, 0, 0] : f32 from vector<1x1x1x1xf32>
    %58 = vector.shape_cast %33 : vector<8x8xf32> to vector<1x8x8xf32>
    %cst_19 = arith.constant dense<0.000000e+00> : vector<1xf32>
    %59 = vector.multi_reduction <add>, %58, %cst_19 [1, 2] : vector<1x8x8xf32> to vector<1xf32>
    %60 = vector.shape_cast %59 : vector<1xf32> to vector<1x1x1xf32>
    %61 = vector.extract %60[0, 0, 0] : f32 from vector<1x1x1xf32>
    %c0_20 = arith.constant 0 : index
    %c0_21 = arith.constant 0 : index
    %62 = vector.load %arg5[%c0_20, %c0_21] : memref<6x4xf32, #tpu.memory_space<vmem>>, vector<6x4xf32>
    %cst_22 = arith.constant 0.000000e+00 : f32
    %63 = vector.broadcast %cst_22 : f32 to vector<8x8x4xf32>
    %c0_i32_23 = arith.constant 0 : i32
    %64 = vector.broadcast %c0_i32_23 : i32 to vector<8x8xi32>
    %65 = arith.cmpi eq, %3, %64 : vector<8x8xi32>
    %66 = arith.extui %65 : vector<8x8xi1> to vector<8x8xi32>
    %67 = arith.sitofp %66 : vector<8x8xi32> to vector<8x8xf32>
    %68 = vector.shape_cast %67 : vector<8x8xf32> to vector<8x8x1xf32>
    %69 = vector.extract_strided_slice %62 {offsets = [0, 0], sizes = [1, 4], strides = [1, 1]} : vector<6x4xf32> to vector<1x4xf32>
    %70 = vector.shape_cast %69 : vector<1x4xf32> to vector<1x1x4xf32>
    %71 = vector.broadcast %68 : vector<8x8x1xf32> to vector<8x8x4xf32>
    %72 = vector.broadcast %70 : vector<1x1x4xf32> to vector<8x8x4xf32>
    %73 = arith.mulf %71, %72 : vector<8x8x4xf32>
    %74 = arith.addf %63, %73 : vector<8x8x4xf32>
    %c1_i32_24 = arith.constant 1 : i32
    %75 = vector.broadcast %c1_i32_24 : i32 to vector<8x8xi32>
    %76 = arith.cmpi eq, %3, %75 : vector<8x8xi32>
    %77 = arith.extui %76 : vector<8x8xi1> to vector<8x8xi32>
    %78 = arith.sitofp %77 : vector<8x8xi32> to vector<8x8xf32>
    %79 = vector.shape_cast %78 : vector<8x8xf32> to vector<8x8x1xf32>
    %80 = vector.extract_strided_slice %62 {offsets = [1, 0], sizes = [1, 4], strides = [1, 1]} : vector<6x4xf32> to vector<1x4xf32>
    %81 = vector.shape_cast %80 : vector<1x4xf32> to vector<1x1x4xf32>
    %82 = vector.broadcast %79 : vector<8x8x1xf32> to vector<8x8x4xf32>
    %83 = vector.broadcast %81 : vector<1x1x4xf32> to vector<8x8x4xf32>
    %84 = arith.mulf %82, %83 : vector<8x8x4xf32>
    %85 = arith.addf %74, %84 : vector<8x8x4xf32>
    %c2_i32 = arith.constant 2 : i32
    %86 = vector.broadcast %c2_i32 : i32 to vector<8x8xi32>
    %87 = arith.cmpi eq, %3, %86 : vector<8x8xi32>
    %88 = arith.extui %87 : vector<8x8xi1> to vector<8x8xi32>
    %89 = arith.sitofp %88 : vector<8x8xi32> to vector<8x8xf32>
    %90 = vector.shape_cast %89 : vector<8x8xf32> to vector<8x8x1xf32>
    %91 = vector.extract_strided_slice %62 {offsets = [2, 0], sizes = [1, 4], strides = [1, 1]} : vector<6x4xf32> to vector<1x4xf32>
    %92 = vector.shape_cast %91 : vector<1x4xf32> to vector<1x1x4xf32>
    %93 = vector.broadcast %90 : vector<8x8x1xf32> to vector<8x8x4xf32>
    %94 = vector.broadcast %92 : vector<1x1x4xf32> to vector<8x8x4xf32>
    %95 = arith.mulf %93, %94 : vector<8x8x4xf32>
    %96 = arith.addf %85, %95 : vector<8x8x4xf32>
    %c3_i32_25 = arith.constant 3 : i32
    %97 = vector.broadcast %c3_i32_25 : i32 to vector<8x8xi32>
    %98 = arith.cmpi eq, %3, %97 : vector<8x8xi32>
    %99 = arith.extui %98 : vector<8x8xi1> to vector<8x8xi32>
    %100 = arith.sitofp %99 : vector<8x8xi32> to vector<8x8xf32>
    %101 = vector.shape_cast %100 : vector<8x8xf32> to vector<8x8x1xf32>
    %102 = vector.extract_strided_slice %62 {offsets = [3, 0], sizes = [1, 4], strides = [1, 1]} : vector<6x4xf32> to vector<1x4xf32>
    %103 = vector.shape_cast %102 : vector<1x4xf32> to vector<1x1x4xf32>
    %104 = vector.broadcast %101 : vector<8x8x1xf32> to vector<8x8x4xf32>
    %105 = vector.broadcast %103 : vector<1x1x4xf32> to vector<8x8x4xf32>
    %106 = arith.mulf %104, %105 : vector<8x8x4xf32>
    %107 = arith.addf %96, %106 : vector<8x8x4xf32>
    %c4_i32 = arith.constant 4 : i32
    %108 = vector.broadcast %c4_i32 : i32 to vector<8x8xi32>
    %109 = arith.cmpi eq, %3, %108 : vector<8x8xi32>
    %110 = arith.extui %109 : vector<8x8xi1> to vector<8x8xi32>
    %111 = arith.sitofp %110 : vector<8x8xi32> to vector<8x8xf32>
    %112 = vector.shape_cast %111 : vector<8x8xf32> to vector<8x8x1xf32>
    %113 = vector.extract_strided_slice %62 {offsets = [4, 0], sizes = [1, 4], strides = [1, 1]} : vector<6x4xf32> to vector<1x4xf32>
    %114 = vector.shape_cast %113 : vector<1x4xf32> to vector<1x1x4xf32>
    %115 = vector.broadcast %112 : vector<8x8x1xf32> to vector<8x8x4xf32>
    %116 = vector.broadcast %114 : vector<1x1x4xf32> to vector<8x8x4xf32>
    %117 = arith.mulf %115, %116 : vector<8x8x4xf32>
    %118 = arith.addf %107, %117 : vector<8x8x4xf32>
    %c5_i32 = arith.constant 5 : i32
    %119 = vector.broadcast %c5_i32 : i32 to vector<8x8xi32>
    %120 = arith.cmpi eq, %3, %119 : vector<8x8xi32>
    %121 = arith.extui %120 : vector<8x8xi1> to vector<8x8xi32>
    %122 = arith.sitofp %121 : vector<8x8xi32> to vector<8x8xf32>
    %123 = vector.shape_cast %122 : vector<8x8xf32> to vector<8x8x1xf32>
    %124 = vector.extract_strided_slice %62 {offsets = [5, 0], sizes = [1, 4], strides = [1, 1]} : vector<6x4xf32> to vector<1x4xf32>
    %125 = vector.shape_cast %124 : vector<1x4xf32> to vector<1x1x4xf32>
    %126 = vector.broadcast %123 : vector<8x8x1xf32> to vector<8x8x4xf32>
    %127 = vector.broadcast %125 : vector<1x1x4xf32> to vector<8x8x4xf32>
    %128 = arith.mulf %126, %127 : vector<8x8x4xf32>
    %129 = arith.addf %118, %128 : vector<8x8x4xf32>
    %cst_26 = arith.constant dense<0xFF800000> : vector<8x8x4xf32>
    %130 = vector.multi_reduction <maximumf>, %6, %cst_26 [3] : vector<8x8x4x9xf32> to vector<8x8x4xf32>
    %131 = vector.shape_cast %130 : vector<8x8x4xf32> to vector<8x8x4x1xf32>
    %132 = vector.broadcast %131 : vector<8x8x4x1xf32> to vector<8x8x4x9xf32>
    %133 = arith.subf %6, %132 : vector<8x8x4x9xf32>
    %134 = math.exp %133 : vector<8x8x4x9xf32>
    %cst_27 = arith.constant dense<0.000000e+00> : vector<8x8x4xf32>
    %135 = vector.multi_reduction <add>, %134, %cst_27 [3] : vector<8x8x4x9xf32> to vector<8x8x4xf32>
    %136 = vector.shape_cast %135 : vector<8x8x4xf32> to vector<8x8x4x1xf32>
    %137 = math.log %136 : vector<8x8x4x1xf32>
    %138 = arith.addf %131, %137 : vector<8x8x4x1xf32>
    %139 = tpu.iota {dimensions = array<i32: 3>} : vector<8x8x4x9xi32>
    %c1_i32_28 = arith.constant 1 : i32
    %140 = vector.broadcast %c1_i32_28 : i32 to vector<8x8x4xi32>
    %141 = arith.addi %4, %140 : vector<8x8x4xi32>
    %142 = vector.shape_cast %141 : vector<8x8x4xi32> to vector<8x8x4x1xi32>
    %143 = vector.broadcast %142 : vector<8x8x4x1xi32> to vector<8x8x4x9xi32>
    %144 = arith.cmpi eq, %139, %143 : vector<8x8x4x9xi32>
    %cst_29 = arith.constant 0.000000e+00 : f32
    %145 = vector.broadcast %cst_29 : f32 to vector<8x8x4x9xf32>
    %146 = arith.select %144, %6, %145 : vector<8x8x4x9xi1>, vector<8x8x4x9xf32>
    %cst_30 = arith.constant dense<0.000000e+00> : vector<8x8x4xf32>
    %147 = vector.multi_reduction <add>, %146, %cst_30 [3] : vector<8x8x4x9xf32> to vector<8x8x4xf32>
    %148 = vector.shape_cast %147 : vector<8x8x4xf32> to vector<8x8x4x1xf32>
    %149 = arith.subf %138, %148 : vector<8x8x4x1xf32>
    %150 = vector.shape_cast %149 : vector<8x8x4x1xf32> to vector<8x8x4xf32>
    %151 = arith.mulf %129, %150 : vector<8x8x4xf32>
    %152 = vector.shape_cast %151 : vector<8x8x4xf32> to vector<1x8x8x4xf32>
    %cst_31 = arith.constant dense<0.000000e+00> : vector<1xf32>
    %153 = vector.multi_reduction <add>, %152, %cst_31 [1, 2, 3] : vector<1x8x8x4xf32> to vector<1xf32>
    %154 = vector.shape_cast %153 : vector<1xf32> to vector<1x1x1x1xf32>
    %155 = vector.extract %154[0, 0, 0, 0] : f32 from vector<1x1x1x1xf32>
    %156 = vector.shape_cast %129 : vector<8x8x4xf32> to vector<1x8x8x4xf32>
    %cst_32 = arith.constant dense<0.000000e+00> : vector<1xf32>
    %157 = vector.multi_reduction <add>, %156, %cst_32 [1, 2, 3] : vector<1x8x8x4xf32> to vector<1xf32>
    %158 = vector.shape_cast %157 : vector<1xf32> to vector<1x1x1x1xf32>
    %159 = vector.extract %158[0, 0, 0, 0] : f32 from vector<1x1x1x1xf32>
    %c0_33 = arith.constant 0 : index
    %c0_34 = arith.constant 0 : index
    %160 = vector.load %arg6[%c0_33, %c0_34] : memref<8x32xf32, #tpu.memory_space<vmem>>, vector<8x32xf32>
    %c0_35 = arith.constant 0 : index
    %c0_36 = arith.constant 0 : index
    %161 = vector.load %arg7[%c0_35, %c0_36] : memref<8x32xf32, #tpu.memory_space<vmem>>, vector<8x32xf32>
    %cst_37 = arith.constant 1.000000e+00 : f32
    %162 = vector.broadcast %cst_37 : f32 to vector<8x32xf32>
    %163 = arith.addf %162, %161 : vector<8x32xf32>
    %164 = arith.mulf %160, %160 : vector<8x32xf32>
    %165 = arith.subf %163, %164 : vector<8x32xf32>
    %166 = math.exp %161 : vector<8x32xf32>
    %167 = arith.subf %165, %166 : vector<8x32xf32>
    %168 = vector.shape_cast %167 : vector<8x32xf32> to vector<1x8x32xf32>
    %cst_38 = arith.constant dense<0.000000e+00> : vector<1xf32>
    %169 = vector.multi_reduction <add>, %168, %cst_38 [1, 2] : vector<1x8x32xf32> to vector<1xf32>
    %170 = vector.shape_cast %169 : vector<1xf32> to vector<1x1x1xf32>
    %171 = vector.extract %170[0, 0, 0] : f32 from vector<1x1x1xf32>
    %cst_39 = arith.constant 1.000000e+00 : f32
    %172 = vector.broadcast %cst_39 : f32 to vector<8x8x1xf32>
    %173 = arith.divf %172, %40 : vector<8x8x1xf32>
    %174 = vector.broadcast %173 : vector<8x8x1xf32> to vector<8x8x6xf32>
    %175 = arith.mulf %38, %174 : vector<8x8x6xf32>
    %cst_40 = arith.constant dense<0.000000e+00> : vector<8x6xf32>
    %176 = vector.multi_reduction <add>, %175, %cst_40 [1] : vector<8x8x6xf32> to vector<8x6xf32>
    %cst_41 = arith.constant 1.250000e-01 : f32
    %177 = vector.broadcast %cst_41 : f32 to vector<8x6xf32>
    %178 = arith.mulf %176, %177 : vector<8x6xf32>
    %cst_42 = arith.constant 1.000000e+00 : f32
    %179 = vector.broadcast %cst_42 : f32 to vector<8x8x4x1xf32>
    %180 = arith.divf %179, %136 : vector<8x8x4x1xf32>
    %181 = vector.broadcast %180 : vector<8x8x4x1xf32> to vector<8x8x4x9xf32>
    %182 = arith.mulf %134, %181 : vector<8x8x4x9xf32>
    %cst_43 = arith.constant dense<0.000000e+00> : vector<8x4x9xf32>
    %183 = vector.multi_reduction <add>, %182, %cst_43 [1] : vector<8x8x4x9xf32> to vector<8x4x9xf32>
    %cst_44 = arith.constant dense<0.000000e+00> : vector<8x9xf32>
    %184 = vector.multi_reduction <add>, %183, %cst_44 [1] : vector<8x4x9xf32> to vector<8x9xf32>
    %cst_45 = arith.constant 3.125000e-02 : f32
    %185 = vector.broadcast %cst_45 : f32 to vector<8x9xf32>
    %186 = arith.mulf %184, %185 : vector<8x9xf32>
    %c0_46 = arith.constant 0 : index
    %c0_47 = arith.constant 0 : index
    %187 = vector.load %arg10[%c0_46, %c0_47] : memref<2x6xf32, #tpu.memory_space<vmem>>, vector<2x6xf32>
    %c0_48 = arith.constant 0 : index
    %c0_49 = arith.constant 0 : index
    %188 = vector.load %arg11[%c0_48, %c0_49] : memref<2x9xf32, #tpu.memory_space<vmem>>, vector<2x9xf32>
    %c0_50 = arith.constant 0 : index
    %c0_51 = arith.constant 0 : index
    %189 = vector.load %arg12[%c0_50, %c0_51] : memref<1x2xf32, #tpu.memory_space<vmem>>, vector<1x2xf32>
    %190 = vector.extract_strided_slice %187 {offsets = [0, 0], sizes = [1, 6], strides = [1, 1]} : vector<2x6xf32> to vector<1x6xf32>
    %191 = vector.broadcast %190 : vector<1x6xf32> to vector<8x6xf32>
    %192 = arith.mulf %178, %191 : vector<8x6xf32>
    %cst_52 = arith.constant dense<0.000000e+00> : vector<8xf32>
    %193 = vector.multi_reduction <add>, %192, %cst_52 [1] : vector<8x6xf32> to vector<8xf32>
    %194 = vector.shape_cast %193 : vector<8xf32> to vector<8x1xf32>
    %195 = vector.extract_strided_slice %188 {offsets = [0, 0], sizes = [1, 9], strides = [1, 1]} : vector<2x9xf32> to vector<1x9xf32>
    %196 = vector.broadcast %195 : vector<1x9xf32> to vector<8x9xf32>
    %197 = arith.mulf %186, %196 : vector<8x9xf32>
    %cst_53 = arith.constant dense<0.000000e+00> : vector<8xf32>
    %198 = vector.multi_reduction <add>, %197, %cst_53 [1] : vector<8x9xf32> to vector<8xf32>
    %199 = vector.shape_cast %198 : vector<8xf32> to vector<8x1xf32>
    %200 = arith.addf %194, %199 : vector<8x1xf32>
    %201 = vector.extract_strided_slice %189 {offsets = [0, 0], sizes = [1, 1], strides = [1, 1]} : vector<1x2xf32> to vector<1x1xf32>
    %202 = vector.broadcast %201 : vector<1x1xf32> to vector<8x1xf32>
    %203 = arith.addf %200, %202 : vector<8x1xf32>
    %204 = vector.extract_strided_slice %187 {offsets = [1, 0], sizes = [1, 6], strides = [1, 1]} : vector<2x6xf32> to vector<1x6xf32>
    %205 = vector.broadcast %204 : vector<1x6xf32> to vector<8x6xf32>
    %206 = arith.mulf %178, %205 : vector<8x6xf32>
    %cst_54 = arith.constant dense<0.000000e+00> : vector<8xf32>
    %207 = vector.multi_reduction <add>, %206, %cst_54 [1] : vector<8x6xf32> to vector<8xf32>
    %208 = vector.shape_cast %207 : vector<8xf32> to vector<8x1xf32>
    %209 = vector.extract_strided_slice %188 {offsets = [1, 0], sizes = [1, 9], strides = [1, 1]} : vector<2x9xf32> to vector<1x9xf32>
    %210 = vector.broadcast %209 : vector<1x9xf32> to vector<8x9xf32>
    %211 = arith.mulf %186, %210 : vector<8x9xf32>
    %cst_55 = arith.constant dense<0.000000e+00> : vector<8xf32>
    %212 = vector.multi_reduction <add>, %211, %cst_55 [1] : vector<8x9xf32> to vector<8xf32>
    %213 = vector.shape_cast %212 : vector<8xf32> to vector<8x1xf32>
    %214 = arith.addf %208, %213 : vector<8x1xf32>
    %215 = vector.extract_strided_slice %189 {offsets = [0, 1], sizes = [1, 1], strides = [1, 1]} : vector<1x2xf32> to vector<1x1xf32>
    %216 = vector.broadcast %215 : vector<1x1xf32> to vector<8x1xf32>
    %217 = arith.addf %214, %216 : vector<8x1xf32>
    %c0_56 = arith.constant 0 : index
    %c0_57 = arith.constant 0 : index
    %218 = vector.load %arg8[%c0_56, %c0_57] : memref<8x9xf32, #tpu.memory_space<vmem>>, vector<8x9xf32>
    %219 = vector.extract_strided_slice %218 {offsets = [0, 3], sizes = [8, 6], strides = [1, 1]} : vector<8x9xf32> to vector<8x6xf32>
    %c0_58 = arith.constant 0 : index
    %c0_59 = arith.constant 0 : index
    %220 = vector.load %arg9[%c0_58, %c0_59] : memref<1x6xf32, #tpu.memory_space<vmem>>, vector<1x6xf32>
    %221 = vector.broadcast %220 : vector<1x6xf32> to vector<8x6xf32>
    %222 = arith.mulf %219, %221 : vector<8x6xf32>
    %cst_60 = arith.constant dense<0.000000e+00> : vector<8xf32>
    %223 = vector.multi_reduction <add>, %222, %cst_60 [1] : vector<8x6xf32> to vector<8xf32>
    %224 = vector.shape_cast %223 : vector<8xf32> to vector<8x1xf32>
    %225 = vector.extract_strided_slice %218 {offsets = [0, 0], sizes = [8, 1], strides = [1, 1]} : vector<8x9xf32> to vector<8x1xf32>
    %226 = vector.extract_strided_slice %218 {offsets = [0, 1], sizes = [8, 1], strides = [1, 1]} : vector<8x9xf32> to vector<8x1xf32>
    %cst_61 = arith.constant 9.99999997E-7 : f32
    %227 = vector.broadcast %cst_61 : f32 to vector<8x1xf32>
    %228 = arith.addf %224, %227 : vector<8x1xf32>
    %229 = arith.divf %226, %228 : vector<8x1xf32>
    %230 = arith.minimumf %225, %229 : vector<8x1xf32>
    %231 = vector.extract_strided_slice %218 {offsets = [0, 2], sizes = [8, 1], strides = [1, 1]} : vector<8x9xf32> to vector<8x1xf32>
    %232 = arith.subf %203, %230 : vector<8x1xf32>
    %cst_62 = arith.constant 0.000000e+00 : f32
    %233 = vector.broadcast %cst_62 : f32 to vector<8x1xf32>
    %234 = arith.maximumf %232, %233 : vector<8x1xf32>
    %235 = vector.shape_cast %234 : vector<8x1xf32> to vector<1x8x1xf32>
    %cst_63 = arith.constant dense<0.000000e+00> : vector<1xf32>
    %236 = vector.multi_reduction <add>, %235, %cst_63 [1, 2] : vector<1x8x1xf32> to vector<1xf32>
    %237 = vector.shape_cast %236 : vector<1xf32> to vector<1x1x1xf32>
    %238 = vector.extract %237[0, 0, 0] : f32 from vector<1x1x1xf32>
    %239 = arith.subf %231, %217 : vector<8x1xf32>
    %cst_64 = arith.constant 0.000000e+00 : f32
    %240 = vector.broadcast %cst_64 : f32 to vector<8x1xf32>
    %241 = arith.maximumf %239, %240 : vector<8x1xf32>
    %242 = vector.shape_cast %241 : vector<8x1xf32> to vector<1x8x1xf32>
    %cst_65 = arith.constant dense<0.000000e+00> : vector<1xf32>
    %243 = vector.multi_reduction <add>, %242, %cst_65 [1, 2] : vector<1x8x1xf32> to vector<1xf32>
    %244 = vector.shape_cast %243 : vector<1xf32> to vector<1x1x1xf32>
    %245 = vector.extract %244[0, 0, 0] : f32 from vector<1x1x1xf32>
    %246 = tpu.iota {dimensions = array<i32: 1>} : vector<1x8xi32>
    %c0_i32_66 = arith.constant 0 : i32
    %247 = vector.broadcast %c0_i32_66 : i32 to vector<1x8xi32>
    %248 = arith.cmpi eq, %246, %247 : vector<1x8xi32>
    %cst_67 = arith.constant 0.000000e+00 : f32
    %249 = vector.broadcast %57 : f32 to vector<1x8xf32>
    %250 = vector.broadcast %cst_67 : f32 to vector<1x8xf32>
    %251 = arith.select %248, %249, %250 : vector<1x8xi1>, vector<1x8xf32>
    %c1_i32_68 = arith.constant 1 : i32
    %252 = vector.broadcast %c1_i32_68 : i32 to vector<1x8xi32>
    %253 = arith.cmpi eq, %246, %252 : vector<1x8xi32>
    %cst_69 = arith.constant 0.000000e+00 : f32
    %254 = vector.broadcast %61 : f32 to vector<1x8xf32>
    %255 = vector.broadcast %cst_69 : f32 to vector<1x8xf32>
    %256 = arith.select %253, %254, %255 : vector<1x8xi1>, vector<1x8xf32>
    %257 = arith.addf %251, %256 : vector<1x8xf32>
    %c2_i32_70 = arith.constant 2 : i32
    %258 = vector.broadcast %c2_i32_70 : i32 to vector<1x8xi32>
    %259 = arith.cmpi eq, %246, %258 : vector<1x8xi32>
    %cst_71 = arith.constant 0.000000e+00 : f32
    %260 = vector.broadcast %155 : f32 to vector<1x8xf32>
    %261 = vector.broadcast %cst_71 : f32 to vector<1x8xf32>
    %262 = arith.select %259, %260, %261 : vector<1x8xi1>, vector<1x8xf32>
    %263 = arith.addf %257, %262 : vector<1x8xf32>
    %c3_i32_72 = arith.constant 3 : i32
    %264 = vector.broadcast %c3_i32_72 : i32 to vector<1x8xi32>
    %265 = arith.cmpi eq, %246, %264 : vector<1x8xi32>
    %cst_73 = arith.constant 0.000000e+00 : f32
    %266 = vector.broadcast %159 : f32 to vector<1x8xf32>
    %267 = vector.broadcast %cst_73 : f32 to vector<1x8xf32>
    %268 = arith.select %265, %266, %267 : vector<1x8xi1>, vector<1x8xf32>
    %269 = arith.addf %263, %268 : vector<1x8xf32>
    %c4_i32_74 = arith.constant 4 : i32
    %270 = vector.broadcast %c4_i32_74 : i32 to vector<1x8xi32>
    %271 = arith.cmpi eq, %246, %270 : vector<1x8xi32>
    %cst_75 = arith.constant 0.000000e+00 : f32
    %272 = vector.broadcast %171 : f32 to vector<1x8xf32>
    %273 = vector.broadcast %cst_75 : f32 to vector<1x8xf32>
    %274 = arith.select %271, %272, %273 : vector<1x8xi1>, vector<1x8xf32>
    %275 = arith.addf %269, %274 : vector<1x8xf32>
    %c5_i32_76 = arith.constant 5 : i32
    %276 = vector.broadcast %c5_i32_76 : i32 to vector<1x8xi32>
    %277 = arith.cmpi eq, %246, %276 : vector<1x8xi32>
    %cst_77 = arith.constant 0.000000e+00 : f32
    %278 = vector.broadcast %238 : f32 to vector<1x8xf32>
    %279 = vector.broadcast %cst_77 : f32 to vector<1x8xf32>
    %280 = arith.select %277, %278, %279 : vector<1x8xi1>, vector<1x8xf32>
    %281 = arith.addf %275, %280 : vector<1x8xf32>
    %c6_i32 = arith.constant 6 : i32
    %282 = vector.broadcast %c6_i32 : i32 to vector<1x8xi32>
    %283 = arith.cmpi eq, %246, %282 : vector<1x8xi32>
    %cst_78 = arith.constant 0.000000e+00 : f32
    %284 = vector.broadcast %245 : f32 to vector<1x8xf32>
    %285 = vector.broadcast %cst_78 : f32 to vector<1x8xf32>
    %286 = arith.select %283, %284, %285 : vector<1x8xi1>, vector<1x8xf32>
    %287 = arith.addf %281, %286 : vector<1x8xf32>
    %c0_79 = arith.constant 0 : index
    %c0_80 = arith.constant 0 : index
    %288 = vector.load %arg14[%c0_79, %c0_80] : memref<1x8xf32, #tpu.memory_space<vmem>>, vector<1x8xf32>
    %289 = arith.addf %288, %287 : vector<1x8xf32>
    %c0_81 = arith.constant 0 : index
    %c0_82 = arith.constant 0 : index
    %290 = vector.load %arg14[%c0_81, %c0_82] : memref<1x8xf32, #tpu.memory_space<vmem>>, vector<1x8xf32>
    tpu.vector_store %arg14[%c0_81, %c0_82], %289 {strides = array<i32>} : memref<1x8xf32, #tpu.memory_space<vmem>>, vector<1x8xf32>,
    %c1_i32_83 = arith.constant 1 : i32
    %291 = arith.cmpi eq, %arg0, %c1_i32_83 : i32
    %292 = arith.extui %291 : i1 to i32
    %c0_i32_84 = arith.constant 0 : i32
    %293 = arith.cmpi ne, %292, %c0_i32_84 : i32
    scf.if %293 {
      %c0_85 = arith.constant 0 : index
      %c0_86 = arith.constant 0 : index
      %294 = vector.load %arg14[%c0_85, %c0_86] : memref<1x8xf32, #tpu.memory_space<vmem>>, vector<1x8xf32>
      %c0_i32_87 = arith.constant 0 : i32
      %295 = vector.broadcast %c0_i32_87 : i32 to vector<1x8xi32>
      %296 = arith.cmpi eq, %246, %295 : vector<1x8xi32>
      %cst_88 = arith.constant 0.000000e+00 : f32
      %297 = vector.broadcast %cst_88 : f32 to vector<1x8xf32>
      %298 = arith.select %296, %294, %297 : vector<1x8xi1>, vector<1x8xf32>
      %299 = vector.shape_cast %298 : vector<1x8xf32> to vector<1x1x8xf32>
      %cst_89 = arith.constant dense<0.000000e+00> : vector<1xf32>
      %300 = vector.multi_reduction <add>, %299, %cst_89 [1, 2] : vector<1x1x8xf32> to vector<1xf32>
      %301 = vector.shape_cast %300 : vector<1xf32> to vector<1x1x1xf32>
      %302 = vector.extract %301[0, 0, 0] : f32 from vector<1x1x1xf32>
      %cst_90 = arith.constant 1.000000e+00 : f32
      %303 = arith.mulf %cst_90, %302 : f32
      %c1_i32_91 = arith.constant 1 : i32
      %304 = vector.broadcast %c1_i32_91 : i32 to vector<1x8xi32>
      %305 = arith.cmpi eq, %246, %304 : vector<1x8xi32>
      %cst_92 = arith.constant 0.000000e+00 : f32
      %306 = vector.broadcast %cst_92 : f32 to vector<1x8xf32>
      %307 = arith.select %305, %294, %306 : vector<1x8xi1>, vector<1x8xf32>
      %308 = vector.shape_cast %307 : vector<1x8xf32> to vector<1x1x8xf32>
      %cst_93 = arith.constant dense<0.000000e+00> : vector<1xf32>
      %309 = vector.multi_reduction <add>, %308, %cst_93 [1, 2] : vector<1x1x8xf32> to vector<1xf32>
      %310 = vector.shape_cast %309 : vector<1xf32> to vector<1x1x1xf32>
      %311 = vector.extract %310[0, 0, 0] : f32 from vector<1x1x1xf32>
      %312 = arith.divf %303, %311 : f32
      %c2_i32_94 = arith.constant 2 : i32
      %313 = vector.broadcast %c2_i32_94 : i32 to vector<1x8xi32>
      %314 = arith.cmpi eq, %246, %313 : vector<1x8xi32>
      %cst_95 = arith.constant 0.000000e+00 : f32
      %315 = vector.broadcast %cst_95 : f32 to vector<1x8xf32>
      %316 = arith.select %314, %294, %315 : vector<1x8xi1>, vector<1x8xf32>
      %317 = vector.shape_cast %316 : vector<1x8xf32> to vector<1x1x8xf32>
      %cst_96 = arith.constant dense<0.000000e+00> : vector<1xf32>
      %318 = vector.multi_reduction <add>, %317, %cst_96 [1, 2] : vector<1x1x8xf32> to vector<1xf32>
      %319 = vector.shape_cast %318 : vector<1xf32> to vector<1x1x1xf32>
      %320 = vector.extract %319[0, 0, 0] : f32 from vector<1x1x1xf32>
      %cst_97 = arith.constant 2.000000e+00 : f32
      %321 = arith.mulf %cst_97, %320 : f32
      %c3_i32_98 = arith.constant 3 : i32
      %322 = vector.broadcast %c3_i32_98 : i32 to vector<1x8xi32>
      %323 = arith.cmpi eq, %246, %322 : vector<1x8xi32>
      %cst_99 = arith.constant 0.000000e+00 : f32
      %324 = vector.broadcast %cst_99 : f32 to vector<1x8xf32>
      %325 = arith.select %323, %294, %324 : vector<1x8xi1>, vector<1x8xf32>
      %326 = vector.shape_cast %325 : vector<1x8xf32> to vector<1x1x8xf32>
      %cst_100 = arith.constant dense<0.000000e+00> : vector<1xf32>
      %327 = vector.multi_reduction <add>, %326, %cst_100 [1, 2] : vector<1x1x8xf32> to vector<1xf32>
      %328 = vector.shape_cast %327 : vector<1xf32> to vector<1x1x1xf32>
      %329 = vector.extract %328[0, 0, 0] : f32 from vector<1x1x1xf32>
      %330 = arith.divf %321, %329 : f32
      %c4_i32_101 = arith.constant 4 : i32
      %331 = vector.broadcast %c4_i32_101 : i32 to vector<1x8xi32>
      %332 = arith.cmpi eq, %246, %331 : vector<1x8xi32>
      %cst_102 = arith.constant 0.000000e+00 : f32
      %333 = vector.broadcast %cst_102 : f32 to vector<1x8xf32>
      %334 = arith.select %332, %294, %333 : vector<1x8xi1>, vector<1x8xf32>
      %335 = vector.shape_cast %334 : vector<1x8xf32> to vector<1x1x8xf32>
      %cst_103 = arith.constant dense<0.000000e+00> : vector<1xf32>
      %336 = vector.multi_reduction <add>, %335, %cst_103 [1, 2] : vector<1x1x8xf32> to vector<1xf32>
      %337 = vector.shape_cast %336 : vector<1xf32> to vector<1x1x1xf32>
      %338 = vector.extract %337[0, 0, 0] : f32 from vector<1x1x1xf32>
      %cst_104 = arith.constant -2.500000e-01 : f32
      %339 = arith.mulf %cst_104, %338 : f32
      %cst_105 = arith.constant 3.125000e-02 : f32
      %340 = arith.mulf %339, %cst_105 : f32
      %c5_i32_106 = arith.constant 5 : i32
      %341 = vector.broadcast %c5_i32_106 : i32 to vector<1x8xi32>
      %342 = arith.cmpi eq, %246, %341 : vector<1x8xi32>
      %cst_107 = arith.constant 0.000000e+00 : f32
      %343 = vector.broadcast %cst_107 : f32 to vector<1x8xf32>
      %344 = arith.select %342, %294, %343 : vector<1x8xi1>, vector<1x8xf32>
      %345 = vector.shape_cast %344 : vector<1x8xf32> to vector<1x1x8xf32>
      %cst_108 = arith.constant dense<0.000000e+00> : vector<1xf32>
      %346 = vector.multi_reduction <add>, %345, %cst_108 [1, 2] : vector<1x1x8xf32> to vector<1xf32>
      %347 = vector.shape_cast %346 : vector<1xf32> to vector<1x1x1xf32>
      %348 = vector.extract %347[0, 0, 0] : f32 from vector<1x1x1xf32>
      %c6_i32_109 = arith.constant 6 : i32
      %349 = vector.broadcast %c6_i32_109 : i32 to vector<1x8xi32>
      %350 = arith.cmpi eq, %246, %349 : vector<1x8xi32>
      %cst_110 = arith.constant 0.000000e+00 : f32
      %351 = vector.broadcast %cst_110 : f32 to vector<1x8xf32>
      %352 = arith.select %350, %294, %351 : vector<1x8xi1>, vector<1x8xf32>
      %353 = vector.shape_cast %352 : vector<1x8xf32> to vector<1x1x8xf32>
      %cst_111 = arith.constant dense<0.000000e+00> : vector<1xf32>
      %354 = vector.multi_reduction <add>, %353, %cst_111 [1, 2] : vector<1x1x8xf32> to vector<1xf32>
      %355 = vector.shape_cast %354 : vector<1xf32> to vector<1x1x1xf32>
      %356 = vector.extract %355[0, 0, 0] : f32 from vector<1x1x1xf32>
      %357 = arith.addf %348, %356 : f32
      %cst_112 = arith.constant 1.000000e+00 : f32
      %358 = arith.mulf %cst_112, %357 : f32
      %cst_113 = arith.constant 6.250000e-02 : f32
      %359 = arith.mulf %358, %cst_113 : f32
      %360 = arith.addf %312, %330 : f32
      %361 = arith.addf %360, %340 : f32
      %362 = arith.addf %361, %359 : f32
      %c0_i32_114 = arith.constant 0 : i32
      %363 = vector.broadcast %c0_i32_114 : i32 to vector<1x8xi32>
      %364 = arith.cmpi eq, %246, %363 : vector<1x8xi32>
      %cst_115 = arith.constant 0.000000e+00 : f32
      %365 = vector.broadcast %312 : f32 to vector<1x8xf32>
      %366 = vector.broadcast %cst_115 : f32 to vector<1x8xf32>
      %367 = arith.select %364, %365, %366 : vector<1x8xi1>, vector<1x8xf32>
      %c1_i32_116 = arith.constant 1 : i32
      %368 = vector.broadcast %c1_i32_116 : i32 to vector<1x8xi32>
      %369 = arith.cmpi eq, %246, %368 : vector<1x8xi32>
      %cst_117 = arith.constant 0.000000e+00 : f32
      %370 = vector.broadcast %330 : f32 to vector<1x8xf32>
      %371 = vector.broadcast %cst_117 : f32 to vector<1x8xf32>
      %372 = arith.select %369, %370, %371 : vector<1x8xi1>, vector<1x8xf32>
      %373 = arith.addf %367, %372 : vector<1x8xf32>
      %c2_i32_118 = arith.constant 2 : i32
      %374 = vector.broadcast %c2_i32_118 : i32 to vector<1x8xi32>
      %375 = arith.cmpi eq, %246, %374 : vector<1x8xi32>
      %cst_119 = arith.constant 0.000000e+00 : f32
      %376 = vector.broadcast %340 : f32 to vector<1x8xf32>
      %377 = vector.broadcast %cst_119 : f32 to vector<1x8xf32>
      %378 = arith.select %375, %376, %377 : vector<1x8xi1>, vector<1x8xf32>
      %379 = arith.addf %373, %378 : vector<1x8xf32>
      %c3_i32_120 = arith.constant 3 : i32
      %380 = vector.broadcast %c3_i32_120 : i32 to vector<1x8xi32>
      %381 = arith.cmpi eq, %246, %380 : vector<1x8xi32>
      %cst_121 = arith.constant 0.000000e+00 : f32
      %382 = vector.broadcast %359 : f32 to vector<1x8xf32>
      %383 = vector.broadcast %cst_121 : f32 to vector<1x8xf32>
      %384 = arith.select %381, %382, %383 : vector<1x8xi1>, vector<1x8xf32>
      %385 = arith.addf %379, %384 : vector<1x8xf32>
      %c4_i32_122 = arith.constant 4 : i32
      %386 = vector.broadcast %c4_i32_122 : i32 to vector<1x8xi32>
      %387 = arith.cmpi eq, %246, %386 : vector<1x8xi32>
      %cst_123 = arith.constant 0.000000e+00 : f32
      %388 = vector.broadcast %362 : f32 to vector<1x8xf32>
      %389 = vector.broadcast %cst_123 : f32 to vector<1x8xf32>
      %390 = arith.select %387, %388, %389 : vector<1x8xi1>, vector<1x8xf32>
      %391 = arith.addf %385, %390 : vector<1x8xf32>
      %c0_124 = arith.constant 0 : index
      %c0_125 = arith.constant 0 : index
      %392 = vector.load %arg13[%c0_124, %c0_125] : memref<1x8xf32, #tpu.memory_space<vmem>>, vector<1x8xf32>
      tpu.vector_store %arg13[%c0_124, %c0_125], %391 {strides = array<i32>} : memref<1x8xf32, #tpu.memory_space<vmem>>, vector<1x8xf32>,
    } else {
    }
    return
  }
  func.func @transform_0(%arg0: i32) -> (i32, i32) {
    %c0_i32 = arith.constant 0 : i32
    %c0_i32_0 = arith.constant 0 : i32
    return %arg0, %c0_i32 : i32, i32
  }
  func.func @transform_1(%arg0: i32) -> (i32, i32, i32) {
    %c0_i32 = arith.constant 0 : i32
    %c0_i32_0 = arith.constant 0 : i32
    %c0_i32_1 = arith.constant 0 : i32
    return %arg0, %c0_i32, %c0_i32_0 : i32, i32, i32
  }
  func.func @transform_2(%arg0: i32) -> (i32, i32, i32) {
    %c0_i32 = arith.constant 0 : i32
    %c0_i32_0 = arith.constant 0 : i32
    %c0_i32_1 = arith.constant 0 : i32
    return %arg0, %c0_i32, %c0_i32_0 : i32, i32, i32
  }
  func.func @transform_3(%arg0: i32) -> (i32, i32, i32, i32) {
    %c0_i32 = arith.constant 0 : i32
    %c0_i32_0 = arith.constant 0 : i32
    %c0_i32_1 = arith.constant 0 : i32
    %c0_i32_2 = arith.constant 0 : i32
    return %arg0, %c0_i32, %c0_i32_0, %c0_i32_1 : i32, i32, i32, i32
  }
  func.func @transform_4(%arg0: i32) -> (i32, i32) {
    %c0_i32 = arith.constant 0 : i32
    %c0_i32_0 = arith.constant 0 : i32
    %c0_i32_1 = arith.constant 0 : i32
    return %c0_i32, %c0_i32_0 : i32, i32
  }
  func.func @transform_5(%arg0: i32) -> (i32, i32) {
    %c0_i32 = arith.constant 0 : i32
    %c0_i32_0 = arith.constant 0 : i32
    return %arg0, %c0_i32 : i32, i32
  }
  func.func @transform_6(%arg0: i32) -> (i32, i32) {
    %c0_i32 = arith.constant 0 : i32
    %c0_i32_0 = arith.constant 0 : i32
    return %arg0, %c0_i32 : i32, i32
  }
  func.func @transform_7(%arg0: i32) -> (i32, i32) {
    %c0_i32 = arith.constant 0 : i32
    %c0_i32_0 = arith.constant 0 : i32
    return %arg0, %c0_i32 : i32, i32
  }
  func.func @transform_8(%arg0: i32) -> (i32, i32) {
    %c0_i32 = arith.constant 0 : i32
    %c0_i32_0 = arith.constant 0 : i32
    %c0_i32_1 = arith.constant 0 : i32
    return %c0_i32, %c0_i32_0 : i32, i32
  }
  func.func @transform_9(%arg0: i32) -> (i32, i32) {
    %c0_i32 = arith.constant 0 : i32
    %c0_i32_0 = arith.constant 0 : i32
    %c0_i32_1 = arith.constant 0 : i32
    return %c0_i32, %c0_i32_0 : i32, i32
  }
  func.func @transform_10(%arg0: i32) -> (i32, i32) {
    %c0_i32 = arith.constant 0 : i32
    %c0_i32_0 = arith.constant 0 : i32
    %c0_i32_1 = arith.constant 0 : i32
    return %c0_i32, %c0_i32_0 : i32, i32
  }
  func.func @transform_11(%arg0: i32) -> (i32, i32) {
    %c0_i32 = arith.constant 0 : i32
    %c0_i32_0 = arith.constant 0 : i32
    %c0_i32_1 = arith.constant 0 : i32
    return %c0_i32, %c0_i32_0 : i32, i32
  }
  func.func @transform_12(%arg0: i32) -> (i32, i32) {
    %c0_i32 = arith.constant 0 : i32
    %c0_i32_0 = arith.constant 0 : i32
    %c0_i32_1 = arith.constant 0 : i32
    return %c0_i32, %c0_i32_0 : i32, i32
  }
}

</mosaic_0001>

<llo_original>
// kernel: tpu_custom_call.1
$region0: #{tpu_custom_call.1}
  #allocation0 [shape = 'u32[]', space=smem, size = 0x4, offset = 0x4, fixed_abs, tag = 'smem constant byte address 0x4 - core index']
  #allocation1 [shape = 'u32[144,128]{1,0:T(1,128)}', space=vmem, size = 0x12000, scoped, tag = 'internal scratch']
  #allocation2 [shape = 'f32[1,8]{1,0:T(1,128)}', space=vmem, size = 0x200, scoped, tag = 'scratch operand']
  %s0 = inlined_call_operand.vmem [shape: s32[16,8], index: 0, kind: input, shape index: {}]
  %s1 = inlined_call_operand.vmem [shape: s32[16,8,4], index: 1, kind: input, shape index: {}]
  %s2 = inlined_call_operand.vmem [shape: f32[16,8,6], index: 2, kind: input, shape index: {}]
  %s3 = inlined_call_operand.vmem [shape: f32[16,8,4,9], index: 3, kind: input, shape index: {}]
  %s4 = inlined_call_operand.vmem [shape: f32[6,4], index: 4, kind: input, shape index: {}]
  %s5 = inlined_call_operand.vmem [shape: f32[16,32], index: 5, kind: input, shape index: {}]
  %s6 = inlined_call_operand.vmem [shape: f32[16,32], index: 6, kind: input, shape index: {}]
  %s7 = inlined_call_operand.vmem [shape: f32[16,9], index: 7, kind: input, shape index: {}]
  %s8 = inlined_call_operand.vmem [shape: f32[1,6], index: 8, kind: input, shape index: {}]
  %s9 = inlined_call_operand.vmem [shape: f32[2,6], index: 9, kind: input, shape index: {}]
  %s10 = inlined_call_operand.vmem [shape: f32[2,9], index: 10, kind: input, shape index: {}]
  %s11 = inlined_call_operand.vmem [shape: f32[1,2], index: 11, kind: input, shape index: {}]
  %s12 = inlined_call_operand.hbm [shape: f32[1,8], index: 12, kind: output, shape index: {}]
  %s13 = sld [smem:[#allocation0]]
  $region89: #{tpu_custom_call.1} parent=0
    _
  %s15 = ssub.s32 1, %s13
  %s16 = scalar_select 0, %s15, %s13
  $region1: #{tpu_custom_call.1} parent=0
    #allocation3 [shape = 'u8[512]{0}', space=vmem, size = 0x400, scoped, tag = 'output window, operand 0, single buffered']
    #allocation4 [shape = 's32[2]{0}', space=sflag, size = 0x8, scoped, tag = 'scoped memory for tpu_custom_call.1']
    %17 = vsyncpa [#allocation4], 0
    loop: start=0, step=1, limit=4
    $region2: #{tpu_custom_call.1} parent=1 // loop_pre_header
      _
    $region3: #{tpu_custom_call.1} parent=1 // loop_header
      %s19 = sphi 0, %s23
      %p20 = scmp.ge.s32.totalorder %s19, 4
      %s29 = sphi 0, %s31
      %s32 = sphi 0, %s29
      %s33 = sphi 0, %s32
      %s49 = sphi 0, %s33
      %s55 = sphi 0, %s57
      %s58 = sphi 0, %s55
      %s59 = sphi 0, %s58
      %s75 = sphi 0, %s59
      %s81 = sphi 0, %s83
      %s84 = sphi 0, %s81
      %s85 = sphi 0, %s84
      %s101 = sphi 0, %s85
      %s107 = sphi 0, %s109
      %s110 = sphi 0, %s107
      %s111 = sphi 0, %s110
      %s127 = sphi 0, %s111
      %s131 = sphi 0, %s131
      %s133 = sphi 0, %s131
      %s134 = sphi 0, %s133
      %s148 = sphi 0, %s134
      %s154 = sphi 0, %s156
      %s157 = sphi 0, %s154
      %s158 = sphi 0, %s157
      %s174 = sphi 0, %s158
      %s180 = sphi 0, %s182
      %s183 = sphi 0, %s180
      %s184 = sphi 0, %s183
      %s200 = sphi 0, %s184
      %s206 = sphi 0, %s208
      %s209 = sphi 0, %s206
      %s210 = sphi 0, %s209
      %s226 = sphi 0, %s210
      %s230 = sphi 0, %s230
      %s232 = sphi 0, %s230
      %s233 = sphi 0, %s232
      %s247 = sphi 0, %s233
      %s251 = sphi 0, %s251
      %s253 = sphi 0, %s251
      %s254 = sphi 0, %s253
      %s268 = sphi 0, %s254
      %s272 = sphi 0, %s272
      %s274 = sphi 0, %s272
      %s275 = sphi 0, %s274
      %s289 = sphi 0, %s275
      %s293 = sphi 0, %s293
      %s295 = sphi 0, %s293
      %s296 = sphi 0, %s295
      %s310 = sphi 0, %s296
      %s314 = sphi 0, %s314
      %s316 = sphi 0, %s314
      %s317 = sphi 0, %s316
      %s331 = sphi 0, %s317
    $region4: #{tpu_custom_call.1} parent=1 // loop_header_branch
      %22 = sbr.rel (%p20) target = $region8
    $region5: #{tpu_custom_call.1} parent=1 // loop_body
      %s24 = ssub.s32 %s19, 1
      %s25 = ssub.s32 %s19, 2
      %s26 = sadd.s32 %s19, 1
      %s27 = ssub.s32 %s19, %s26
      %p28 = scmp.eq.s32.totalorder %s27, 0
      %s30 = sadd.s32 %s29, 1
      %s31 = scalar_select %p28, %s29, %s30
      %p34 = pneg %p28
      %p35 = scmp.eq.s32.totalorder %s19, 1
      %p36 = por %p34, %p35
      %p37 = scmp.ne.s32.totalorder %s29, %s32
      %p38 = scmp.eq.s32.totalorder %s19, 0
      %p39 = por %p37, %p38
      %p40 = scmp.ne.s32.totalorder %s29, %s32
      %p41 = scmp.eq.s32.totalorder %s24, 1
      %p42 = por %p40, %p41
      %p43 = scmp.ne.s32.totalorder %s32, %s33
      %p44 = scmp.eq.s32.totalorder %s24, 0
      %p45 = por %p43, %p44
      %p46 = scmp.ne.s32.totalorder %s32, %s33
      %p47 = scmp.eq.s32.totalorder %s25, 1
      %p48 = por %p46, %p47
      %p50 = scmp.ne.s32.totalorder %s33, %s49
      %p51 = scmp.eq.s32.totalorder %s25, 0
      %p52 = por %p50, %p51
      %s53 = ssub.s32 %s19, %s26
      %p54 = scmp.eq.s32.totalorder %s53, 0
      %s56 = sadd.s32 %s55, 1
      %s57 = scalar_select %p54, %s55, %s56
      %p60 = pneg %p54
      %p61 = scmp.eq.s32.totalorder %s19, 1
      %p62 = por %p60, %p61
      %p63 = scmp.ne.s32.totalorder %s55, %s58
      %p64 = scmp.eq.s32.totalorder %s19, 0
      %p65 = por %p63, %p64
      %p66 = scmp.ne.s32.totalorder %s55, %s58
      %p67 = scmp.eq.s32.totalorder %s24, 1
      %p68 = por %p66, %p67
      %p69 = scmp.ne.s32.totalorder %s58, %s59
      %p70 = scmp.eq.s32.totalorder %s24, 0
      %p71 = por %p69, %p70
      %p72 = scmp.ne.s32.totalorder %s58, %s59
      %p73 = scmp.eq.s32.totalorder %s25, 1
      %p74 = por %p72, %p73
      %p76 = scmp.ne.s32.totalorder %s59, %s75
      %p77 = scmp.eq.s32.totalorder %s25, 0
      %p78 = por %p76, %p77
      %s79 = ssub.s32 %s19, %s26
      %p80 = scmp.eq.s32.totalorder %s79, 0
      %s82 = sadd.s32 %s81, 1
      %s83 = scalar_select %p80, %s81, %s82
      %p86 = pneg %p80
      %p87 = scmp.eq.s32.totalorder %s19, 1
      %p88 = por %p86, %p87
      %p89 = scmp.ne.s32.totalorder %s81, %s84
      %p90 = scmp.eq.s32.totalorder %s19, 0
      %p91 = por %p89, %p90
      %p92 = scmp.ne.s32.totalorder %s81, %s84
      %p93 = scmp.eq.s32.totalorder %s24, 1
      %p94 = por %p92, %p93
      %p95 = scmp.ne.s32.totalorder %s84, %s85
      %p96 = scmp.eq.s32.totalorder %s24, 0
      %p97 = por %p95, %p96
      %p98 = scmp.ne.s32.totalorder %s84, %s85
      %p99 = scmp.eq.s32.totalorder %s25, 1
      %p100 = por %p98, %p99
      %p102 = scmp.ne.s32.totalorder %s85, %s101
      %p103 = scmp.eq.s32.totalorder %s25, 0
      %p104 = por %p102, %p103
      %s105 = ssub.s32 %s19, %s26
      %p106 = scmp.eq.s32.totalorder %s105, 0
      %s108 = sadd.s32 %s107, 1
      %s109 = scalar_select %p106, %s107, %s108
      %p112 = pneg %p106
      %p113 = scmp.eq.s32.totalorder %s19, 1
      %p114 = por %p112, %p113
      %p115 = scmp.ne.s32.totalorder %s107, %s110
      %p116 = scmp.eq.s32.totalorder %s19, 0
      %p117 = por %p115, %p116
      %p118 = scmp.ne.s32.totalorder %s107, %s110
      %p119 = scmp.eq.s32.totalorder %s24, 1
      %p120 = por %p118, %p119
      %p121 = scmp.ne.s32.totalorder %s110, %s111
      %p122 = scmp.eq.s32.totalorder %s24, 0
      %p123 = por %p121, %p122
      %p124 = scmp.ne.s32.totalorder %s110, %s111
      %p125 = scmp.eq.s32.totalorder %s25, 1
      %p126 = por %p124, %p125
      %p128 = scmp.ne.s32.totalorder %s111, %s127
      %p129 = scmp.eq.s32.totalorder %s25, 0
      %p130 = por %p128, %p129
      %s132 = sadd.s32 %s131, 1
      %p135 = scmp.eq.s32.totalorder %s19, 1
      %p136 = scmp.ne.s32.totalorder %s131, %s133
      %p137 = scmp.eq.s32.totalorder %s19, 0
      %p138 = por %p136, %p137
      %p139 = scmp.ne.s32.totalorder %s131, %s133
      %p140 = scmp.eq.s32.totalorder %s24, 1
      %p141 = por %p139, %p140
      %p142 = scmp.ne.s32.totalorder %s133, %s134
      %p143 = scmp.eq.s32.totalorder %s24, 0
      %p144 = por %p142, %p143
      %p145 = scmp.ne.s32.totalorder %s133, %s134
      %p146 = scmp.eq.s32.totalorder %s25, 1
      %p147 = por %p145, %p146
      %p149 = scmp.ne.s32.totalorder %s134, %s148
      %p150 = scmp.eq.s32.totalorder %s25, 0
      %p151 = por %p149, %p150
      %s152 = ssub.s32 %s19, %s26
      %p153 = scmp.eq.s32.totalorder %s152, 0
      %s155 = sadd.s32 %s154, 1
      %s156 = scalar_select %p153, %s154, %s155
      %p159 = pneg %p153
      %p160 = scmp.eq.s32.totalorder %s19, 1
      %p161 = por %p159, %p160
      %p162 = scmp.ne.s32.totalorder %s154, %s157
      %p163 = scmp.eq.s32.totalorder %s19, 0
      %p164 = por %p162, %p163
      %p165 = scmp.ne.s32.totalorder %s154, %s157
      %p166 = scmp.eq.s32.totalorder %s24, 1
      %p167 = por %p165, %p166
      %p168 = scmp.ne.s32.totalorder %s157, %s158
      %p169 = scmp.eq.s32.totalorder %s24, 0
      %p170 = por %p168, %p169
      %p171 = scmp.ne.s32.totalorder %s157, %s158
      %p172 = scmp.eq.s32.totalorder %s25, 1
      %p173 = por %p171, %p172
      %p175 = scmp.ne.s32.totalorder %s158, %s174
      %p176 = scmp.eq.s32.totalorder %s25, 0
      %p177 = por %p175, %p176
      %s178 = ssub.s32 %s19, %s26
      %p179 = scmp.eq.s32.totalorder %s178, 0
      %s181 = sadd.s32 %s180, 1
      %s182 = scalar_select %p179, %s180, %s181
      %p185 = pneg %p179
      %p186 = scmp.eq.s32.totalorder %s19, 1
      %p187 = por %p185, %p186
      %p188 = scmp.ne.s32.totalorder %s180, %s183
      %p189 = scmp.eq.s32.totalorder %s19, 0
      %p190 = por %p188, %p189
      %p191 = scmp.ne.s32.totalorder %s180, %s183
      %p192 = scmp.eq.s32.totalorder %s24, 1
      %p193 = por %p191, %p192
      %p194 = scmp.ne.s32.totalorder %s183, %s184
      %p195 = scmp.eq.s32.totalorder %s24, 0
      %p196 = por %p194, %p195
      %p197 = scmp.ne.s32.totalorder %s183, %s184
      %p198 = scmp.eq.s32.totalorder %s25, 1
      %p199 = por %p197, %p198
      %p201 = scmp.ne.s32.totalorder %s184, %s200
      %p202 = scmp.eq.s32.totalorder %s25, 0
      %p203 = por %p201, %p202
      %s204 = ssub.s32 %s19, %s26
      %p205 = scmp.eq.s32.totalorder %s204, 0
      %s207 = sadd.s32 %s206, 1
      %s208 = scalar_select %p205, %s206, %s207
      %p211 = pneg %p205
      %p212 = scmp.eq.s32.totalorder %s19, 1
      %p213 = por %p211, %p212
      %p214 = scmp.ne.s32.totalorder %s206, %s209
      %p215 = scmp.eq.s32.totalorder %s19, 0
      %p216 = por %p214, %p215
      %p217 = scmp.ne.s32.totalorder %s206, %s209
      %p218 = scmp.eq.s32.totalorder %s24, 1
      %p219 = por %p217, %p218
      %p220 = scmp.ne.s32.totalorder %s209, %s210
      %p221 = scmp.eq.s32.totalorder %s24, 0
      %p222 = por %p220, %p221
      %p223 = scmp.ne.s32.totalorder %s209, %s210
      %p224 = scmp.eq.s32.totalorder %s25, 1
      %p225 = por %p223, %p224
      %p227 = scmp.ne.s32.totalorder %s210, %s226
      %p228 = scmp.eq.s32.totalorder %s25, 0
      %p229 = por %p227, %p228
      %s231 = sadd.s32 %s230, 1
      %p234 = scmp.eq.s32.totalorder %s19, 1
      %p235 = scmp.ne.s32.totalorder %s230, %s232
      %p236 = scmp.eq.s32.totalorder %s19, 0
      %p237 = por %p235, %p236
      %p238 = scmp.ne.s32.totalorder %s230, %s232
      %p239 = scmp.eq.s32.totalorder %s24, 1
      %p240 = por %p238, %p239
      %p241 = scmp.ne.s32.totalorder %s232, %s233
      %p242 = scmp.eq.s32.totalorder %s24, 0
      %p243 = por %p241, %p242
      %p244 = scmp.ne.s32.totalorder %s232, %s233
      %p245 = scmp.eq.s32.totalorder %s25, 1
      %p246 = por %p244, %p245
      %p248 = scmp.ne.s32.totalorder %s233, %s247
      %p249 = scmp.eq.s32.totalorder %s25, 0
      %p250 = por %p248, %p249
      %s252 = sadd.s32 %s251, 1
      %p255 = scmp.eq.s32.totalorder %s19, 1
      %p256 = scmp.ne.s32.totalorder %s251, %s253
      %p257 = scmp.eq.s32.totalorder %s19, 0
      %p258 = por %p256, %p257
      %p259 = scmp.ne.s32.totalorder %s251, %s253
      %p260 = scmp.eq.s32.totalorder %s24, 1
      %p261 = por %p259, %p260
      %p262 = scmp.ne.s32.totalorder %s253, %s254
      %p263 = scmp.eq.s32.totalorder %s24, 0
      %p264 = por %p262, %p263
      %p265 = scmp.ne.s32.totalorder %s253, %s254
      %p266 = scmp.eq.s32.totalorder %s25, 1
      %p267 = por %p265, %p266
      %p269 = scmp.ne.s32.totalorder %s254, %s268
      %p270 = scmp.eq.s32.totalorder %s25, 0
      %p271 = por %p269, %p270
      %s273 = sadd.s32 %s272, 1
      %p276 = scmp.eq.s32.totalorder %s19, 1
      %p277 = scmp.ne.s32.totalorder %s272, %s274
      %p278 = scmp.eq.s32.totalorder %s19, 0
      %p279 = por %p277, %p278
      %p280 = scmp.ne.s32.totalorder %s272, %s274
      %p281 = scmp.eq.s32.totalorder %s24, 1
      %p282 = por %p280, %p281
      %p283 = scmp.ne.s32.totalorder %s274, %s275
      %p284 = scmp.eq.s32.totalorder %s24, 0
      %p285 = por %p283, %p284
      %p286 = scmp.ne.s32.totalorder %s274, %s275
      %p287 = scmp.eq.s32.totalorder %s25, 1
      %p288 = por %p286, %p287
      %p290 = scmp.ne.s32.totalorder %s275, %s289
      %p291 = scmp.eq.s32.totalorder %s25, 0
      %p292 = por %p290, %p291
      %s294 = sadd.s32 %s293, 1
      %p297 = scmp.eq.s32.totalorder %s19, 1
      %p298 = scmp.ne.s32.totalorder %s293, %s295
      %p299 = scmp.eq.s32.totalorder %s19, 0
      %p300 = por %p298, %p299
      %p301 = scmp.ne.s32.totalorder %s293, %s295
      %p302 = scmp.eq.s32.totalorder %s24, 1
      %p303 = por %p301, %p302
      %p304 = scmp.ne.s32.totalorder %s295, %s296
      %p305 = scmp.eq.s32.totalorder %s24, 0
      %p306 = por %p304, %p305
      %p307 = scmp.ne.s32.totalorder %s295, %s296
      %p308 = scmp.eq.s32.totalorder %s25, 1
      %p309 = por %p307, %p308
      %p311 = scmp.ne.s32.totalorder %s296, %s310
      %p312 = scmp.eq.s32.totalorder %s25, 0
      %p313 = por %p311, %p312
      %s315 = sadd.s32 %s314, 1
      %p318 = scmp.eq.s32.totalorder %s19, 1
      %p319 = scmp.ne.s32.totalorder %s314, %s316
      %p320 = scmp.eq.s32.totalorder %s19, 0
      %p321 = por %p319, %p320
      %p322 = scmp.ne.s32.totalorder %s314, %s316
      %p323 = scmp.eq.s32.totalorder %s24, 1
      %p324 = por %p322, %p323
      %p325 = scmp.ne.s32.totalorder %s316, %s317
      %p326 = scmp.eq.s32.totalorder %s24, 0
      %p327 = por %p325, %p326
      %p328 = scmp.ne.s32.totalorder %s316, %s317
      %p329 = scmp.eq.s32.totalorder %s25, 1
      %p330 = por %p328, %p329
      %p332 = scmp.ne.s32.totalorder %s317, %s331
      %p333 = scmp.eq.s32.totalorder %s25, 0
      %p334 = por %p332, %p333
      %p335 = scmp.le.s32.totalorder 1, %s19
      %p336 = scmp.lt.s32.totalorder %s19, 3
      %p337 = pnand %p335, %p336
      %p338 = pneg %p337
      // Predicated region
      $region9: #{tpu_custom_call.1} parent=5 // pred_check
        _
      $region10: #{tpu_custom_call.1} parent=5 // pred_check_branch
        %340 = sbr.rel (%p337) target = $region12
      $region11: #{tpu_custom_call.1} parent=5 // pred_region
        %s341 = ssub.s32 %s19, 1
        // Predicated region
        $region13: #{tpu_custom_call.1} parent=11 // pred_check
          %p342 = pneg %p144
        $region14: #{tpu_custom_call.1} parent=11 // pred_check_branch
          %344 = sbr.rel (%p342) target = $region16
        $region15: #{tpu_custom_call.1} parent=11 // pred_region
          _
        $region16: #{tpu_custom_call.1} parent=11 // pred_fallthru
          _
        // Predicated region
        $region17: #{tpu_custom_call.1} parent=11 // pred_check
          %p345 = pneg %p243
        $region18: #{tpu_custom_call.1} parent=11 // pred_check_branch
          %347 = sbr.rel (%p345) target = $region20
        $region19: #{tpu_custom_call.1} parent=11 // pred_region
          _
        $region20: #{tpu_custom_call.1} parent=11 // pred_fallthru
          _
        // Predicated region
        $region21: #{tpu_custom_call.1} parent=11 // pred_check
          %p348 = pneg %p264
        $region22: #{tpu_custom_call.1} parent=11 // pred_check_branch
          %350 = sbr.rel (%p348) target = $region24
        $region23: #{tpu_custom_call.1} parent=11 // pred_region
          _
        $region24: #{tpu_custom_call.1} parent=11 // pred_fallthru
          _
        // Predicated region
        $region25: #{tpu_custom_call.1} parent=11 // pred_check
          %p351 = pneg %p285
        $region26: #{tpu_custom_call.1} parent=11 // pred_check_branch
          %353 = sbr.rel (%p351) target = $region28
        $region27: #{tpu_custom_call.1} parent=11 // pred_region
          _
        $region28: #{tpu_custom_call.1} parent=11 // pred_fallthru
          _
        // Predicated region
        $region29: #{tpu_custom_call.1} parent=11 // pred_check
          %p354 = pneg %p306
        $region30: #{tpu_custom_call.1} parent=11 // pred_check_branch
          %356 = sbr.rel (%p354) target = $region32
        $region31: #{tpu_custom_call.1} parent=11 // pred_region
          _
        $region32: #{tpu_custom_call.1} parent=11 // pred_fallthru
          _
      $region12: #{tpu_custom_call.1} parent=5 // pred_fallthru
        _
      %p357 = scmp.lt.s32.totalorder %s19, 2
      // Predicated region
      $region33: #{tpu_custom_call.1} parent=5 // pred_check
        %p358 = pneg %p357
      $region34: #{tpu_custom_call.1} parent=5 // pred_check_branch
        %360 = sbr.rel (%p358) target = $region36
      $region35: #{tpu_custom_call.1} parent=5 // pred_region
        // Predicated region
        $region37: #{tpu_custom_call.1} parent=35 // pred_check
          %p361 = pneg %p39
        $region38: #{tpu_custom_call.1} parent=35 // pred_check_branch
          %363 = sbr.rel (%p361) target = $region40
        $region39: #{tpu_custom_call.1} parent=35 // pred_region
          %p364 = scmp.lt.s32.totalorder %s19, 1
          %s365 = scalar_select %p364, %s19, 1
          %s366 = smul.addr %s365, 8
          %s367 = scalar_lea.vmem %s0, %s366
        $region40: #{tpu_custom_call.1} parent=35 // pred_fallthru
          _
        // Predicated region
        $region41: #{tpu_custom_call.1} parent=35 // pred_check
          %p368 = pneg %p65
        $region42: #{tpu_custom_call.1} parent=35 // pred_check_branch
          %370 = sbr.rel (%p368) target = $region44
        $region43: #{tpu_custom_call.1} parent=35 // pred_region
          %s371 = smul.u32 8, %s19
          %p372 = scmp.lt.s32.totalorder %s371, 15
          %s373 = scalar_select %p372, %s371, 15
          %s374 = smul.addr %s373, 8
          %s375 = scalar_lea.vmem %s1, %s374
          %s376 = smul.u32 8, %s19
        $region44: #{tpu_custom_call.1} parent=35 // pred_fallthru
          _
        // Predicated region
        $region45: #{tpu_custom_call.1} parent=35 // pred_check
          %p377 = pneg %p91
        $region46: #{tpu_custom_call.1} parent=35 // pred_check_branch
          %379 = sbr.rel (%p377) target = $region48
        $region47: #{tpu_custom_call.1} parent=35 // pred_region
          %s380 = smul.u32 8, %s19
          %p381 = scmp.lt.s32.totalorder %s380, 15
          %s382 = scalar_select %p381, %s380, 15
          %s383 = smul.addr %s382, 8
          %s384 = scalar_lea.vmem %s2, %s383
          %s385 = smul.u32 8, %s19
        $region48: #{tpu_custom_call.1} parent=35 // pred_fallthru
          _
        // Predicated region
        $region49: #{tpu_custom_call.1} parent=35 // pred_check
          %p386 = pneg %p117
        $region50: #{tpu_custom_call.1} parent=35 // pred_check_branch
          %388 = sbr.rel (%p386) target = $region52
        $region51: #{tpu_custom_call.1} parent=35 // pred_region
          %s389 = smul.u32 8, %s19
          %p390 = scmp.lt.s32.totalorder %s389, 15
          %s391 = scalar_select %p390, %s389, 15
          %s392 = smul.addr %s391, 8
          %s393 = smul.addr %s392, 4
          %s394 = scalar_lea.vmem %s3, %s393
          %s395 = smul.u32 8, %s19
        $region52: #{tpu_custom_call.1} parent=35 // pred_fallthru
          _
        // Predicated region
        $region53: #{tpu_custom_call.1} parent=35 // pred_check
          %p396 = pneg %p164
        $region54: #{tpu_custom_call.1} parent=35 // pred_check_branch
          %398 = sbr.rel (%p396) target = $region56
        $region55: #{tpu_custom_call.1} parent=35 // pred_region
          %p399 = scmp.lt.s32.totalorder %s19, 1
          %s400 = scalar_select %p399, %s19, 1
          %s401 = smul.addr %s400, 8
          %s402 = scalar_lea.vmem %s5, %s401
        $region56: #{tpu_custom_call.1} parent=35 // pred_fallthru
          _
        // Predicated region
        $region57: #{tpu_custom_call.1} parent=35 // pred_check
          %p403 = pneg %p190
        $region58: #{tpu_custom_call.1} parent=35 // pred_check_branch
          %405 = sbr.rel (%p403) target = $region60
        $region59: #{tpu_custom_call.1} parent=35 // pred_region
          %p406 = scmp.lt.s32.totalorder %s19, 1
          %s407 = scalar_select %p406, %s19, 1
          %s408 = smul.addr %s407, 8
          %s409 = scalar_lea.vmem %s6, %s408
        $region60: #{tpu_custom_call.1} parent=35 // pred_fallthru
          _
        // Predicated region
        $region61: #{tpu_custom_call.1} parent=35 // pred_check
          %p410 = pneg %p216
        $region62: #{tpu_custom_call.1} parent=35 // pred_check_branch
          %412 = sbr.rel (%p410) target = $region64
        $region63: #{tpu_custom_call.1} parent=35 // pred_region
          %p413 = scmp.lt.s32.totalorder %s19, 1
          %s414 = scalar_select %p413, %s19, 1
          %s415 = smul.addr %s414, 8
          %s416 = scalar_lea.vmem %s7, %s415
        $region64: #{tpu_custom_call.1} parent=35 // pred_fallthru
          _
      $region36: #{tpu_custom_call.1} parent=5 // pred_fallthru
        _
      %p417 = scmp.le.s32.totalorder 1, %s19
      %p418 = scmp.lt.s32.totalorder %s19, 3
      %p419 = pnand %p417, %p418
      %p420 = pneg %p419
      // Predicated region
      $region65: #{tpu_custom_call.1} parent=5 // pred_check
        _
      $region66: #{tpu_custom_call.1} parent=5 // pred_check_branch
        %422 = sbr.rel (%p419) target = $region68
      $region67: #{tpu_custom_call.1} parent=5 // pred_region
        %s423 = ssub.s32 %s19, 1
        %p424 = scmp.lt.s32.totalorder %s24, 1
        %s425 = scalar_select %p424, %s24, 1
        %s426 = smul.addr %s425, 8
        %s427 = scalar_lea.vmem %s0, %s426
        %p428 = pneg %p45
        %p429 = pneg %p42
        %s430 = smul.u32 8, %s24
        %p431 = scmp.lt.s32.totalorder %s430, 15
        %s432 = scalar_select %p431, %s430, 15
        %s433 = smul.addr %s432, 8
        %s434 = scalar_lea.vmem %s1, %s433
        %p435 = pneg %p71
        %p436 = pneg %p68
        %s437 = smul.u32 8, %s24
        %p438 = scmp.lt.s32.totalorder %s437, 15
        %s439 = scalar_select %p438, %s437, 15
        %s440 = smul.addr %s439, 8
        %s441 = scalar_lea.vmem %s2, %s440
        %p442 = pneg %p97
        %p443 = pneg %p94
        %s444 = smul.u32 8, %s24
        %p445 = scmp.lt.s32.totalorder %s444, 15
        %s446 = scalar_select %p445, %s444, 15
        %s447 = smul.addr %s446, 8
        %s448 = smul.addr %s447, 4
        %s449 = scalar_lea.vmem %s3, %s448
        %p450 = pneg %p123
        %p451 = pneg %p120
        %p452 = pneg %p144
        %p453 = pneg %p141
        %p454 = scmp.lt.s32.totalorder %s24, 1
        %s455 = scalar_select %p454, %s24, 1
        %s456 = smul.addr %s455, 8
        %s457 = scalar_lea.vmem %s5, %s456
        %p458 = pneg %p170
        %p459 = pneg %p167
        %p460 = scmp.lt.s32.totalorder %s24, 1
        %s461 = scalar_select %p460, %s24, 1
        %s462 = smul.addr %s461, 8
        %s463 = scalar_lea.vmem %s6, %s462
        %p464 = pneg %p196
        %p465 = pneg %p193
        %p466 = scmp.lt.s32.totalorder %s24, 1
        %s467 = scalar_select %p466, %s24, 1
        %s468 = smul.addr %s467, 8
        %s469 = scalar_lea.vmem %s7, %s468
        %p470 = pneg %p222
        %p471 = pneg %p219
        %p472 = pneg %p243
        %p473 = pneg %p240
        %p474 = pneg %p264
        %p475 = pneg %p261
        %p476 = pneg %p285
        %p477 = pneg %p282
        %p478 = pneg %p306
        %p479 = pneg %p303
        %p480 = pneg %p327
        %p481 = pneg %p324
        %p482 = scmp.lt.s32.totalorder %s24, 1
        %s483 = scalar_select %p482, %s24, 1
        %s484 = smul.addr %s483, 8
        %s485 = scalar_lea.vmem %s0, %s484
        %s486 = smul.u32 8, %s24
        %p487 = scmp.lt.s32.totalorder %s486, 15
        %s488 = scalar_select %p487, %s486, 15
        %s489 = smul.addr %s488, 8
        %s490 = scalar_lea.vmem %s1, %s489
        %s491 = smul.u32 8, %s24
        %s492 = smul.u32 8, %s24
        %p493 = scmp.lt.s32.totalorder %s492, 15
        %s494 = scalar_select %p493, %s492, 15
        %s495 = smul.addr %s494, 8
        %s496 = scalar_lea.vmem %s2, %s495
        %s497 = smul.u32 8, %s24
        %s498 = smul.u32 8, %s24
        %p499 = scmp.lt.s32.totalorder %s498, 15
        %s500 = scalar_select %p499, %s498, 15
        %s501 = smul.addr %s500, 8
        %s502 = smul.addr %s501, 4
        %s503 = scalar_lea.vmem %s3, %s502
        %s504 = smul.u32 8, %s24
        %p505 = scmp.lt.s32.totalorder %s24, 1
        %s506 = scalar_select %p505, %s24, 1
        %s507 = smul.addr %s506, 8
        %s508 = scalar_lea.vmem %s5, %s507
        %p509 = scmp.lt.s32.totalorder %s24, 1
        %s510 = scalar_select %p509, %s24, 1
        %s511 = smul.addr %s510, 8
        %s512 = scalar_lea.vmem %s6, %s511
        %p513 = scmp.lt.s32.totalorder %s24, 1
        %s514 = scalar_select %p513, %s24, 1
        %s515 = smul.addr %s514, 8
        %s516 = scalar_lea.vmem %s7, %s515
        %p517 = scmp.eq.s32.totalorder %s24, 0
        // Predicated region
        $region69: #{tpu_custom_call.1} parent=67 // pred_check
          %p518 = pneg %p517
        $region70: #{tpu_custom_call.1} parent=67 // pred_check_branch
          %520 = sbr.rel (%p518) target = $region72
        $region71: #{tpu_custom_call.1} parent=67 // pred_region
          %vm521 = vcmask 57344
          %522 = vst.msk [vmem:[#allocation2] sm:$0x1] %vm521, 0.0
        $region72: #{tpu_custom_call.1} parent=67 // pred_fallthru
          _
        %v523 = vld [vmem:[%s485] sm:$0xff]
        %v524 = vld [vmem:[%s490] sm:$0xff]
        %v525 = vld [vmem:[%s490 + $0x8] sm:$0xff]
        %v526 = vld [vmem:[%s490 + $0x10] sm:$0xff]
        %v527 = vld [vmem:[%s490 + $0x18] sm:$0xff]
        %v528 = vld [vmem:[%s490 + $0x20] sm:$0xff]
        %v529 = vld [vmem:[%s490 + $0x28] sm:$0xff]
        %v530 = vld [vmem:[%s490 + $0x30] sm:$0xff]
        %v531 = vld [vmem:[%s490 + $0x38] sm:$0xff]
        %v532 = vld [vmem:[%s496] sm:$0xff]
        %v533 = vld [vmem:[%s496 + $0x8] sm:$0xff]
        %v534 = vld [vmem:[%s496 + $0x10] sm:$0xff]
        %v535 = vld [vmem:[%s496 + $0x18] sm:$0xff]
        %v536 = vld [vmem:[%s496 + $0x20] sm:$0xff]
        %v537 = vld [vmem:[%s496 + $0x28] sm:$0xff]
        %v538 = vld [vmem:[%s496 + $0x30] sm:$0xff]
        %v539 = vld [vmem:[%s496 + $0x38] sm:$0xff]
        %v540 = vld [vmem:[%s503] sm:$0xf]
        %v541 = vld [vmem:[%s503 + $0x4] sm:$0xf]
        %v542 = vld [vmem:[%s503 + $0x8] sm:$0xf]
        %v543 = vld [vmem:[%s503 + $0xc] sm:$0xf]
        %v544 = vld [vmem:[%s503 + $0x10] sm:$0xf]
        %v545 = vld [vmem:[%s503 + $0x14] sm:$0xf]
        %v546 = vld [vmem:[%s503 + $0x18] sm:$0xf]
        %v547 = vld [vmem:[%s503 + $0x1c] sm:$0xf]
        %v548 = vld [vmem:[%s503 + $0x20] sm:$0xf]
        %v549 = vld [vmem:[%s503 + $0x24] sm:$0xf]
        %v550 = vld [vmem:[%s503 + $0x28] sm:$0xf]
        %v551 = vld [vmem:[%s503 + $0x2c] sm:$0xf]
        %v552 = vld [vmem:[%s503 + $0x30] sm:$0xf]
        %v553 = vld [vmem:[%s503 + $0x34] sm:$0xf]
        %v554 = vld [vmem:[%s503 + $0x38] sm:$0xf]
        %v555 = vld [vmem:[%s503 + $0x3c] sm:$0xf]
        %v556 = vld [vmem:[%s503 + $0x40] sm:$0xf]
        %v557 = vld [vmem:[%s503 + $0x44] sm:$0xf]
        %v558 = vld [vmem:[%s503 + $0x48] sm:$0xf]
        %v559 = vld [vmem:[%s503 + $0x4c] sm:$0xf]
        %v560 = vld [vmem:[%s503 + $0x50] sm:$0xf]
        %v561 = vld [vmem:[%s503 + $0x54] sm:$0xf]
        %v562 = vld [vmem:[%s503 + $0x58] sm:$0xf]
        %v563 = vld [vmem:[%s503 + $0x5c] sm:$0xf]
        %v564 = vld [vmem:[%s503 + $0x60] sm:$0xf]
        %v565 = vld [vmem:[%s503 + $0x64] sm:$0xf]
        %v566 = vld [vmem:[%s503 + $0x68] sm:$0xf]
        %v567 = vld [vmem:[%s503 + $0x6c] sm:$0xf]
        %v568 = vld [vmem:[%s503 + $0x70] sm:$0xf]
        %v569 = vld [vmem:[%s503 + $0x74] sm:$0xf]
        %v570 = vld [vmem:[%s503 + $0x78] sm:$0xf]
        %v571 = vld [vmem:[%s503 + $0x7c] sm:$0xf]
        %v572 = vld [vmem:[%s503 + $0x80] sm:$0xf]
        %v573 = vld [vmem:[%s503 + $0x84] sm:$0xf]
        %v574 = vld [vmem:[%s503 + $0x88] sm:$0xf]
        %v575 = vld [vmem:[%s503 + $0x8c] sm:$0xf]
        %v576 = vld [vmem:[%s503 + $0x90] sm:$0xf]
        %v577 = vld [vmem:[%s503 + $0x94] sm:$0xf]
        %v578 = vld [vmem:[%s503 + $0x98] sm:$0xf]
        %v579 = vld [vmem:[%s503 + $0x9c] sm:$0xf]
        %v580 = vld [vmem:[%s503 + $0xa0] sm:$0xf]
        %v581 = vld [vmem:[%s503 + $0xa4] sm:$0xf]
        %v582 = vld [vmem:[%s503 + $0xa8] sm:$0xf]
        %v583 = vld [vmem:[%s503 + $0xac] sm:$0xf]
        %v584 = vld [vmem:[%s503 + $0xb0] sm:$0xf]
        %v585 = vld [vmem:[%s503 + $0xb4] sm:$0xf]
        %v586 = vld [vmem:[%s503 + $0xb8] sm:$0xf]
        %v587 = vld [vmem:[%s503 + $0xbc] sm:$0xf]
        %v588 = vld [vmem:[%s503 + $0xc0] sm:$0xf]
        %v589 = vld [vmem:[%s503 + $0xc4] sm:$0xf]
        %v590 = vld [vmem:[%s503 + $0xc8] sm:$0xf]
        %v591 = vld [vmem:[%s503 + $0xcc] sm:$0xf]
        %v592 = vld [vmem:[%s503 + $0xd0] sm:$0xf]
        %v593 = vld [vmem:[%s503 + $0xd4] sm:$0xf]
        %v594 = vld [vmem:[%s503 + $0xd8] sm:$0xf]
        %v595 = vld [vmem:[%s503 + $0xdc] sm:$0xf]
        %v596 = vld [vmem:[%s503 + $0xe0] sm:$0xf]
        %v597 = vld [vmem:[%s503 + $0xe4] sm:$0xf]
        %v598 = vld [vmem:[%s503 + $0xe8] sm:$0xf]
        %v599 = vld [vmem:[%s503 + $0xec] sm:$0xf]
        %v600 = vld [vmem:[%s503 + $0xf0] sm:$0xf]
        %v601 = vld [vmem:[%s503 + $0xf4] sm:$0xf]
        %v602 = vld [vmem:[%s503 + $0xf8] sm:$0xf]
        %v603 = vld [vmem:[%s503 + $0xfc] sm:$0xf]
        %v604 = vlaneseq
        %v605 = vand.u32 %v604, 127
        %vm606 = vcmp.eq.s32.totalorder %v523, 3
        %v607 = vsel %vm606, %v605, 8
        %vm608 = vcmask 64512
        %v609 = vsel %vm608, %v607, 2147483647
        %v610 = vand.u32 %v609, 65535
        %v611 = vshra.s32 %v609, 16
        %v612 = vcvt.s32.f32 %v610
        %v613 = vcvt.s32.f32 %v611
        %614 = vmin.xlane.f32.xlu0 %v613
        %v615 = vpop.xlane.xlu0 %614
        %vm616 = vcmp.eq.f32.partialorder %v613, %v615
        %v617 = vsel %vm616, %v612, inf
        %618 = vmin.xlane.f32.xlu0 %v617
        %v619 = vpop.xlane.xlu0 %618
        %v620 = vcvt.f32.s32 %v619
        %v621 = vcvt.f32.s32 %v615
        %v622 = vshll.u32 %v621, 16
        %v623 = vadd.s32 %v622, %v620
        %vm624 = vcmp.lt.s32.totalorder %v605, %v623
        %vm625 = vcmp.ge.s32.totalorder %v605, 1
        %vm626 = vcmp.le.s32.totalorder %v605, %v623
        %vm627 = vmand %vm625, %vm626
        %vm628 = vmor %vm624, %vm627
        %v629 = vsel %vm606, 1, 0
        %v630 = vcvt.s32.f32 %v629
        %v631 = vsel %vm608, %v630, 0.0
        %632 = vadd.xlane.f32.xlu0 %v631
        %v633 = vpop.xlane.xlu0 %632
        %vm634 = vcmp.lt.f32.partialorder %v633, 8.0
        %v635 = vsel %vm628, 1, 0
        %v636 = vcvt.s32.f32 %v635
        %v637 = vsel %vm634, 1, 0
        %v638 = vcvt.s32.f32 %v637
        %v639 = vmul.f32 %v636, %v638
        %vm640 = vcmask 48128
        %v641 = vsel %vm640, %v532, -inf
        %642 = vmax.xlane.f32.xlu0 %v641
        %v643 = vpop.xlane.xlu0 %642
        %v644 = vsel %vm640, %v533, -inf
        %645 = vmax.xlane.f32.xlu0 %v644
        %v646 = vpop.xlane.xlu0 %645
        %v647 = vsel %vm640, %v534, -inf
        %648 = vmax.xlane.f32.xlu0 %v647
        %v649 = vpop.xlane.xlu0 %648
        %v650 = vsel %vm640, %v535, -inf
        %651 = vmax.xlane.f32.xlu0 %v650
        %v652 = vpop.xlane.xlu0 %651
        %v653 = vsel %vm640, %v536, -inf
        %654 = vmax.xlane.f32.xlu0 %v653
        %v655 = vpop.xlane.xlu0 %654
        %v656 = vsel %vm640, %v537, -inf
        %657 = vmax.xlane.f32.xlu0 %v656
        %v658 = vpop.xlane.xlu0 %657
        %v659 = vsel %vm640, %v538, -inf
        %660 = vmax.xlane.f32.xlu0 %v659
        %v661 = vpop.xlane.xlu0 %660
        %v662 = vsel %vm640, %v539, -inf
        %663 = vmax.xlane.f32.xlu0 %v662
        %v664 = vpop.xlane.xlu0 %663
        %v665 = vsub.f32 %v532, %v643
        %v666 = vsub.f32 %v533, %v646
        %v667 = vsub.f32 %v534, %v649
        %v668 = vsub.f32 %v535, %v652
        %v669 = vsub.f32 %v536, %v655
        %v670 = vsub.f32 %v537, %v658
        %v671 = vsub.f32 %v538, %v661
        %v672 = vsub.f32 %v539, %v664
        %v673 = vmul.f32 %v665, 1.442695
        %v674 = vpow.pop %v673
        %v675 = vmul.f32 %v666, 1.442695
        %v676 = vpow.pop %v675
        %v677 = vmul.f32 %v667, 1.442695
        %v678 = vpow.pop %v677
        %v679 = vmul.f32 %v668, 1.442695
        %v680 = vpow.pop %v679
        %v681 = vmul.f32 %v669, 1.442695
        %v682 = vpow.pop %v681
        %v683 = vmul.f32 %v670, 1.442695
        %v684 = vpow.pop %v683
        %v685 = vmul.f32 %v671, 1.442695
        %v686 = vpow.pop %v685
        %v687 = vmul.f32 %v672, 1.442695
        %v688 = vpow.pop %v687
        %v689 = vsel %vm640, %v674, 0.0
        %690 = vadd.xlane.f32.xlu0 %v689
        %v691 = vpop.xlane.xlu0 %690
        %v692 = vsel %vm640, %v676, 0.0
        %693 = vadd.xlane.f32.xlu0 %v692
        %v694 = vpop.xlane.xlu0 %693
        %v695 = vsel %vm640, %v678, 0.0
        %696 = vadd.xlane.f32.xlu0 %v695
        %v697 = vpop.xlane.xlu0 %696
        %v698 = vsel %vm640, %v680, 0.0
        %699 = vadd.xlane.f32.xlu0 %v698
        %v700 = vpop.xlane.xlu0 %699
        %v701 = vsel %vm640, %v682, 0.0
        %702 = vadd.xlane.f32.xlu0 %v701
        %v703 = vpop.xlane.xlu0 %702
        %v704 = vsel %vm640, %v684, 0.0
        %705 = vadd.xlane.f32.xlu0 %v704
        %v706 = vpop.xlane.xlu0 %705
        %v707 = vsel %vm640, %v686, 0.0
        %708 = vadd.xlane.f32.xlu0 %v707
        %v709 = vpop.xlane.xlu0 %708
        %v710 = vsel %vm640, %v688, 0.0
        %711 = vadd.xlane.f32.xlu0 %v710
        %v712 = vpop.xlane.xlu0 %711
        %v713 = vlog2.pop %v691
        %v714 = vmul.f32 %v713, 0.6931472
        %v715 = vlog2.pop %v694
        %v716 = vmul.f32 %v715, 0.6931472
        %v717 = vlog2.pop %v697
        %v718 = vmul.f32 %v717, 0.6931472
        %v719 = vlog2.pop %v700
        %v720 = vmul.f32 %v719, 0.6931472
        %v721 = vlog2.pop %v703
        %v722 = vmul.f32 %v721, 0.6931472
        %v723 = vlog2.pop %v706
        %v724 = vmul.f32 %v723, 0.6931472
        %v725 = vlog2.pop %v709
        %v726 = vmul.f32 %v725, 0.6931472
        %v727 = vlog2.pop %v712
        %v728 = vmul.f32 %v727, 0.6931472
        %v729 = vadd.f32 %v643, %v714
        %v730 = vadd.f32 %v646, %v716
        %v731 = vadd.f32 %v649, %v718
        %v732 = vadd.f32 %v652, %v720
        %v733 = vadd.f32 %v655, %v722
        %v734 = vadd.f32 %v658, %v724
        %v735 = vadd.f32 %v661, %v726
        %v736 = vadd.f32 %v664, %v728
        %v737 = vlaneseq
        %v738 = vshrl.u32 %v737, 7
        %v739 = vsub.s32 0, %v738
        %v740 = vrot.slane %v523, %v739
        %742 = vbcast.lane.b32.xlu0 %v740, 256
        %v743 = vpop.permute.xlu0 %742
        %v744 = vlaneseq
        %v745 = vshrl.u32 %v744, 7
        %v746 = vsub.s32 1, %v745
        %v747 = vrot.slane %v523, %v746
        %749 = vbcast.lane.b32.xlu0 %v747, 256
        %v750 = vpop.permute.xlu0 %749
        %v751 = vlaneseq
        %v752 = vshrl.u32 %v751, 7
        %v753 = vsub.s32 2, %v752
        %v754 = vrot.slane %v523, %v753
        %756 = vbcast.lane.b32.xlu0 %v754, 256
        %v757 = vpop.permute.xlu0 %756
        %v758 = vlaneseq
        %v759 = vshrl.u32 %v758, 7
        %v760 = vsub.s32 3, %v759
        %v761 = vrot.slane %v523, %v760
        %763 = vbcast.lane.b32.xlu0 %v761, 256
        %v764 = vpop.permute.xlu0 %763
        %v765 = vlaneseq
        %v766 = vshrl.u32 %v765, 7
        %v767 = vsub.s32 4, %v766
        %v768 = vrot.slane %v523, %v767
        %770 = vbcast.lane.b32.xlu0 %v768, 256
        %v771 = vpop.permute.xlu0 %770
        %v772 = vlaneseq
        %v773 = vshrl.u32 %v772, 7
        %v774 = vsub.s32 5, %v773
        %v775 = vrot.slane %v523, %v774
        %777 = vbcast.lane.b32.xlu0 %v775, 256
        %v778 = vpop.permute.xlu0 %777
        %v779 = vlaneseq
        %v780 = vshrl.u32 %v779, 7
        %v781 = vsub.s32 6, %v780
        %v782 = vrot.slane %v523, %v781
        %784 = vbcast.lane.b32.xlu0 %v782, 256
        %v785 = vpop.permute.xlu0 %784
        %v786 = vlaneseq
        %v787 = vshrl.u32 %v786, 7
        %v788 = vsub.s32 7, %v787
        %v789 = vrot.slane %v523, %v788
        %791 = vbcast.lane.b32.xlu0 %v789, 256
        %v792 = vpop.permute.xlu0 %791
        %vm793 = vcmp.eq.s32.totalorder %v605, %v743
        %vm794 = vcmp.eq.s32.totalorder %v605, %v750
        %vm795 = vcmp.eq.s32.totalorder %v605, %v757
        %vm796 = vcmp.eq.s32.totalorder %v605, %v764
        %vm797 = vcmp.eq.s32.totalorder %v605, %v771
        %vm798 = vcmp.eq.s32.totalorder %v605, %v778
        %vm799 = vcmp.eq.s32.totalorder %v605, %v785
        %vm800 = vcmp.eq.s32.totalorder %v605, %v792
        %v801 = vsel %vm793, %v532, 0.0
        %v802 = vsel %vm794, %v533, 0.0
        %v803 = vsel %vm795, %v534, 0.0
        %v804 = vsel %vm796, %v535, 0.0
        %v805 = vsel %vm797, %v536, 0.0
        %v806 = vsel %vm798, %v537, 0.0
        %v807 = vsel %vm799, %v538, 0.0
        %v808 = vsel %vm800, %v539, 0.0
        %v809 = vsel %vm640, %v801, 0.0
        %810 = vadd.xlane.f32.xlu0 %v809
        %v811 = vpop.xlane.xlu0 %810
        %v812 = vsel %vm640, %v802, 0.0
        %813 = vadd.xlane.f32.xlu0 %v812
        %v814 = vpop.xlane.xlu0 %813
        %v815 = vsel %vm640, %v803, 0.0
        %816 = vadd.xlane.f32.xlu0 %v815
        %v817 = vpop.xlane.xlu0 %816
        %v818 = vsel %vm640, %v804, 0.0
        %819 = vadd.xlane.f32.xlu0 %v818
        %v820 = vpop.xlane.xlu0 %819
        %v821 = vsel %vm640, %v805, 0.0
        %822 = vadd.xlane.f32.xlu0 %v821
        %v823 = vpop.xlane.xlu0 %822
        %v824 = vsel %vm640, %v806, 0.0
        %825 = vadd.xlane.f32.xlu0 %v824
        %v826 = vpop.xlane.xlu0 %825
        %v827 = vsel %vm640, %v807, 0.0
        %828 = vadd.xlane.f32.xlu0 %v827
        %v829 = vpop.xlane.xlu0 %828
        %v830 = vsel %vm640, %v808, 0.0
        %831 = vadd.xlane.f32.xlu0 %v830
        %v832 = vpop.xlane.xlu0 %831
        %v833 = vlaneseq
        %v834 = vshrl.u32 %v833, 7
        %v835 = vsub.s32 0, %v834
        %v836 = vrot.slane %v639, %v835
        %838 = vbcast.lane.b32.xlu0 %v836, 256
        %v839 = vpop.permute.xlu0 %838
        %v840 = vlaneseq
        %v841 = vshrl.u32 %v840, 7
        %v842 = vsub.s32 1, %v841
        %v843 = vrot.slane %v639, %v842
        %845 = vbcast.lane.b32.xlu0 %v843, 256
        %v846 = vpop.permute.xlu0 %845
        %v847 = vlaneseq
        %v848 = vshrl.u32 %v847, 7
        %v849 = vsub.s32 2, %v848
        %v850 = vrot.slane %v639, %v849
        %852 = vbcast.lane.b32.xlu0 %v850, 256
        %v853 = vpop.permute.xlu0 %852
        %v854 = vlaneseq
        %v855 = vshrl.u32 %v854, 7
        %v856 = vsub.s32 3, %v855
        %v857 = vrot.slane %v639, %v856
        %859 = vbcast.lane.b32.xlu0 %v857, 256
        %v860 = vpop.permute.xlu0 %859
        %v861 = vlaneseq
        %v862 = vshrl.u32 %v861, 7
        %v863 = vsub.s32 4, %v862
        %v864 = vrot.slane %v639, %v863
        %866 = vbcast.lane.b32.xlu0 %v864, 256
        %v867 = vpop.permute.xlu0 %866
        %v868 = vlaneseq
        %v869 = vshrl.u32 %v868, 7
        %v870 = vsub.s32 5, %v869
        %v871 = vrot.slane %v639, %v870
        %873 = vbcast.lane.b32.xlu0 %v871, 256
        %v874 = vpop.permute.xlu0 %873
        %v875 = vlaneseq
        %v876 = vshrl.u32 %v875, 7
        %v877 = vsub.s32 6, %v876
        %v878 = vrot.slane %v639, %v877
        %880 = vbcast.lane.b32.xlu0 %v878, 256
        %v881 = vpop.permute.xlu0 %880
        %v882 = vlaneseq
        %v883 = vshrl.u32 %v882, 7
        %v884 = vsub.s32 7, %v883
        %v885 = vrot.slane %v639, %v884
        %887 = vbcast.lane.b32.xlu0 %v885, 256
        %v888 = vpop.permute.xlu0 %887
        %v889 = vsub.f32 %v729, %v811
        %v890 = vsub.f32 %v730, %v814
        %v891 = vsub.f32 %v731, %v817
        %v892 = vsub.f32 %v732, %v820
        %v893 = vsub.f32 %v733, %v823
        %v894 = vsub.f32 %v734, %v826
        %v895 = vsub.f32 %v735, %v829
        %v896 = vsub.f32 %v736, %v832
        %v897 = vmul.f32 %v839, %v889
        %v898 = vmul.f32 %v846, %v890
        %v899 = vmul.f32 %v853, %v891
        %v900 = vmul.f32 %v860, %v892
        %v901 = vmul.f32 %v867, %v893
        %v902 = vmul.f32 %v874, %v894
        %v903 = vmul.f32 %v881, %v895
        %v904 = vmul.f32 %v888, %v896
        %vm905 = vcmask 7168
        %v906 = vsel %vm905, %v897, 0.0
        %v907 = vsel %vm905, %v898, 0.0
        %v908 = vadd.f32 %v906, %v907
        %v909 = vsel %vm905, %v899, 0.0
        %v910 = vadd.f32 %v908, %v909
        %v911 = vsel %vm905, %v900, 0.0
        %v912 = vadd.f32 %v910, %v911
        %v913 = vsel %vm905, %v901, 0.0
        %v914 = vadd.f32 %v912, %v913
        %v915 = vsel %vm905, %v902, 0.0
        %v916 = vadd.f32 %v914, %v915
        %v917 = vsel %vm905, %v903, 0.0
        %v918 = vadd.f32 %v916, %v917
        %v919 = vsel %vm905, %v904, 0.0
        %v920 = vadd.f32 %v918, %v919
        %921 = vadd.xlane.f32.xlu0 %v920
        %v922 = vpop.xlane.xlu0 %921
        %v923 = vrot.slane %v922, 4
        %v924 = vadd.f32 %v922, %v923
        %v925 = vrot.slane %v924, 2
        %v926 = vadd.f32 %v924, %v925
        %v927 = vrot.slane %v926, 1
        %v928 = vadd.f32 %v926, %v927
        %s929 = vtos %v928
        %v930 = vsel %vm608, %v639, 0.0
        %931 = vadd.xlane.f32.xlu0 %v930
        %v932 = vpop.xlane.xlu0 %931
        %v933 = vrot.slane %v932, 4
        %v934 = vadd.f32 %v932, %v933
        %v935 = vrot.slane %v934, 2
        %v936 = vadd.f32 %v934, %v935
        %v937 = vrot.slane %v936, 1
        %v938 = vadd.f32 %v936, %v937
        %s939 = vtos %v938
        %v940 = vld [vmem:[%s4] sm:$0x3f]
        %vm941 = vcmp.eq.s32.totalorder %v523, 0
        %v942 = vsel %vm941, 1, 0
        %v943 = vcvt.s32.f32 %v942
        %v944 = vlaneseq
        %v945 = vshrl.u32 %v944, 7
        %v946 = vsub.s32 0, %v945
        %v947 = vrot.slane %v943, %v946
        %949 = vbcast.lane.b32.xlu0 %v947, 256
        %v950 = vpop.permute.xlu0 %949
        %v951 = vlaneseq
        %v952 = vshrl.u32 %v951, 7
        %v953 = vsub.s32 1, %v952
        %v954 = vrot.slane %v943, %v953
        %956 = vbcast.lane.b32.xlu0 %v954, 256
        %v957 = vpop.permute.xlu0 %956
        %v958 = vlaneseq
        %v959 = vshrl.u32 %v958, 7
        %v960 = vsub.s32 2, %v959
        %v961 = vrot.slane %v943, %v960
        %963 = vbcast.lane.b32.xlu0 %v961, 256
        %v964 = vpop.permute.xlu0 %963
        %v965 = vlaneseq
        %v966 = vshrl.u32 %v965, 7
        %v967 = vsub.s32 3, %v966
        %v968 = vrot.slane %v943, %v967
        %970 = vbcast.lane.b32.xlu0 %v968, 256
        %v971 = vpop.permute.xlu0 %970
        %v972 = vlaneseq
        %v973 = vshrl.u32 %v972, 7
        %v974 = vsub.s32 4, %v973
        %v975 = vrot.slane %v943, %v974
        %977 = vbcast.lane.b32.xlu0 %v975, 256
        %v978 = vpop.permute.xlu0 %977
        %v979 = vlaneseq
        %v980 = vshrl.u32 %v979, 7
        %v981 = vsub.s32 5, %v980
        %v982 = vrot.slane %v943, %v981
        %984 = vbcast.lane.b32.xlu0 %v982, 256
        %v985 = vpop.permute.xlu0 %984
        %v986 = vlaneseq
        %v987 = vshrl.u32 %v986, 7
        %v988 = vsub.s32 6, %v987
        %v989 = vrot.slane %v943, %v988
        %991 = vbcast.lane.b32.xlu0 %v989, 256
        %v992 = vpop.permute.xlu0 %991
        %v993 = vlaneseq
        %v994 = vshrl.u32 %v993, 7
        %v995 = vsub.s32 7, %v994
        %v996 = vrot.slane %v943, %v995
        %998 = vbcast.lane.b32.xlu0 %v996, 256
        %v999 = vpop.permute.xlu0 %998
        %v1000 = vlaneseq
        %v1001 = vshrl.u32 %v1000, 7
        %v1002 = vsub.s32 0, %v1001
        %v1003 = vrot.slane %v940, %v1002
        %v1004 = vmul.f32 %v950, %v1003
        %v1005 = vmul.f32 %v957, %v1003
        %v1006 = vmul.f32 %v964, %v1003
        %v1007 = vmul.f32 %v971, %v1003
        %v1008 = vmul.f32 %v978, %v1003
        %v1009 = vmul.f32 %v985, %v1003
        %v1010 = vmul.f32 %v992, %v1003
        %v1011 = vmul.f32 %v999, %v1003
        %v1012 = vadd.f32 %v1004, 0.0
        %v1013 = vadd.f32 %v1005, 0.0
        %v1014 = vadd.f32 %v1006, 0.0
        %v1015 = vadd.f32 %v1007, 0.0
        %v1016 = vadd.f32 %v1008, 0.0
        %v1017 = vadd.f32 %v1009, 0.0
        %v1018 = vadd.f32 %v1010, 0.0
        %v1019 = vadd.f32 %v1011, 0.0
        %vm1020 = vcmp.eq.s32.totalorder %v523, 1
        %v1021 = vsel %vm1020, 1, 0
        %v1022 = vcvt.s32.f32 %v1021
        %v1023 = vlaneseq
        %v1024 = vshrl.u32 %v1023, 7
        %v1025 = vsub.s32 0, %v1024
        %v1026 = vrot.slane %v1022, %v1025
        %1028 = vbcast.lane.b32.xlu0 %v1026, 256
        %v1029 = vpop.permute.xlu0 %1028
        %v1030 = vlaneseq
        %v1031 = vshrl.u32 %v1030, 7
        %v1032 = vsub.s32 1, %v1031
        %v1033 = vrot.slane %v1022, %v1032
        %1035 = vbcast.lane.b32.xlu0 %v1033, 256
        %v1036 = vpop.permute.xlu0 %1035
        %v1037 = vlaneseq
        %v1038 = vshrl.u32 %v1037, 7
        %v1039 = vsub.s32 2, %v1038
        %v1040 = vrot.slane %v1022, %v1039
        %1042 = vbcast.lane.b32.xlu0 %v1040, 256
        %v1043 = vpop.permute.xlu0 %1042
        %v1044 = vlaneseq
        %v1045 = vshrl.u32 %v1044, 7
        %v1046 = vsub.s32 3, %v1045
        %v1047 = vrot.slane %v1022, %v1046
        %1049 = vbcast.lane.b32.xlu0 %v1047, 256
        %v1050 = vpop.permute.xlu0 %1049
        %v1051 = vlaneseq
        %v1052 = vshrl.u32 %v1051, 7
        %v1053 = vsub.s32 4, %v1052
        %v1054 = vrot.slane %v1022, %v1053
        %1056 = vbcast.lane.b32.xlu0 %v1054, 256
        %v1057 = vpop.permute.xlu0 %1056
        %v1058 = vlaneseq
        %v1059 = vshrl.u32 %v1058, 7
        %v1060 = vsub.s32 5, %v1059
        %v1061 = vrot.slane %v1022, %v1060
        %1063 = vbcast.lane.b32.xlu0 %v1061, 256
        %v1064 = vpop.permute.xlu0 %1063
        %v1065 = vlaneseq
        %v1066 = vshrl.u32 %v1065, 7
        %v1067 = vsub.s32 6, %v1066
        %v1068 = vrot.slane %v1022, %v1067
        %1070 = vbcast.lane.b32.xlu0 %v1068, 256
        %v1071 = vpop.permute.xlu0 %1070
        %v1072 = vlaneseq
        %v1073 = vshrl.u32 %v1072, 7
        %v1074 = vsub.s32 7, %v1073
        %v1075 = vrot.slane %v1022, %v1074
        %1077 = vbcast.lane.b32.xlu0 %v1075, 256
        %v1078 = vpop.permute.xlu0 %1077
        %v1079 = vlaneseq
        %v1080 = vshrl.u32 %v1079, 7
        %v1081 = vsub.s32 1, %v1080
        %v1082 = vrot.slane %v940, %v1081
        %v1083 = vmul.f32 %v1029, %v1082
        %v1084 = vmul.f32 %v1036, %v1082
        %v1085 = vmul.f32 %v1043, %v1082
        %v1086 = vmul.f32 %v1050, %v1082
        %v1087 = vmul.f32 %v1057, %v1082
        %v1088 = vmul.f32 %v1064, %v1082
        %v1089 = vmul.f32 %v1071, %v1082
        %v1090 = vmul.f32 %v1078, %v1082
        %v1091 = vadd.f32 %v1012, %v1083
        %v1092 = vadd.f32 %v1013, %v1084
        %v1093 = vadd.f32 %v1014, %v1085
        %v1094 = vadd.f32 %v1015, %v1086
        %v1095 = vadd.f32 %v1016, %v1087
        %v1096 = vadd.f32 %v1017, %v1088
        %v1097 = vadd.f32 %v1018, %v1089
        %v1098 = vadd.f32 %v1019, %v1090
        %vm1099 = vcmp.eq.s32.totalorder %v523, 2
        %v1100 = vsel %vm1099, 1, 0
        %v1101 = vcvt.s32.f32 %v1100
        %v1102 = vlaneseq
        %v1103 = vshrl.u32 %v1102, 7
        %v1104 = vsub.s32 0, %v1103
        %v1105 = vrot.slane %v1101, %v1104
        %1107 = vbcast.lane.b32.xlu0 %v1105, 256
        %v1108 = vpop.permute.xlu0 %1107
        %v1109 = vlaneseq
        %v1110 = vshrl.u32 %v1109, 7
        %v1111 = vsub.s32 1, %v1110
        %v1112 = vrot.slane %v1101, %v1111
        %1114 = vbcast.lane.b32.xlu0 %v1112, 256
        %v1115 = vpop.permute.xlu0 %1114
        %v1116 = vlaneseq
        %v1117 = vshrl.u32 %v1116, 7
        %v1118 = vsub.s32 2, %v1117
        %v1119 = vrot.slane %v1101, %v1118
        %1121 = vbcast.lane.b32.xlu0 %v1119, 256
        %v1122 = vpop.permute.xlu0 %1121
        %v1123 = vlaneseq
        %v1124 = vshrl.u32 %v1123, 7
        %v1125 = vsub.s32 3, %v1124
        %v1126 = vrot.slane %v1101, %v1125
        %1128 = vbcast.lane.b32.xlu0 %v1126, 256
        %v1129 = vpop.permute.xlu0 %1128
        %v1130 = vlaneseq
        %v1131 = vshrl.u32 %v1130, 7
        %v1132 = vsub.s32 4, %v1131
        %v1133 = vrot.slane %v1101, %v1132
        %1135 = vbcast.lane.b32.xlu0 %v1133, 256
        %v1136 = vpop.permute.xlu0 %1135
        %v1137 = vlaneseq
        %v1138 = vshrl.u32 %v1137, 7
        %v1139 = vsub.s32 5, %v1138
        %v1140 = vrot.slane %v1101, %v1139
        %1142 = vbcast.lane.b32.xlu0 %v1140, 256
        %v1143 = vpop.permute.xlu0 %1142
        %v1144 = vlaneseq
        %v1145 = vshrl.u32 %v1144, 7
        %v1146 = vsub.s32 6, %v1145
        %v1147 = vrot.slane %v1101, %v1146
        %1149 = vbcast.lane.b32.xlu0 %v1147, 256
        %v1150 = vpop.permute.xlu0 %1149
        %v1151 = vlaneseq
        %v1152 = vshrl.u32 %v1151, 7
        %v1153 = vsub.s32 7, %v1152
        %v1154 = vrot.slane %v1101, %v1153
        %1156 = vbcast.lane.b32.xlu0 %v1154, 256
        %v1157 = vpop.permute.xlu0 %1156
        %v1158 = vlaneseq
        %v1159 = vshrl.u32 %v1158, 7
        %v1160 = vsub.s32 2, %v1159
        %v1161 = vrot.slane %v940, %v1160
        %v1162 = vmul.f32 %v1108, %v1161
        %v1163 = vmul.f32 %v1115, %v1161
        %v1164 = vmul.f32 %v1122, %v1161
        %v1165 = vmul.f32 %v1129, %v1161
        %v1166 = vmul.f32 %v1136, %v1161
        %v1167 = vmul.f32 %v1143, %v1161
        %v1168 = vmul.f32 %v1150, %v1161
        %v1169 = vmul.f32 %v1157, %v1161
        %v1170 = vadd.f32 %v1091, %v1162
        %v1171 = vadd.f32 %v1092, %v1163
        %v1172 = vadd.f32 %v1093, %v1164
        %v1173 = vadd.f32 %v1094, %v1165
        %v1174 = vadd.f32 %v1095, %v1166
        %v1175 = vadd.f32 %v1096, %v1167
        %v1176 = vadd.f32 %v1097, %v1168
        %v1177 = vadd.f32 %v1098, %v1169
        %v1178 = vlaneseq
        %v1179 = vshrl.u32 %v1178, 7
        %v1180 = vsub.s32 0, %v1179
        %v1181 = vrot.slane %v630, %v1180
        %1183 = vbcast.lane.b32.xlu0 %v1181, 256
        %v1184 = vpop.permute.xlu0 %1183
        %v1185 = vlaneseq
        %v1186 = vshrl.u32 %v1185, 7
        %v1187 = vsub.s32 1, %v1186
        %v1188 = vrot.slane %v630, %v1187
        %1190 = vbcast.lane.b32.xlu0 %v1188, 256
        %v1191 = vpop.permute.xlu0 %1190
        %v1192 = vlaneseq
        %v1193 = vshrl.u32 %v1192, 7
        %v1194 = vsub.s32 2, %v1193
        %v1195 = vrot.slane %v630, %v1194
        %1197 = vbcast.lane.b32.xlu0 %v1195, 256
        %v1198 = vpop.permute.xlu0 %1197
        %v1199 = vlaneseq
        %v1200 = vshrl.u32 %v1199, 7
        %v1201 = vsub.s32 3, %v1200
        %v1202 = vrot.slane %v630, %v1201
        %1204 = vbcast.lane.b32.xlu0 %v1202, 256
        %v1205 = vpop.permute.xlu0 %1204
        %v1206 = vlaneseq
        %v1207 = vshrl.u32 %v1206, 7
        %v1208 = vsub.s32 4, %v1207
        %v1209 = vrot.slane %v630, %v1208
        %1211 = vbcast.lane.b32.xlu0 %v1209, 256
        %v1212 = vpop.permute.xlu0 %1211
        %v1213 = vlaneseq
        %v1214 = vshrl.u32 %v1213, 7
        %v1215 = vsub.s32 5, %v1214
        %v1216 = vrot.slane %v630, %v1215
        %1218 = vbcast.lane.b32.xlu0 %v1216, 256
        %v1219 = vpop.permute.xlu0 %1218
        %v1220 = vlaneseq
        %v1221 = vshrl.u32 %v1220, 7
        %v1222 = vsub.s32 6, %v1221
        %v1223 = vrot.slane %v630, %v1222
        %1225 = vbcast.lane.b32.xlu0 %v1223, 256
        %v1226 = vpop.permute.xlu0 %1225
        %v1227 = vlaneseq
        %v1228 = vshrl.u32 %v1227, 7
        %v1229 = vsub.s32 7, %v1228
        %v1230 = vrot.slane %v630, %v1229
        %1232 = vbcast.lane.b32.xlu0 %v1230, 256
        %v1233 = vpop.permute.xlu0 %1232
        %v1234 = vlaneseq
        %v1235 = vshrl.u32 %v1234, 7
        %v1236 = vsub.s32 3, %v1235
        %v1237 = vrot.slane %v940, %v1236
        %v1238 = vmul.f32 %v1184, %v1237
        %v1239 = vmul.f32 %v1191, %v1237
        %v1240 = vmul.f32 %v1198, %v1237
        %v1241 = vmul.f32 %v1205, %v1237
        %v1242 = vmul.f32 %v1212, %v1237
        %v1243 = vmul.f32 %v1219, %v1237
        %v1244 = vmul.f32 %v1226, %v1237
        %v1245 = vmul.f32 %v1233, %v1237
        %v1246 = vadd.f32 %v1170, %v1238
        %v1247 = vadd.f32 %v1171, %v1239
        %v1248 = vadd.f32 %v1172, %v1240
        %v1249 = vadd.f32 %v1173, %v1241
        %v1250 = vadd.f32 %v1174, %v1242
        %v1251 = vadd.f32 %v1175, %v1243
        %v1252 = vadd.f32 %v1176, %v1244
        %v1253 = vadd.f32 %v1177, %v1245
        %vm1254 = vcmp.eq.s32.totalorder %v523, 4
        %v1255 = vsel %vm1254, 1, 0
        %v1256 = vcvt.s32.f32 %v1255
        %v1257 = vlaneseq
        %v1258 = vshrl.u32 %v1257, 7
        %v1259 = vsub.s32 0, %v1258
        %v1260 = vrot.slane %v1256, %v1259
        %1262 = vbcast.lane.b32.xlu0 %v1260, 256
        %v1263 = vpop.permute.xlu0 %1262
        %v1264 = vlaneseq
        %v1265 = vshrl.u32 %v1264, 7
        %v1266 = vsub.s32 1, %v1265
        %v1267 = vrot.slane %v1256, %v1266
        %1269 = vbcast.lane.b32.xlu0 %v1267, 256
        %v1270 = vpop.permute.xlu0 %1269
        %v1271 = vlaneseq
        %v1272 = vshrl.u32 %v1271, 7
        %v1273 = vsub.s32 2, %v1272
        %v1274 = vrot.slane %v1256, %v1273
        %1276 = vbcast.lane.b32.xlu0 %v1274, 256
        %v1277 = vpop.permute.xlu0 %1276
        %v1278 = vlaneseq
        %v1279 = vshrl.u32 %v1278, 7
        %v1280 = vsub.s32 3, %v1279
        %v1281 = vrot.slane %v1256, %v1280
        %1283 = vbcast.lane.b32.xlu0 %v1281, 256
        %v1284 = vpop.permute.xlu0 %1283
        %v1285 = vlaneseq
        %v1286 = vshrl.u32 %v1285, 7
        %v1287 = vsub.s32 4, %v1286
        %v1288 = vrot.slane %v1256, %v1287
        %1290 = vbcast.lane.b32.xlu0 %v1288, 256
        %v1291 = vpop.permute.xlu0 %1290
        %v1292 = vlaneseq
        %v1293 = vshrl.u32 %v1292, 7
        %v1294 = vsub.s32 5, %v1293
        %v1295 = vrot.slane %v1256, %v1294
        %1297 = vbcast.lane.b32.xlu0 %v1295, 256
        %v1298 = vpop.permute.xlu0 %1297
        %v1299 = vlaneseq
        %v1300 = vshrl.u32 %v1299, 7
        %v1301 = vsub.s32 6, %v1300
        %v1302 = vrot.slane %v1256, %v1301
        %1304 = vbcast.lane.b32.xlu0 %v1302, 256
        %v1305 = vpop.permute.xlu0 %1304
        %v1306 = vlaneseq
        %v1307 = vshrl.u32 %v1306, 7
        %v1308 = vsub.s32 7, %v1307
        %v1309 = vrot.slane %v1256, %v1308
        %1311 = vbcast.lane.b32.xlu0 %v1309, 256
        %v1312 = vpop.permute.xlu0 %1311
        %v1313 = vlaneseq
        %v1314 = vshrl.u32 %v1313, 7
        %v1315 = vsub.s32 4, %v1314
        %v1316 = vrot.slane %v940, %v1315
        %v1317 = vmul.f32 %v1263, %v1316
        %v1318 = vmul.f32 %v1270, %v1316
        %v1319 = vmul.f32 %v1277, %v1316
        %v1320 = vmul.f32 %v1284, %v1316
        %v1321 = vmul.f32 %v1291, %v1316
        %v1322 = vmul.f32 %v1298, %v1316
        %v1323 = vmul.f32 %v1305, %v1316
        %v1324 = vmul.f32 %v1312, %v1316
        %v1325 = vadd.f32 %v1246, %v1317
        %v1326 = vadd.f32 %v1247, %v1318
        %v1327 = vadd.f32 %v1248, %v1319
        %v1328 = vadd.f32 %v1249, %v1320
        %v1329 = vadd.f32 %v1250, %v1321
        %v1330 = vadd.f32 %v1251, %v1322
        %v1331 = vadd.f32 %v1252, %v1323
        %v1332 = vadd.f32 %v1253, %v1324
        %vm1333 = vcmp.eq.s32.totalorder %v523, 5
        %v1334 = vsel %vm1333, 1, 0
        %v1335 = vcvt.s32.f32 %v1334
        %v1336 = vlaneseq
        %v1337 = vshrl.u32 %v1336, 7
        %v1338 = vsub.s32 0, %v1337
        %v1339 = vrot.slane %v1335, %v1338
        %1341 = vbcast.lane.b32.xlu0 %v1339, 256
        %v1342 = vpop.permute.xlu0 %1341
        %v1343 = vlaneseq
        %v1344 = vshrl.u32 %v1343, 7
        %v1345 = vsub.s32 1, %v1344
        %v1346 = vrot.slane %v1335, %v1345
        %1348 = vbcast.lane.b32.xlu0 %v1346, 256
        %v1349 = vpop.permute.xlu0 %1348
        %v1350 = vlaneseq
        %v1351 = vshrl.u32 %v1350, 7
        %v1352 = vsub.s32 2, %v1351
        %v1353 = vrot.slane %v1335, %v1352
        %1355 = vbcast.lane.b32.xlu0 %v1353, 256
        %v1356 = vpop.permute.xlu0 %1355
        %v1357 = vlaneseq
        %v1358 = vshrl.u32 %v1357, 7
        %v1359 = vsub.s32 3, %v1358
        %v1360 = vrot.slane %v1335, %v1359
        %1362 = vbcast.lane.b32.xlu0 %v1360, 256
        %v1363 = vpop.permute.xlu0 %1362
        %v1364 = vlaneseq
        %v1365 = vshrl.u32 %v1364, 7
        %v1366 = vsub.s32 4, %v1365
        %v1367 = vrot.slane %v1335, %v1366
        %1369 = vbcast.lane.b32.xlu0 %v1367, 256
        %v1370 = vpop.permute.xlu0 %1369
        %v1371 = vlaneseq
        %v1372 = vshrl.u32 %v1371, 7
        %v1373 = vsub.s32 5, %v1372
        %v1374 = vrot.slane %v1335, %v1373
        %1376 = vbcast.lane.b32.xlu0 %v1374, 256
        %v1377 = vpop.permute.xlu0 %1376
        %v1378 = vlaneseq
        %v1379 = vshrl.u32 %v1378, 7
        %v1380 = vsub.s32 6, %v1379
        %v1381 = vrot.slane %v1335, %v1380
        %1383 = vbcast.lane.b32.xlu0 %v1381, 256
        %v1384 = vpop.permute.xlu0 %1383
        %v1385 = vlaneseq
        %v1386 = vshrl.u32 %v1385, 7
        %v1387 = vsub.s32 7, %v1386
        %v1388 = vrot.slane %v1335, %v1387
        %1390 = vbcast.lane.b32.xlu0 %v1388, 256
        %v1391 = vpop.permute.xlu0 %1390
        %v1392 = vlaneseq
        %v1393 = vshrl.u32 %v1392, 7
        %v1394 = vsub.s32 5, %v1393
        %v1395 = vrot.slane %v940, %v1394
        %v1396 = vmul.f32 %v1342, %v1395
        %v1397 = vmul.f32 %v1349, %v1395
        %v1398 = vmul.f32 %v1356, %v1395
        %v1399 = vmul.f32 %v1363, %v1395
        %v1400 = vmul.f32 %v1370, %v1395
        %v1401 = vmul.f32 %v1377, %v1395
        %v1402 = vmul.f32 %v1384, %v1395
        %v1403 = vmul.f32 %v1391, %v1395
        %v1404 = vadd.f32 %v1325, %v1396
        %v1405 = vadd.f32 %v1326, %v1397
        %v1406 = vadd.f32 %v1327, %v1398
        %v1407 = vadd.f32 %v1328, %v1399
        %v1408 = vadd.f32 %v1329, %v1400
        %v1409 = vadd.f32 %v1330, %v1401
        %v1410 = vadd.f32 %v1331, %v1402
        %v1411 = vadd.f32 %v1332, %v1403
        %vm1412 = vcmask 68608
        %v1413 = vsel %vm1412, %v540, -inf
        %1414 = vmax.xlane.f32.xlu0 %v1413
        %v1415 = vpop.xlane.xlu0 %1414
        %v1416 = vsel %vm1412, %v541, -inf
        %1417 = vmax.xlane.f32.xlu0 %v1416
        %v1418 = vpop.xlane.xlu0 %1417
        %v1419 = vsel %vm1412, %v542, -inf
        %1420 = vmax.xlane.f32.xlu0 %v1419
        %v1421 = vpop.xlane.xlu0 %1420
        %v1422 = vsel %vm1412, %v543, -inf
        %1423 = vmax.xlane.f32.xlu0 %v1422
        %v1424 = vpop.xlane.xlu0 %1423
        %v1425 = vsel %vm1412, %v544, -inf
        %1426 = vmax.xlane.f32.xlu0 %v1425
        %v1427 = vpop.xlane.xlu0 %1426
        %v1428 = vsel %vm1412, %v545, -inf
        %1429 = vmax.xlane.f32.xlu0 %v1428
        %v1430 = vpop.xlane.xlu0 %1429
        %v1431 = vsel %vm1412, %v546, -inf
        %1432 = vmax.xlane.f32.xlu0 %v1431
        %v1433 = vpop.xlane.xlu0 %1432
        %v1434 = vsel %vm1412, %v547, -inf
        %1435 = vmax.xlane.f32.xlu0 %v1434
        %v1436 = vpop.xlane.xlu0 %1435
        %v1437 = vsel %vm1412, %v548, -inf
        %1438 = vmax.xlane.f32.xlu0 %v1437
        %v1439 = vpop.xlane.xlu0 %1438
        %v1440 = vsel %vm1412, %v549, -inf
        %1441 = vmax.xlane.f32.xlu0 %v1440
        %v1442 = vpop.xlane.xlu0 %1441
        %v1443 = vsel %vm1412, %v550, -inf
        %1444 = vmax.xlane.f32.xlu0 %v1443
        %v1445 = vpop.xlane.xlu0 %1444
        %v1446 = vsel %vm1412, %v551, -inf
        %1447 = vmax.xlane.f32.xlu0 %v1446
        %v1448 = vpop.xlane.xlu0 %1447
        %v1449 = vsel %vm1412, %v552, -inf
        %1450 = vmax.xlane.f32.xlu0 %v1449
        %v1451 = vpop.xlane.xlu0 %1450
        %v1452 = vsel %vm1412, %v553, -inf
        %1453 = vmax.xlane.f32.xlu0 %v1452
        %v1454 = vpop.xlane.xlu0 %1453
        %v1455 = vsel %vm1412, %v554, -inf
        %1456 = vmax.xlane.f32.xlu0 %v1455
        %v1457 = vpop.xlane.xlu0 %1456
        %v1458 = vsel %vm1412, %v555, -inf
        %1459 = vmax.xlane.f32.xlu0 %v1458
        %v1460 = vpop.xlane.xlu0 %1459
        %v1461 = vsel %vm1412, %v556, -inf
        %1462 = vmax.xlane.f32.xlu0 %v1461
        %v1463 = vpop.xlane.xlu0 %1462
        %v1464 = vsel %vm1412, %v557, -inf
        %1465 = vmax.xlane.f32.xlu0 %v1464
        %v1466 = vpop.xlane.xlu0 %1465
        %v1467 = vsel %vm1412, %v558, -inf
        %1468 = vmax.xlane.f32.xlu0 %v1467
        %v1469 = vpop.xlane.xlu0 %1468
        %v1470 = vsel %vm1412, %v559, -inf
        %1471 = vmax.xlane.f32.xlu0 %v1470
        %v1472 = vpop.xlane.xlu0 %1471
        %v1473 = vsel %vm1412, %v560, -inf
        %1474 = vmax.xlane.f32.xlu0 %v1473
        %v1475 = vpop.xlane.xlu0 %1474
        %v1476 = vsel %vm1412, %v561, -inf
        %1477 = vmax.xlane.f32.xlu0 %v1476
        %v1478 = vpop.xlane.xlu0 %1477
        %v1479 = vsel %vm1412, %v562, -inf
        %1480 = vmax.xlane.f32.xlu0 %v1479
        %v1481 = vpop.xlane.xlu0 %1480
        %v1482 = vsel %vm1412, %v563, -inf
        %1483 = vmax.xlane.f32.xlu0 %v1482
        %v1484 = vpop.xlane.xlu0 %1483
        %v1485 = vsel %vm1412, %v564, -inf
        %1486 = vmax.xlane.f32.xlu0 %v1485
        %v1487 = vpop.xlane.xlu0 %1486
        %v1488 = vsel %vm1412, %v565, -inf
        %1489 = vmax.xlane.f32.xlu0 %v1488
        %v1490 = vpop.xlane.xlu0 %1489
        %v1491 = vsel %vm1412, %v566, -inf
        %1492 = vmax.xlane.f32.xlu0 %v1491
        %v1493 = vpop.xlane.xlu0 %1492
        %v1494 = vsel %vm1412, %v567, -inf
        %1495 = vmax.xlane.f32.xlu0 %v1494
        %v1496 = vpop.xlane.xlu0 %1495
        %v1497 = vsel %vm1412, %v568, -inf
        %1498 = vmax.xlane.f32.xlu0 %v1497
        %v1499 = vpop.xlane.xlu0 %1498
        %v1500 = vsel %vm1412, %v569, -inf
        %1501 = vmax.xlane.f32.xlu0 %v1500
        %v1502 = vpop.xlane.xlu0 %1501
        %v1503 = vsel %vm1412, %v570, -inf
        %1504 = vmax.xlane.f32.xlu0 %v1503
        %v1505 = vpop.xlane.xlu0 %1504
        %v1506 = vsel %vm1412, %v571, -inf
        %1507 = vmax.xlane.f32.xlu0 %v1506
        %v1508 = vpop.xlane.xlu0 %1507
        %v1509 = vsel %vm1412, %v572, -inf
        %1510 = vmax.xlane.f32.xlu0 %v1509
        %v1511 = vpop.xlane.xlu0 %1510
        %v1512 = vsel %vm1412, %v573, -inf
        %1513 = vmax.xlane.f32.xlu0 %v1512
        %v1514 = vpop.xlane.xlu0 %1513
        %v1515 = vsel %vm1412, %v574, -inf
        %1516 = vmax.xlane.f32.xlu0 %v1515
        %v1517 = vpop.xlane.xlu0 %1516
        %v1518 = vsel %vm1412, %v575, -inf
        %1519 = vmax.xlane.f32.xlu0 %v1518
        %v1520 = vpop.xlane.xlu0 %1519
        %v1521 = vsel %vm1412, %v576, -inf
        %1522 = vmax.xlane.f32.xlu0 %v1521
        %v1523 = vpop.xlane.xlu0 %1522
        %v1524 = vsel %vm1412, %v577, -inf
        %1525 = vmax.xlane.f32.xlu0 %v1524
        %v1526 = vpop.xlane.xlu0 %1525
        %v1527 = vsel %vm1412, %v578, -inf
        %1528 = vmax.xlane.f32.xlu0 %v1527
        %v1529 = vpop.xlane.xlu0 %1528
        %v1530 = vsel %vm1412, %v579, -inf
        %1531 = vmax.xlane.f32.xlu0 %v1530
        %v1532 = vpop.xlane.xlu0 %1531
        %v1533 = vsel %vm1412, %v580, -inf
        %1534 = vmax.xlane.f32.xlu0 %v1533
        %v1535 = vpop.xlane.xlu0 %1534
        %v1536 = vsel %vm1412, %v581, -inf
        %1537 = vmax.xlane.f32.xlu0 %v1536
        %v1538 = vpop.xlane.xlu0 %1537
        %v1539 = vsel %vm1412, %v582, -inf
        %1540 = vmax.xlane.f32.xlu0 %v1539
        %v1541 = vpop.xlane.xlu0 %1540
        %v1542 = vsel %vm1412, %v583, -inf
        %1543 = vmax.xlane.f32.xlu0 %v1542
        %v1544 = vpop.xlane.xlu0 %1543
        %v1545 = vsel %vm1412, %v584, -inf
        %1546 = vmax.xlane.f32.xlu0 %v1545
        %v1547 = vpop.xlane.xlu0 %1546
        %v1548 = vsel %vm1412, %v585, -inf
        %1549 = vmax.xlane.f32.xlu0 %v1548
        %v1550 = vpop.xlane.xlu0 %1549
        %v1551 = vsel %vm1412, %v586, -inf
        %1552 = vmax.xlane.f32.xlu0 %v1551
        %v1553 = vpop.xlane.xlu0 %1552
        %v1554 = vsel %vm1412, %v587, -inf
        %1555 = vmax.xlane.f32.xlu0 %v1554
        %v1556 = vpop.xlane.xlu0 %1555
        %v1557 = vsel %vm1412, %v588, -inf
        %1558 = vmax.xlane.f32.xlu0 %v1557
        %v1559 = vpop.xlane.xlu0 %1558
        %v1560 = vsel %vm1412, %v589, -inf
        %1561 = vmax.xlane.f32.xlu0 %v1560
        %v1562 = vpop.xlane.xlu0 %1561
        %v1563 = vsel %vm1412, %v590, -inf
        %1564 = vmax.xlane.f32.xlu0 %v1563
        %v1565 = vpop.xlane.xlu0 %1564
        %v1566 = vsel %vm1412, %v591, -inf
        %1567 = vmax.xlane.f32.xlu0 %v1566
        %v1568 = vpop.xlane.xlu0 %1567
        %v1569 = vsel %vm1412, %v592, -inf
        %1570 = vmax.xlane.f32.xlu0 %v1569
        %v1571 = vpop.xlane.xlu0 %1570
        %v1572 = vsel %vm1412, %v593, -inf
        %1573 = vmax.xlane.f32.xlu0 %v1572
        %v1574 = vpop.xlane.xlu0 %1573
        %v1575 = vsel %vm1412, %v594, -inf
        %1576 = vmax.xlane.f32.xlu0 %v1575
        %v1577 = vpop.xlane.xlu0 %1576
        %v1578 = vsel %vm1412, %v595, -inf
        %1579 = vmax.xlane.f32.xlu0 %v1578
        %v1580 = vpop.xlane.xlu0 %1579
        %v1581 = vsel %vm1412, %v596, -inf
        %1582 = vmax.xlane.f32.xlu0 %v1581
        %v1583 = vpop.xlane.xlu0 %1582
        %v1584 = vsel %vm1412, %v597, -inf
        %1585 = vmax.xlane.f32.xlu0 %v1584
        %v1586 = vpop.xlane.xlu0 %1585
        %v1587 = vsel %vm1412, %v598, -inf
        %1588 = vmax.xlane.f32.xlu0 %v1587
        %v1589 = vpop.xlane.xlu0 %1588
        %v1590 = vsel %vm1412, %v599, -inf
        %1591 = vmax.xlane.f32.xlu0 %v1590
        %v1592 = vpop.xlane.xlu0 %1591
        %v1593 = vsel %vm1412, %v600, -inf
        %1594 = vmax.xlane.f32.xlu0 %v1593
        %v1595 = vpop.xlane.xlu0 %1594
        %v1596 = vsel %vm1412, %v601, -inf
        %1597 = vmax.xlane.f32.xlu0 %v1596
        %v1598 = vpop.xlane.xlu0 %1597
        %v1599 = vsel %vm1412, %v602, -inf
        %1600 = vmax.xlane.f32.xlu0 %v1599
        %v1601 = vpop.xlane.xlu0 %1600
        %v1602 = vsel %vm1412, %v603, -inf
        %1603 = vmax.xlane.f32.xlu0 %v1602
        %v1604 = vpop.xlane.xlu0 %1603
        %v1605 = vsub.f32 %v540, %v1415
        %v1606 = vsub.f32 %v541, %v1418
        %v1607 = vsub.f32 %v542, %v1421
        %v1608 = vsub.f32 %v543, %v1424
        %v1609 = vsub.f32 %v544, %v1427
        %v1610 = vsub.f32 %v545, %v1430
        %v1611 = vsub.f32 %v546, %v1433
        %v1612 = vsub.f32 %v547, %v1436
        %v1613 = vsub.f32 %v548, %v1439
        %v1614 = vsub.f32 %v549, %v1442
        %v1615 = vsub.f32 %v550, %v1445
        %v1616 = vsub.f32 %v551, %v1448
        %v1617 = vsub.f32 %v552, %v1451
        %v1618 = vsub.f32 %v553, %v1454
        %v1619 = vsub.f32 %v554, %v1457
        %v1620 = vsub.f32 %v555, %v1460
        %v1621 = vsub.f32 %v556, %v1463
        %v1622 = vsub.f32 %v557, %v1466
        %v1623 = vsub.f32 %v558, %v1469
        %v1624 = vsub.f32 %v559, %v1472
        %v1625 = vsub.f32 %v560, %v1475
        %v1626 = vsub.f32 %v561, %v1478
        %v1627 = vsub.f32 %v562, %v1481
        %v1628 = vsub.f32 %v563, %v1484
        %v1629 = vsub.f32 %v564, %v1487
        %v1630 = vsub.f32 %v565, %v1490
        %v1631 = vsub.f32 %v566, %v1493
        %v1632 = vsub.f32 %v567, %v1496
        %v1633 = vsub.f32 %v568, %v1499
        %v1634 = vsub.f32 %v569, %v1502
        %v1635 = vsub.f32 %v570, %v1505
        %v1636 = vsub.f32 %v571, %v1508
        %v1637 = vsub.f32 %v572, %v1511
        %v1638 = vsub.f32 %v573, %v1514
        %v1639 = vsub.f32 %v574, %v1517
        %v1640 = vsub.f32 %v575, %v1520
        %v1641 = vsub.f32 %v576, %v1523
        %v1642 = vsub.f32 %v577, %v1526
        %v1643 = vsub.f32 %v578, %v1529
        %v1644 = vsub.f32 %v579, %v1532
        %v1645 = vsub.f32 %v580, %v1535
        %v1646 = vsub.f32 %v581, %v1538
        %v1647 = vsub.f32 %v582, %v1541
        %v1648 = vsub.f32 %v583, %v1544
        %v1649 = vsub.f32 %v584, %v1547
        %v1650 = vsub.f32 %v585, %v1550
        %v1651 = vsub.f32 %v586, %v1553
        %v1652 = vsub.f32 %v587, %v1556
        %v1653 = vsub.f32 %v588, %v1559
        %v1654 = vsub.f32 %v589, %v1562
        %v1655 = vsub.f32 %v590, %v1565
        %v1656 = vsub.f32 %v591, %v1568
        %v1657 = vsub.f32 %v592, %v1571
        %v1658 = vsub.f32 %v593, %v1574
        %v1659 = vsub.f32 %v594, %v1577
        %v1660 = vsub.f32 %v595, %v1580
        %v1661 = vsub.f32 %v596, %v1583
        %v1662 = vsub.f32 %v597, %v1586
        %v1663 = vsub.f32 %v598, %v1589
        %v1664 = vsub.f32 %v599, %v1592
        %v1665 = vsub.f32 %v600, %v1595
        %v1666 = vsub.f32 %v601, %v1598
        %v1667 = vsub.f32 %v602, %v1601
        %v1668 = vsub.f32 %v603, %v1604
        %v1669 = vmul.f32 %v1605, 1.442695
        %v1670 = vpow.pop %v1669
        %v1671 = vmul.f32 %v1606, 1.442695
        %v1672 = vpow.pop %v1671
        %v1673 = vmul.f32 %v1607, 1.442695
        %v1674 = vpow.pop %v1673
        %v1675 = vmul.f32 %v1608, 1.442695
        %v1676 = vpow.pop %v1675
        %v1677 = vmul.f32 %v1609, 1.442695
        %v1678 = vpow.pop %v1677
        %v1679 = vmul.f32 %v1610, 1.442695
        %v1680 = vpow.pop %v1679
        %v1681 = vmul.f32 %v1611, 1.442695
        %v1682 = vpow.pop %v1681
        %v1683 = vmul.f32 %v1612, 1.442695
        %v1684 = vpow.pop %v1683
        %v1685 = vmul.f32 %v1613, 1.442695
        %v1686 = vpow.pop %v1685
        %v1687 = vmul.f32 %v1614, 1.442695
        %v1688 = vpow.pop %v1687
        %v1689 = vmul.f32 %v1615, 1.442695
        %v1690 = vpow.pop %v1689
        %v1691 = vmul.f32 %v1616, 1.442695
        %v1692 = vpow.pop %v1691
        %v1693 = vmul.f32 %v1617, 1.442695
        %v1694 = vpow.pop %v1693
        %v1695 = vmul.f32 %v1618, 1.442695
        %v1696 = vpow.pop %v1695
        %v1697 = vmul.f32 %v1619, 1.442695
        %v1698 = vpow.pop %v1697
        %v1699 = vmul.f32 %v1620, 1.442695
        %v1700 = vpow.pop %v1699
        %v1701 = vmul.f32 %v1621, 1.442695
        %v1702 = vpow.pop %v1701
        %v1703 = vmul.f32 %v1622, 1.442695
        %v1704 = vpow.pop %v1703
        %v1705 = vmul.f32 %v1623, 1.442695
        %v1706 = vpow.pop %v1705
        %v1707 = vmul.f32 %v1624, 1.442695
        %v1708 = vpow.pop %v1707
        %v1709 = vmul.f32 %v1625, 1.442695
        %v1710 = vpow.pop %v1709
        %v1711 = vmul.f32 %v1626, 1.442695
        %v1712 = vpow.pop %v1711
        %v1713 = vmul.f32 %v1627, 1.442695
        %v1714 = vpow.pop %v1713
        %v1715 = vmul.f32 %v1628, 1.442695
        %v1716 = vpow.pop %v1715
        %v1717 = vmul.f32 %v1629, 1.442695
        %v1718 = vpow.pop %v1717
        %v1719 = vmul.f32 %v1630, 1.442695
        %v1720 = vpow.pop %v1719
        %v1721 = vmul.f32 %v1631, 1.442695
        %v1722 = vpow.pop %v1721
        %v1723 = vmul.f32 %v1632, 1.442695
        %v1724 = vpow.pop %v1723
        %v1725 = vmul.f32 %v1633, 1.442695
        %v1726 = vpow.pop %v1725
        %v1727 = vmul.f32 %v1634, 1.442695
        %v1728 = vpow.pop %v1727
        %v1729 = vmul.f32 %v1635, 1.442695
        %v1730 = vpow.pop %v1729
        %v1731 = vmul.f32 %v1636, 1.442695
        %v1732 = vpow.pop %v1731
        %v1733 = vmul.f32 %v1637, 1.442695
        %v1734 = vpow.pop %v1733
        %v1735 = vmul.f32 %v1638, 1.442695
        %v1736 = vpow.pop %v1735
        %v1737 = vmul.f32 %v1639, 1.442695
        %v1738 = vpow.pop %v1737
        %v1739 = vmul.f32 %v1640, 1.442695
        %v1740 = vpow.pop %v1739
        %v1741 = vmul.f32 %v1641, 1.442695
        %v1742 = vpow.pop %v1741
        %v1743 = vmul.f32 %v1642, 1.442695
        %v1744 = vpow.pop %v1743
        %v1745 = vmul.f32 %v1643, 1.442695
        %v1746 = vpow.pop %v1745
        %v1747 = vmul.f32 %v1644, 1.442695
        %v1748 = vpow.pop %v1747
        %v1749 = vmul.f32 %v1645, 1.442695
        %v1750 = vpow.pop %v1749
        %v1751 = vmul.f32 %v1646, 1.442695
        %v1752 = vpow.pop %v1751
        %v1753 = vmul.f32 %v1647, 1.442695
        %v1754 = vpow.pop %v1753
        %v1755 = vmul.f32 %v1648, 1.442695
        %v1756 = vpow.pop %v1755
        %v1757 = vmul.f32 %v1649, 1.442695
        %v1758 = vpow.pop %v1757
        %v1759 = vmul.f32 %v1650, 1.442695
        %v1760 = vpow.pop %v1759
        %v1761 = vmul.f32 %v1651, 1.442695
        %v1762 = vpow.pop %v1761
        %v1763 = vmul.f32 %v1652, 1.442695
        %v1764 = vpow.pop %v1763
        %v1765 = vmul.f32 %v1653, 1.442695
        %v1766 = vpow.pop %v1765
        %v1767 = vmul.f32 %v1654, 1.442695
        %v1768 = vpow.pop %v1767
        %v1769 = vmul.f32 %v1655, 1.442695
        %v1770 = vpow.pop %v1769
        %v1771 = vmul.f32 %v1656, 1.442695
        %v1772 = vpow.pop %v1771
        %v1773 = vmul.f32 %v1657, 1.442695
        %v1774 = vpow.pop %v1773
        %v1775 = vmul.f32 %v1658, 1.442695
        %v1776 = vpow.pop %v1775
        %v1777 = vmul.f32 %v1659, 1.442695
        %v1778 = vpow.pop %v1777
        %v1779 = vmul.f32 %v1660, 1.442695
        %v1780 = vpow.pop %v1779
        %v1781 = vmul.f32 %v1661, 1.442695
        %v1782 = vpow.pop %v1781
        %v1783 = vmul.f32 %v1662, 1.442695
        %v1784 = vpow.pop %v1783
        %v1785 = vmul.f32 %v1663, 1.442695
        %v1786 = vpow.pop %v1785
        %v1787 = vmul.f32 %v1664, 1.442695
        %v1788 = vpow.pop %v1787
        %v1789 = vmul.f32 %v1665, 1.442695
        %v1790 = vpow.pop %v1789
        %v1791 = vmul.f32 %v1666, 1.442695
        %v1792 = vpow.pop %v1791
        %v1793 = vmul.f32 %v1667, 1.442695
        %v1794 = vpow.pop %v1793
        %v1795 = vmul.f32 %v1668, 1.442695
        %v1796 = vpow.pop %v1795
        %v1797 = vsel %vm1412, %v1670, 0.0
        %1798 = vadd.xlane.f32.xlu0 %v1797
        %v1799 = vpop.xlane.xlu0 %1798
        %v1800 = vsel %vm1412, %v1672, 0.0
        %1801 = vadd.xlane.f32.xlu0 %v1800
        %v1802 = vpop.xlane.xlu0 %1801
        %v1803 = vsel %vm1412, %v1674, 0.0
        %1804 = vadd.xlane.f32.xlu0 %v1803
        %v1805 = vpop.xlane.xlu0 %1804
        %v1806 = vsel %vm1412, %v1676, 0.0
        %1807 = vadd.xlane.f32.xlu0 %v1806
        %v1808 = vpop.xlane.xlu0 %1807
        %v1809 = vsel %vm1412, %v1678, 0.0
        %1810 = vadd.xlane.f32.xlu0 %v1809
        %v1811 = vpop.xlane.xlu0 %1810
        %v1812 = vsel %vm1412, %v1680, 0.0
        %1813 = vadd.xlane.f32.xlu0 %v1812
        %v1814 = vpop.xlane.xlu0 %1813
        %v1815 = vsel %vm1412, %v1682, 0.0
        %1816 = vadd.xlane.f32.xlu0 %v1815
        %v1817 = vpop.xlane.xlu0 %1816
        %v1818 = vsel %vm1412, %v1684, 0.0
        %1819 = vadd.xlane.f32.xlu0 %v1818
        %v1820 = vpop.xlane.xlu0 %1819
        %v1821 = vsel %vm1412, %v1686, 0.0
        %1822 = vadd.xlane.f32.xlu0 %v1821
        %v1823 = vpop.xlane.xlu0 %1822
        %v1824 = vsel %vm1412, %v1688, 0.0
        %1825 = vadd.xlane.f32.xlu0 %v1824
        %v1826 = vpop.xlane.xlu0 %1825
        %v1827 = vsel %vm1412, %v1690, 0.0
        %1828 = vadd.xlane.f32.xlu0 %v1827
        %v1829 = vpop.xlane.xlu0 %1828
        %v1830 = vsel %vm1412, %v1692, 0.0
        %1831 = vadd.xlane.f32.xlu0 %v1830
        %v1832 = vpop.xlane.xlu0 %1831
        %v1833 = vsel %vm1412, %v1694, 0.0
        %1834 = vadd.xlane.f32.xlu0 %v1833
        %v1835 = vpop.xlane.xlu0 %1834
        %v1836 = vsel %vm1412, %v1696, 0.0
        %1837 = vadd.xlane.f32.xlu0 %v1836
        %v1838 = vpop.xlane.xlu0 %1837
        %v1839 = vsel %vm1412, %v1698, 0.0
        %1840 = vadd.xlane.f32.xlu0 %v1839
        %v1841 = vpop.xlane.xlu0 %1840
        %v1842 = vsel %vm1412, %v1700, 0.0
        %1843 = vadd.xlane.f32.xlu0 %v1842
        %v1844 = vpop.xlane.xlu0 %1843
        %v1845 = vsel %vm1412, %v1702, 0.0
        %1846 = vadd.xlane.f32.xlu0 %v1845
        %v1847 = vpop.xlane.xlu0 %1846
        %v1848 = vsel %vm1412, %v1704, 0.0
        %1849 = vadd.xlane.f32.xlu0 %v1848
        %v1850 = vpop.xlane.xlu0 %1849
        %v1851 = vsel %vm1412, %v1706, 0.0
        %1852 = vadd.xlane.f32.xlu0 %v1851
        %v1853 = vpop.xlane.xlu0 %1852
        %v1854 = vsel %vm1412, %v1708, 0.0
        %1855 = vadd.xlane.f32.xlu0 %v1854
        %v1856 = vpop.xlane.xlu0 %1855
        %v1857 = vsel %vm1412, %v1710, 0.0
        %1858 = vadd.xlane.f32.xlu0 %v1857
        %v1859 = vpop.xlane.xlu0 %1858
        %v1860 = vsel %vm1412, %v1712, 0.0
        %1861 = vadd.xlane.f32.xlu0 %v1860
        %v1862 = vpop.xlane.xlu0 %1861
        %v1863 = vsel %vm1412, %v1714, 0.0
        %1864 = vadd.xlane.f32.xlu0 %v1863
        %v1865 = vpop.xlane.xlu0 %1864
        %v1866 = vsel %vm1412, %v1716, 0.0
        %1867 = vadd.xlane.f32.xlu0 %v1866
        %v1868 = vpop.xlane.xlu0 %1867
        %v1869 = vsel %vm1412, %v1718, 0.0
        %1870 = vadd.xlane.f32.xlu0 %v1869
        %v1871 = vpop.xlane.xlu0 %1870
        %v1872 = vsel %vm1412, %v1720, 0.0
        %1873 = vadd.xlane.f32.xlu0 %v1872
        %v1874 = vpop.xlane.xlu0 %1873
        %v1875 = vsel %vm1412, %v1722, 0.0
        %1876 = vadd.xlane.f32.xlu0 %v1875
        %v1877 = vpop.xlane.xlu0 %1876
        %v1878 = vsel %vm1412, %v1724, 0.0
        %1879 = vadd.xlane.f32.xlu0 %v1878
        %v1880 = vpop.xlane.xlu0 %1879
        %v1881 = vsel %vm1412, %v1726, 0.0
        %1882 = vadd.xlane.f32.xlu0 %v1881
        %v1883 = vpop.xlane.xlu0 %1882
        %v1884 = vsel %vm1412, %v1728, 0.0
        %1885 = vadd.xlane.f32.xlu0 %v1884
        %v1886 = vpop.xlane.xlu0 %1885
        %v1887 = vsel %vm1412, %v1730, 0.0
        %1888 = vadd.xlane.f32.xlu0 %v1887
        %v1889 = vpop.xlane.xlu0 %1888
        %v1890 = vsel %vm1412, %v1732, 0.0
        %1891 = vadd.xlane.f32.xlu0 %v1890
        %v1892 = vpop.xlane.xlu0 %1891
        %v1893 = vsel %vm1412, %v1734, 0.0
        %1894 = vadd.xlane.f32.xlu0 %v1893
        %v1895 = vpop.xlane.xlu0 %1894
        %v1896 = vsel %vm1412, %v1736, 0.0
        %1897 = vadd.xlane.f32.xlu0 %v1896
        %v1898 = vpop.xlane.xlu0 %1897
        %v1899 = vsel %vm1412, %v1738, 0.0
        %1900 = vadd.xlane.f32.xlu0 %v1899
        %v1901 = vpop.xlane.xlu0 %1900
        %v1902 = vsel %vm1412, %v1740, 0.0
        %1903 = vadd.xlane.f32.xlu0 %v1902
        %v1904 = vpop.xlane.xlu0 %1903
        %v1905 = vsel %vm1412, %v1742, 0.0
        %1906 = vadd.xlane.f32.xlu0 %v1905
        %v1907 = vpop.xlane.xlu0 %1906
        %v1908 = vsel %vm1412, %v1744, 0.0
        %1909 = vadd.xlane.f32.xlu0 %v1908
        %v1910 = vpop.xlane.xlu0 %1909
        %v1911 = vsel %vm1412, %v1746, 0.0
        %1912 = vadd.xlane.f32.xlu0 %v1911
        %v1913 = vpop.xlane.xlu0 %1912
        %v1914 = vsel %vm1412, %v1748, 0.0
        %1915 = vadd.xlane.f32.xlu0 %v1914
        %v1916 = vpop.xlane.xlu0 %1915
        %v1917 = vsel %vm1412, %v1750, 0.0
        %1918 = vadd.xlane.f32.xlu0 %v1917
        %v1919 = vpop.xlane.xlu0 %1918
        %v1920 = vsel %vm1412, %v1752, 0.0
        %1921 = vadd.xlane.f32.xlu0 %v1920
        %v1922 = vpop.xlane.xlu0 %1921
        %v1923 = vsel %vm1412, %v1754, 0.0
        %1924 = vadd.xlane.f32.xlu0 %v1923
        %v1925 = vpop.xlane.xlu0 %1924
        %v1926 = vsel %vm1412, %v1756, 0.0
        %1927 = vadd.xlane.f32.xlu0 %v1926
        %v1928 = vpop.xlane.xlu0 %1927
        %v1929 = vsel %vm1412, %v1758, 0.0
        %1930 = vadd.xlane.f32.xlu0 %v1929
        %v1931 = vpop.xlane.xlu0 %1930
        %v1932 = vsel %vm1412, %v1760, 0.0
        %1933 = vadd.xlane.f32.xlu0 %v1932
        %v1934 = vpop.xlane.xlu0 %1933
        %v1935 = vsel %vm1412, %v1762, 0.0
        %1936 = vadd.xlane.f32.xlu0 %v1935
        %v1937 = vpop.xlane.xlu0 %1936
        %v1938 = vsel %vm1412, %v1764, 0.0
        %1939 = vadd.xlane.f32.xlu0 %v1938
        %v1940 = vpop.xlane.xlu0 %1939
        %v1941 = vsel %vm1412, %v1766, 0.0
        %1942 = vadd.xlane.f32.xlu0 %v1941
        %v1943 = vpop.xlane.xlu0 %1942
        %v1944 = vsel %vm1412, %v1768, 0.0
        %1945 = vadd.xlane.f32.xlu0 %v1944
        %v1946 = vpop.xlane.xlu0 %1945
        %v1947 = vsel %vm1412, %v1770, 0.0
        %1948 = vadd.xlane.f32.xlu0 %v1947
        %v1949 = vpop.xlane.xlu0 %1948
        %v1950 = vsel %vm1412, %v1772, 0.0
        %1951 = vadd.xlane.f32.xlu0 %v1950
        %v1952 = vpop.xlane.xlu0 %1951
        %v1953 = vsel %vm1412, %v1774, 0.0
        %1954 = vadd.xlane.f32.xlu0 %v1953
        %v1955 = vpop.xlane.xlu0 %1954
        %v1956 = vsel %vm1412, %v1776, 0.0
        %1957 = vadd.xlane.f32.xlu0 %v1956
        %v1958 = vpop.xlane.xlu0 %1957
        %v1959 = vsel %vm1412, %v1778, 0.0
        %1960 = vadd.xlane.f32.xlu0 %v1959
        %v1961 = vpop.xlane.xlu0 %1960
        %v1962 = vsel %vm1412, %v1780, 0.0
        %1963 = vadd.xlane.f32.xlu0 %v1962
        %v1964 = vpop.xlane.xlu0 %1963
        %v1965 = vsel %vm1412, %v1782, 0.0
        %1966 = vadd.xlane.f32.xlu0 %v1965
        %v1967 = vpop.xlane.xlu0 %1966
        %v1968 = vsel %vm1412, %v1784, 0.0
        %1969 = vadd.xlane.f32.xlu0 %v1968
        %v1970 = vpop.xlane.xlu0 %1969
        %v1971 = vsel %vm1412, %v1786, 0.0
        %1972 = vadd.xlane.f32.xlu0 %v1971
        %v1973 = vpop.xlane.xlu0 %1972
        %v1974 = vsel %vm1412, %v1788, 0.0
        %1975 = vadd.xlane.f32.xlu0 %v1974
        %v1976 = vpop.xlane.xlu0 %1975
        %v1977 = vsel %vm1412, %v1790, 0.0
        %1978 = vadd.xlane.f32.xlu0 %v1977
        %v1979 = vpop.xlane.xlu0 %1978
        %v1980 = vsel %vm1412, %v1792, 0.0
        %1981 = vadd.xlane.f32.xlu0 %v1980
        %v1982 = vpop.xlane.xlu0 %1981
        %v1983 = vsel %vm1412, %v1794, 0.0
        %1984 = vadd.xlane.f32.xlu0 %v1983
        %v1985 = vpop.xlane.xlu0 %1984
        %v1986 = vsel %vm1412, %v1796, 0.0
        %1987 = vadd.xlane.f32.xlu0 %v1986
        %v1988 = vpop.xlane.xlu0 %1987
        %v1989 = vlog2.pop %v1799
        %v1990 = vmul.f32 %v1989, 0.6931472
        %v1991 = vlog2.pop %v1802
        %v1992 = vmul.f32 %v1991, 0.6931472
        %v1993 = vlog2.pop %v1805
        %v1994 = vmul.f32 %v1993, 0.6931472
        %v1995 = vlog2.pop %v1808
        %v1996 = vmul.f32 %v1995, 0.6931472
        %v1997 = vlog2.pop %v1811
        %v1998 = vmul.f32 %v1997, 0.6931472
        %v1999 = vlog2.pop %v1814
        %v2000 = vmul.f32 %v1999, 0.6931472
        %v2001 = vlog2.pop %v1817
        %v2002 = vmul.f32 %v2001, 0.6931472
        %v2003 = vlog2.pop %v1820
        %v2004 = vmul.f32 %v2003, 0.6931472
        %v2005 = vlog2.pop %v1823
        %v2006 = vmul.f32 %v2005, 0.6931472
        %v2007 = vlog2.pop %v1826
        %v2008 = vmul.f32 %v2007, 0.6931472
        %v2009 = vlog2.pop %v1829
        %v2010 = vmul.f32 %v2009, 0.6931472
        %v2011 = vlog2.pop %v1832
        %v2012 = vmul.f32 %v2011, 0.6931472
        %v2013 = vlog2.pop %v1835
        %v2014 = vmul.f32 %v2013, 0.6931472
        %v2015 = vlog2.pop %v1838
        %v2016 = vmul.f32 %v2015, 0.6931472
        %v2017 = vlog2.pop %v1841
        %v2018 = vmul.f32 %v2017, 0.6931472
        %v2019 = vlog2.pop %v1844
        %v2020 = vmul.f32 %v2019, 0.6931472
        %v2021 = vlog2.pop %v1847
        %v2022 = vmul.f32 %v2021, 0.6931472
        %v2023 = vlog2.pop %v1850
        %v2024 = vmul.f32 %v2023, 0.6931472
        %v2025 = vlog2.pop %v1853
        %v2026 = vmul.f32 %v2025, 0.6931472
        %v2027 = vlog2.pop %v1856
        %v2028 = vmul.f32 %v2027, 0.6931472
        %v2029 = vlog2.pop %v1859
        %v2030 = vmul.f32 %v2029, 0.6931472
        %v2031 = vlog2.pop %v1862
        %v2032 = vmul.f32 %v2031, 0.6931472
        %v2033 = vlog2.pop %v1865
        %v2034 = vmul.f32 %v2033, 0.6931472
        %v2035 = vlog2.pop %v1868
        %v2036 = vmul.f32 %v2035, 0.6931472
        %v2037 = vlog2.pop %v1871
        %v2038 = vmul.f32 %v2037, 0.6931472
        %v2039 = vlog2.pop %v1874
        %v2040 = vmul.f32 %v2039, 0.6931472
        %v2041 = vlog2.pop %v1877
        %v2042 = vmul.f32 %v2041, 0.6931472
        %v2043 = vlog2.pop %v1880
        %v2044 = vmul.f32 %v2043, 0.6931472
        %v2045 = vlog2.pop %v1883
        %v2046 = vmul.f32 %v2045, 0.6931472
        %v2047 = vlog2.pop %v1886
        %v2048 = vmul.f32 %v2047, 0.6931472
        %v2049 = vlog2.pop %v1889
        %v2050 = vmul.f32 %v2049, 0.6931472
        %v2051 = vlog2.pop %v1892
        %v2052 = vmul.f32 %v2051, 0.6931472
        %v2053 = vlog2.pop %v1895
        %v2054 = vmul.f32 %v2053, 0.6931472
        %v2055 = vlog2.pop %v1898
        %v2056 = vmul.f32 %v2055, 0.6931472
        %v2057 = vlog2.pop %v1901
        %v2058 = vmul.f32 %v2057, 0.6931472
        %v2059 = vlog2.pop %v1904
        %v2060 = vmul.f32 %v2059, 0.6931472
        %v2061 = vlog2.pop %v1907
        %v2062 = vmul.f32 %v2061, 0.6931472
        %v2063 = vlog2.pop %v1910
        %v2064 = vmul.f32 %v2063, 0.6931472
        %v2065 = vlog2.pop %v1913
        %v2066 = vmul.f32 %v2065, 0.6931472
        %v2067 = vlog2.pop %v1916
        %v2068 = vmul.f32 %v2067, 0.6931472
        %v2069 = vlog2.pop %v1919
        %v2070 = vmul.f32 %v2069, 0.6931472
        %v2071 = vlog2.pop %v1922
        %v2072 = vmul.f32 %v2071, 0.6931472
        %v2073 = vlog2.pop %v1925
        %v2074 = vmul.f32 %v2073, 0.6931472
        %v2075 = vlog2.pop %v1928
        %v2076 = vmul.f32 %v2075, 0.6931472
        %v2077 = vlog2.pop %v1931
        %v2078 = vmul.f32 %v2077, 0.6931472
        %v2079 = vlog2.pop %v1934
        %v2080 = vmul.f32 %v2079, 0.6931472
        %v2081 = vlog2.pop %v1937
        %v2082 = vmul.f32 %v2081, 0.6931472
        %v2083 = vlog2.pop %v1940
        %v2084 = vmul.f32 %v2083, 0.6931472
        %v2085 = vlog2.pop %v1943
        %v2086 = vmul.f32 %v2085, 0.6931472
        %v2087 = vlog2.pop %v1946
        %v2088 = vmul.f32 %v2087, 0.6931472
        %v2089 = vlog2.pop %v1949
        %v2090 = vmul.f32 %v2089, 0.6931472
        %v2091 = vlog2.pop %v1952
        %v2092 = vmul.f32 %v2091, 0.6931472
        %v2093 = vlog2.pop %v1955
        %v2094 = vmul.f32 %v2093, 0.6931472
        %v2095 = vlog2.pop %v1958
        %v2096 = vmul.f32 %v2095, 0.6931472
        %v2097 = vlog2.pop %v1961
        %v2098 = vmul.f32 %v2097, 0.6931472
        %v2099 = vlog2.pop %v1964
        %v2100 = vmul.f32 %v2099, 0.6931472
        %v2101 = vlog2.pop %v1967
        %v2102 = vmul.f32 %v2101, 0.6931472
        %v2103 = vlog2.pop %v1970
        %v2104 = vmul.f32 %v2103, 0.6931472
        %v2105 = vlog2.pop %v1973
        %v2106 = vmul.f32 %v2105, 0.6931472
        %v2107 = vlog2.pop %v1976
        %v2108 = vmul.f32 %v2107, 0.6931472
        %v2109 = vlog2.pop %v1979
        %v2110 = vmul.f32 %v2109, 0.6931472
        %v2111 = vlog2.pop %v1982
        %v2112 = vmul.f32 %v2111, 0.6931472
        %v2113 = vlog2.pop %v1985
        %v2114 = vmul.f32 %v2113, 0.6931472
        %v2115 = vlog2.pop %v1988
        %v2116 = vmul.f32 %v2115, 0.6931472
        %v2117 = vadd.f32 %v1415, %v1990
        %v2118 = vadd.f32 %v1418, %v1992
        %v2119 = vadd.f32 %v1421, %v1994
        %v2120 = vadd.f32 %v1424, %v1996
        %v2121 = vadd.f32 %v1427, %v1998
        %v2122 = vadd.f32 %v1430, %v2000
        %v2123 = vadd.f32 %v1433, %v2002
        %v2124 = vadd.f32 %v1436, %v2004
        %v2125 = vadd.f32 %v1439, %v2006
        %v2126 = vadd.f32 %v1442, %v2008
        %v2127 = vadd.f32 %v1445, %v2010
        %v2128 = vadd.f32 %v1448, %v2012
        %v2129 = vadd.f32 %v1451, %v2014
        %v2130 = vadd.f32 %v1454, %v2016
        %v2131 = vadd.f32 %v1457, %v2018
        %v2132 = vadd.f32 %v1460, %v2020
        %v2133 = vadd.f32 %v1463, %v2022
        %v2134 = vadd.f32 %v1466, %v2024
        %v2135 = vadd.f32 %v1469, %v2026
        %v2136 = vadd.f32 %v1472, %v2028
        %v2137 = vadd.f32 %v1475, %v2030
        %v2138 = vadd.f32 %v1478, %v2032
        %v2139 = vadd.f32 %v1481, %v2034
        %v2140 = vadd.f32 %v1484, %v2036
        %v2141 = vadd.f32 %v1487, %v2038
        %v2142 = vadd.f32 %v1490, %v2040
        %v2143 = vadd.f32 %v1493, %v2042
        %v2144 = vadd.f32 %v1496, %v2044
        %v2145 = vadd.f32 %v1499, %v2046
        %v2146 = vadd.f32 %v1502, %v2048
        %v2147 = vadd.f32 %v1505, %v2050
        %v2148 = vadd.f32 %v1508, %v2052
        %v2149 = vadd.f32 %v1511, %v2054
        %v2150 = vadd.f32 %v1514, %v2056
        %v2151 = vadd.f32 %v1517, %v2058
        %v2152 = vadd.f32 %v1520, %v2060
        %v2153 = vadd.f32 %v1523, %v2062
        %v2154 = vadd.f32 %v1526, %v2064
        %v2155 = vadd.f32 %v1529, %v2066
        %v2156 = vadd.f32 %v1532, %v2068
        %v2157 = vadd.f32 %v1535, %v2070
        %v2158 = vadd.f32 %v1538, %v2072
        %v2159 = vadd.f32 %v1541, %v2074
        %v2160 = vadd.f32 %v1544, %v2076
        %v2161 = vadd.f32 %v1547, %v2078
        %v2162 = vadd.f32 %v1550, %v2080
        %v2163 = vadd.f32 %v1553, %v2082
        %v2164 = vadd.f32 %v1556, %v2084
        %v2165 = vadd.f32 %v1559, %v2086
        %v2166 = vadd.f32 %v1562, %v2088
        %v2167 = vadd.f32 %v1565, %v2090
        %v2168 = vadd.f32 %v1568, %v2092
        %v2169 = vadd.f32 %v1571, %v2094
        %v2170 = vadd.f32 %v1574, %v2096
        %v2171 = vadd.f32 %v1577, %v2098
        %v2172 = vadd.f32 %v1580, %v2100
        %v2173 = vadd.f32 %v1583, %v2102
        %v2174 = vadd.f32 %v1586, %v2104
        %v2175 = vadd.f32 %v1589, %v2106
        %v2176 = vadd.f32 %v1592, %v2108
        %v2177 = vadd.f32 %v1595, %v2110
        %v2178 = vadd.f32 %v1598, %v2112
        %v2179 = vadd.f32 %v1601, %v2114
        %v2180 = vadd.f32 %v1604, %v2116
        %v2181 = vadd.s32 %v524, 1
        %v2182 = vadd.s32 %v525, 1
        %v2183 = vadd.s32 %v526, 1
        %v2184 = vadd.s32 %v527, 1
        %v2185 = vadd.s32 %v528, 1
        %v2186 = vadd.s32 %v529, 1
        %v2187 = vadd.s32 %v530, 1
        %v2188 = vadd.s32 %v531, 1
        %v2189 = vlaneseq
        %v2190 = vshrl.u32 %v2189, 7
        %v2191 = vsub.s32 0, %v2190
        %v2192 = vrot.slane %v2181, %v2191
        %2194 = vbcast.lane.b32.xlu0 %v2192, 256
        %v2195 = vpop.permute.xlu0 %2194
        %v2196 = vlaneseq
        %v2197 = vshrl.u32 %v2196, 7
        %v2198 = vsub.s32 1, %v2197
        %v2199 = vrot.slane %v2181, %v2198
        %2201 = vbcast.lane.b32.xlu0 %v2199, 256
        %v2202 = vpop.permute.xlu0 %2201
        %v2203 = vlaneseq
        %v2204 = vshrl.u32 %v2203, 7
        %v2205 = vsub.s32 2, %v2204
        %v2206 = vrot.slane %v2181, %v2205
        %2208 = vbcast.lane.b32.xlu0 %v2206, 256
        %v2209 = vpop.permute.xlu0 %2208
        %v2210 = vlaneseq
        %v2211 = vshrl.u32 %v2210, 7
        %v2212 = vsub.s32 3, %v2211
        %v2213 = vrot.slane %v2181, %v2212
        %2215 = vbcast.lane.b32.xlu0 %v2213, 256
        %v2216 = vpop.permute.xlu0 %2215
        %v2217 = vlaneseq
        %v2218 = vshrl.u32 %v2217, 7
        %v2219 = vsub.s32 4, %v2218
        %v2220 = vrot.slane %v2181, %v2219
        %2222 = vbcast.lane.b32.xlu0 %v2220, 256
        %v2223 = vpop.permute.xlu0 %2222
        %v2224 = vlaneseq
        %v2225 = vshrl.u32 %v2224, 7
        %v2226 = vsub.s32 5, %v2225
        %v2227 = vrot.slane %v2181, %v2226
        %2229 = vbcast.lane.b32.xlu0 %v2227, 256
        %v2230 = vpop.permute.xlu0 %2229
        %v2231 = vlaneseq
        %v2232 = vshrl.u32 %v2231, 7
        %v2233 = vsub.s32 6, %v2232
        %v2234 = vrot.slane %v2181, %v2233
        %2236 = vbcast.lane.b32.xlu0 %v2234, 256
        %v2237 = vpop.permute.xlu0 %2236
        %v2238 = vlaneseq
        %v2239 = vshrl.u32 %v2238, 7
        %v2240 = vsub.s32 7, %v2239
        %v2241 = vrot.slane %v2181, %v2240
        %2243 = vbcast.lane.b32.xlu0 %v2241, 256
        %v2244 = vpop.permute.xlu0 %2243
        %v2245 = vlaneseq
        %v2246 = vshrl.u32 %v2245, 7
        %v2247 = vsub.s32 0, %v2246
        %v2248 = vrot.slane %v2182, %v2247
        %2250 = vbcast.lane.b32.xlu0 %v2248, 256
        %v2251 = vpop.permute.xlu0 %2250
        %v2252 = vlaneseq
        %v2253 = vshrl.u32 %v2252, 7
        %v2254 = vsub.s32 1, %v2253
        %v2255 = vrot.slane %v2182, %v2254
        %2257 = vbcast.lane.b32.xlu0 %v2255, 256
        %v2258 = vpop.permute.xlu0 %2257
        %v2259 = vlaneseq
        %v2260 = vshrl.u32 %v2259, 7
        %v2261 = vsub.s32 2, %v2260
        %v2262 = vrot.slane %v2182, %v2261
        %2264 = vbcast.lane.b32.xlu0 %v2262, 256
        %v2265 = vpop.permute.xlu0 %2264
        %v2266 = vlaneseq
        %v2267 = vshrl.u32 %v2266, 7
        %v2268 = vsub.s32 3, %v2267
        %v2269 = vrot.slane %v2182, %v2268
        %2271 = vbcast.lane.b32.xlu0 %v2269, 256
        %v2272 = vpop.permute.xlu0 %2271
        %v2273 = vlaneseq
        %v2274 = vshrl.u32 %v2273, 7
        %v2275 = vsub.s32 4, %v2274
        %v2276 = vrot.slane %v2182, %v2275
        %2278 = vbcast.lane.b32.xlu0 %v2276, 256
        %v2279 = vpop.permute.xlu0 %2278
        %v2280 = vlaneseq
        %v2281 = vshrl.u32 %v2280, 7
        %v2282 = vsub.s32 5, %v2281
        %v2283 = vrot.slane %v2182, %v2282
        %2285 = vbcast.lane.b32.xlu0 %v2283, 256
        %v2286 = vpop.permute.xlu0 %2285
        %v2287 = vlaneseq
        %v2288 = vshrl.u32 %v2287, 7
        %v2289 = vsub.s32 6, %v2288
        %v2290 = vrot.slane %v2182, %v2289
        %2292 = vbcast.lane.b32.xlu0 %v2290, 256
        %v2293 = vpop.permute.xlu0 %2292
        %v2294 = vlaneseq
        %v2295 = vshrl.u32 %v2294, 7
        %v2296 = vsub.s32 7, %v2295
        %v2297 = vrot.slane %v2182, %v2296
        %2299 = vbcast.lane.b32.xlu0 %v2297, 256
        %v2300 = vpop.permute.xlu0 %2299
        %v2301 = vlaneseq
        %v2302 = vshrl.u32 %v2301, 7
        %v2303 = vsub.s32 0, %v2302
        %v2304 = vrot.slane %v2183, %v2303
        %2306 = vbcast.lane.b32.xlu0 %v2304, 256
        %v2307 = vpop.permute.xlu0 %2306
        %v2308 = vlaneseq
        %v2309 = vshrl.u32 %v2308, 7
        %v2310 = vsub.s32 1, %v2309
        %v2311 = vrot.slane %v2183, %v2310
        %2313 = vbcast.lane.b32.xlu0 %v2311, 256
        %v2314 = vpop.permute.xlu0 %2313
        %v2315 = vlaneseq
        %v2316 = vshrl.u32 %v2315, 7
        %v2317 = vsub.s32 2, %v2316
        %v2318 = vrot.slane %v2183, %v2317
        %2320 = vbcast.lane.b32.xlu0 %v2318, 256
        %v2321 = vpop.permute.xlu0 %2320
        %v2322 = vlaneseq
        %v2323 = vshrl.u32 %v2322, 7
        %v2324 = vsub.s32 3, %v2323
        %v2325 = vrot.slane %v2183, %v2324
        %2327 = vbcast.lane.b32.xlu0 %v2325, 256
        %v2328 = vpop.permute.xlu0 %2327
        %v2329 = vlaneseq
        %v2330 = vshrl.u32 %v2329, 7
        %v2331 = vsub.s32 4, %v2330
        %v2332 = vrot.slane %v2183, %v2331
        %2334 = vbcast.lane.b32.xlu0 %v2332, 256
        %v2335 = vpop.permute.xlu0 %2334
        %v2336 = vlaneseq
        %v2337 = vshrl.u32 %v2336, 7
        %v2338 = vsub.s32 5, %v2337
        %v2339 = vrot.slane %v2183, %v2338
        %2341 = vbcast.lane.b32.xlu0 %v2339, 256
        %v2342 = vpop.permute.xlu0 %2341
        %v2343 = vlaneseq
        %v2344 = vshrl.u32 %v2343, 7
        %v2345 = vsub.s32 6, %v2344
        %v2346 = vrot.slane %v2183, %v2345
        %2348 = vbcast.lane.b32.xlu0 %v2346, 256
        %v2349 = vpop.permute.xlu0 %2348
        %v2350 = vlaneseq
        %v2351 = vshrl.u32 %v2350, 7
        %v2352 = vsub.s32 7, %v2351
        %v2353 = vrot.slane %v2183, %v2352
        %2355 = vbcast.lane.b32.xlu0 %v2353, 256
        %v2356 = vpop.permute.xlu0 %2355
        %v2357 = vlaneseq
        %v2358 = vshrl.u32 %v2357, 7
        %v2359 = vsub.s32 0, %v2358
        %v2360 = vrot.slane %v2184, %v2359
        %2362 = vbcast.lane.b32.xlu0 %v2360, 256
        %v2363 = vpop.permute.xlu0 %2362
        %v2364 = vlaneseq
        %v2365 = vshrl.u32 %v2364, 7
        %v2366 = vsub.s32 1, %v2365
        %v2367 = vrot.slane %v2184, %v2366
        %2369 = vbcast.lane.b32.xlu0 %v2367, 256
        %v2370 = vpop.permute.xlu0 %2369
        %v2371 = vlaneseq
        %v2372 = vshrl.u32 %v2371, 7
        %v2373 = vsub.s32 2, %v2372
        %v2374 = vrot.slane %v2184, %v2373
        %2376 = vbcast.lane.b32.xlu0 %v2374, 256
        %v2377 = vpop.permute.xlu0 %2376
        %v2378 = vlaneseq
        %v2379 = vshrl.u32 %v2378, 7
        %v2380 = vsub.s32 3, %v2379
        %v2381 = vrot.slane %v2184, %v2380
        %2383 = vbcast.lane.b32.xlu0 %v2381, 256
        %v2384 = vpop.permute.xlu0 %2383
        %v2385 = vlaneseq
        %v2386 = vshrl.u32 %v2385, 7
        %v2387 = vsub.s32 4, %v2386
        %v2388 = vrot.slane %v2184, %v2387
        %2390 = vbcast.lane.b32.xlu0 %v2388, 256
        %v2391 = vpop.permute.xlu0 %2390
        %v2392 = vlaneseq
        %v2393 = vshrl.u32 %v2392, 7
        %v2394 = vsub.s32 5, %v2393
        %v2395 = vrot.slane %v2184, %v2394
        %2397 = vbcast.lane.b32.xlu0 %v2395, 256
        %v2398 = vpop.permute.xlu0 %2397
        %v2399 = vlaneseq
        %v2400 = vshrl.u32 %v2399, 7
        %v2401 = vsub.s32 6, %v2400
        %v2402 = vrot.slane %v2184, %v2401
        %2404 = vbcast.lane.b32.xlu0 %v2402, 256
        %v2405 = vpop.permute.xlu0 %2404
        %v2406 = vlaneseq
        %v2407 = vshrl.u32 %v2406, 7
        %v2408 = vsub.s32 7, %v2407
        %v2409 = vrot.slane %v2184, %v2408
        %2411 = vbcast.lane.b32.xlu0 %v2409, 256
        %v2412 = vpop.permute.xlu0 %2411
        %v2413 = vlaneseq
        %v2414 = vshrl.u32 %v2413, 7
        %v2415 = vsub.s32 0, %v2414
        %v2416 = vrot.slane %v2185, %v2415
        %2418 = vbcast.lane.b32.xlu0 %v2416, 256
        %v2419 = vpop.permute.xlu0 %2418
        %v2420 = vlaneseq
        %v2421 = vshrl.u32 %v2420, 7
        %v2422 = vsub.s32 1, %v2421
        %v2423 = vrot.slane %v2185, %v2422
        %2425 = vbcast.lane.b32.xlu0 %v2423, 256
        %v2426 = vpop.permute.xlu0 %2425
        %v2427 = vlaneseq
        %v2428 = vshrl.u32 %v2427, 7
        %v2429 = vsub.s32 2, %v2428
        %v2430 = vrot.slane %v2185, %v2429
        %2432 = vbcast.lane.b32.xlu0 %v2430, 256
        %v2433 = vpop.permute.xlu0 %2432
        %v2434 = vlaneseq
        %v2435 = vshrl.u32 %v2434, 7
        %v2436 = vsub.s32 3, %v2435
        %v2437 = vrot.slane %v2185, %v2436
        %2439 = vbcast.lane.b32.xlu0 %v2437, 256
        %v2440 = vpop.permute.xlu0 %2439
        %v2441 = vlaneseq
        %v2442 = vshrl.u32 %v2441, 7
        %v2443 = vsub.s32 4, %v2442
        %v2444 = vrot.slane %v2185, %v2443
        %2446 = vbcast.lane.b32.xlu0 %v2444, 256
        %v2447 = vpop.permute.xlu0 %2446
        %v2448 = vlaneseq
        %v2449 = vshrl.u32 %v2448, 7
        %v2450 = vsub.s32 5, %v2449
        %v2451 = vrot.slane %v2185, %v2450
        %2453 = vbcast.lane.b32.xlu0 %v2451, 256
        %v2454 = vpop.permute.xlu0 %2453
        %v2455 = vlaneseq
        %v2456 = vshrl.u32 %v2455, 7
        %v2457 = vsub.s32 6, %v2456
        %v2458 = vrot.slane %v2185, %v2457
        %2460 = vbcast.lane.b32.xlu0 %v2458, 256
        %v2461 = vpop.permute.xlu0 %2460
        %v2462 = vlaneseq
        %v2463 = vshrl.u32 %v2462, 7
        %v2464 = vsub.s32 7, %v2463
        %v2465 = vrot.slane %v2185, %v2464
        %2467 = vbcast.lane.b32.xlu0 %v2465, 256
        %v2468 = vpop.permute.xlu0 %2467
        %v2469 = vlaneseq
        %v2470 = vshrl.u32 %v2469, 7
        %v2471 = vsub.s32 0, %v2470
        %v2472 = vrot.slane %v2186, %v2471
        %2474 = vbcast.lane.b32.xlu0 %v2472, 256
        %v2475 = vpop.permute.xlu0 %2474
        %v2476 = vlaneseq
        %v2477 = vshrl.u32 %v2476, 7
        %v2478 = vsub.s32 1, %v2477
        %v2479 = vrot.slane %v2186, %v2478
        %2481 = vbcast.lane.b32.xlu0 %v2479, 256
        %v2482 = vpop.permute.xlu0 %2481
        %v2483 = vlaneseq
        %v2484 = vshrl.u32 %v2483, 7
        %v2485 = vsub.s32 2, %v2484
        %v2486 = vrot.slane %v2186, %v2485
        %2488 = vbcast.lane.b32.xlu0 %v2486, 256
        %v2489 = vpop.permute.xlu0 %2488
        %v2490 = vlaneseq
        %v2491 = vshrl.u32 %v2490, 7
        %v2492 = vsub.s32 3, %v2491
        %v2493 = vrot.slane %v2186, %v2492
        %2495 = vbcast.lane.b32.xlu0 %v2493, 256
        %v2496 = vpop.permute.xlu0 %2495
        %v2497 = vlaneseq
        %v2498 = vshrl.u32 %v2497, 7
        %v2499 = vsub.s32 4, %v2498
        %v2500 = vrot.slane %v2186, %v2499
        %2502 = vbcast.lane.b32.xlu0 %v2500, 256
        %v2503 = vpop.permute.xlu0 %2502
        %v2504 = vlaneseq
        %v2505 = vshrl.u32 %v2504, 7
        %v2506 = vsub.s32 5, %v2505
        %v2507 = vrot.slane %v2186, %v2506
        %2509 = vbcast.lane.b32.xlu0 %v2507, 256
        %v2510 = vpop.permute.xlu0 %2509
        %v2511 = vlaneseq
        %v2512 = vshrl.u32 %v2511, 7
        %v2513 = vsub.s32 6, %v2512
        %v2514 = vrot.slane %v2186, %v2513
        %2516 = vbcast.lane.b32.xlu0 %v2514, 256
        %v2517 = vpop.permute.xlu0 %2516
        %v2518 = vlaneseq
        %v2519 = vshrl.u32 %v2518, 7
        %v2520 = vsub.s32 7, %v2519
        %v2521 = vrot.slane %v2186, %v2520
        %2523 = vbcast.lane.b32.xlu0 %v2521, 256
        %v2524 = vpop.permute.xlu0 %2523
        %v2525 = vlaneseq
        %v2526 = vshrl.u32 %v2525, 7
        %v2527 = vsub.s32 0, %v2526
        %v2528 = vrot.slane %v2187, %v2527
        %2530 = vbcast.lane.b32.xlu0 %v2528, 256
        %v2531 = vpop.permute.xlu0 %2530
        %v2532 = vlaneseq
        %v2533 = vshrl.u32 %v2532, 7
        %v2534 = vsub.s32 1, %v2533
        %v2535 = vrot.slane %v2187, %v2534
        %2537 = vbcast.lane.b32.xlu0 %v2535, 256
        %v2538 = vpop.permute.xlu0 %2537
        %v2539 = vlaneseq
        %v2540 = vshrl.u32 %v2539, 7
        %v2541 = vsub.s32 2, %v2540
        %v2542 = vrot.slane %v2187, %v2541
        %2544 = vbcast.lane.b32.xlu0 %v2542, 256
        %v2545 = vpop.permute.xlu0 %2544
        %v2546 = vlaneseq
        %v2547 = vshrl.u32 %v2546, 7
        %v2548 = vsub.s32 3, %v2547
        %v2549 = vrot.slane %v2187, %v2548
        %2551 = vbcast.lane.b32.xlu0 %v2549, 256
        %v2552 = vpop.permute.xlu0 %2551
        %v2553 = vlaneseq
        %v2554 = vshrl.u32 %v2553, 7
        %v2555 = vsub.s32 4, %v2554
        %v2556 = vrot.slane %v2187, %v2555
        %2558 = vbcast.lane.b32.xlu0 %v2556, 256
        %v2559 = vpop.permute.xlu0 %2558
        %v2560 = vlaneseq
        %v2561 = vshrl.u32 %v2560, 7
        %v2562 = vsub.s32 5, %v2561
        %v2563 = vrot.slane %v2187, %v2562
        %2565 = vbcast.lane.b32.xlu0 %v2563, 256
        %v2566 = vpop.permute.xlu0 %2565
        %v2567 = vlaneseq
        %v2568 = vshrl.u32 %v2567, 7
        %v2569 = vsub.s32 6, %v2568
        %v2570 = vrot.slane %v2187, %v2569
        %2572 = vbcast.lane.b32.xlu0 %v2570, 256
        %v2573 = vpop.permute.xlu0 %2572
        %v2574 = vlaneseq
        %v2575 = vshrl.u32 %v2574, 7
        %v2576 = vsub.s32 7, %v2575
        %v2577 = vrot.slane %v2187, %v2576
        %2579 = vbcast.lane.b32.xlu0 %v2577, 256
        %v2580 = vpop.permute.xlu0 %2579
        %v2581 = vlaneseq
        %v2582 = vshrl.u32 %v2581, 7
        %v2583 = vsub.s32 0, %v2582
        %v2584 = vrot.slane %v2188, %v2583
        %2586 = vbcast.lane.b32.xlu0 %v2584, 256
        %v2587 = vpop.permute.xlu0 %2586
        %v2588 = vlaneseq
        %v2589 = vshrl.u32 %v2588, 7
        %v2590 = vsub.s32 1, %v2589
        %v2591 = vrot.slane %v2188, %v2590
        %2593 = vbcast.lane.b32.xlu0 %v2591, 256
        %v2594 = vpop.permute.xlu0 %2593
        %v2595 = vlaneseq
        %v2596 = vshrl.u32 %v2595, 7
        %v2597 = vsub.s32 2, %v2596
        %v2598 = vrot.slane %v2188, %v2597
        %2600 = vbcast.lane.b32.xlu0 %v2598, 256
        %v2601 = vpop.permute.xlu0 %2600
        %v2602 = vlaneseq
        %v2603 = vshrl.u32 %v2602, 7
        %v2604 = vsub.s32 3, %v2603
        %v2605 = vrot.slane %v2188, %v2604
        %2607 = vbcast.lane.b32.xlu0 %v2605, 256
        %v2608 = vpop.permute.xlu0 %2607
        %v2609 = vlaneseq
        %v2610 = vshrl.u32 %v2609, 7
        %v2611 = vsub.s32 4, %v2610
        %v2612 = vrot.slane %v2188, %v2611
        %2614 = vbcast.lane.b32.xlu0 %v2612, 256
        %v2615 = vpop.permute.xlu0 %2614
        %v2616 = vlaneseq
        %v2617 = vshrl.u32 %v2616, 7
        %v2618 = vsub.s32 5, %v2617
        %v2619 = vrot.slane %v2188, %v2618
        %2621 = vbcast.lane.b32.xlu0 %v2619, 256
        %v2622 = vpop.permute.xlu0 %2621
        %v2623 = vlaneseq
        %v2624 = vshrl.u32 %v2623, 7
        %v2625 = vsub.s32 6, %v2624
        %v2626 = vrot.slane %v2188, %v2625
        %2628 = vbcast.lane.b32.xlu0 %v2626, 256
        %v2629 = vpop.permute.xlu0 %2628
        %v2630 = vlaneseq
        %v2631 = vshrl.u32 %v2630, 7
        %v2632 = vsub.s32 7, %v2631
        %v2633 = vrot.slane %v2188, %v2632
        %2635 = vbcast.lane.b32.xlu0 %v2633, 256
        %v2636 = vpop.permute.xlu0 %2635
        %vm2637 = vcmp.eq.s32.totalorder %v605, %v2195
        %vm2638 = vcmp.eq.s32.totalorder %v605, %v2202
        %vm2639 = vcmp.eq.s32.totalorder %v605, %v2209
        %vm2640 = vcmp.eq.s32.totalorder %v605, %v2216
        %vm2641 = vcmp.eq.s32.totalorder %v605, %v2223
        %vm2642 = vcmp.eq.s32.totalorder %v605, %v2230
        %vm2643 = vcmp.eq.s32.totalorder %v605, %v2237
        %vm2644 = vcmp.eq.s32.totalorder %v605, %v2244
        %vm2645 = vcmp.eq.s32.totalorder %v605, %v2251
        %vm2646 = vcmp.eq.s32.totalorder %v605, %v2258
        %vm2647 = vcmp.eq.s32.totalorder %v605, %v2265
        %vm2648 = vcmp.eq.s32.totalorder %v605, %v2272
        %vm2649 = vcmp.eq.s32.totalorder %v605, %v2279
        %vm2650 = vcmp.eq.s32.totalorder %v605, %v2286
        %vm2651 = vcmp.eq.s32.totalorder %v605, %v2293
        %vm2652 = vcmp.eq.s32.totalorder %v605, %v2300
        %vm2653 = vcmp.eq.s32.totalorder %v605, %v2307
        %vm2654 = vcmp.eq.s32.totalorder %v605, %v2314
        %vm2655 = vcmp.eq.s32.totalorder %v605, %v2321
        %vm2656 = vcmp.eq.s32.totalorder %v605, %v2328
        %vm2657 = vcmp.eq.s32.totalorder %v605, %v2335
        %vm2658 = vcmp.eq.s32.totalorder %v605, %v2342
        %vm2659 = vcmp.eq.s32.totalorder %v605, %v2349
        %vm2660 = vcmp.eq.s32.totalorder %v605, %v2356
        %vm2661 = vcmp.eq.s32.totalorder %v605, %v2363
        %vm2662 = vcmp.eq.s32.totalorder %v605, %v2370
        %vm2663 = vcmp.eq.s32.totalorder %v605, %v2377
        %vm2664 = vcmp.eq.s32.totalorder %v605, %v2384
        %vm2665 = vcmp.eq.s32.totalorder %v605, %v2391
        %vm2666 = vcmp.eq.s32.totalorder %v605, %v2398
        %vm2667 = vcmp.eq.s32.totalorder %v605, %v2405
        %vm2668 = vcmp.eq.s32.totalorder %v605, %v2412
        %vm2669 = vcmp.eq.s32.totalorder %v605, %v2419
        %vm2670 = vcmp.eq.s32.totalorder %v605, %v2426
        %vm2671 = vcmp.eq.s32.totalorder %v605, %v2433
        %vm2672 = vcmp.eq.s32.totalorder %v605, %v2440
        %vm2673 = vcmp.eq.s32.totalorder %v605, %v2447
        %vm2674 = vcmp.eq.s32.totalorder %v605, %v2454
        %vm2675 = vcmp.eq.s32.totalorder %v605, %v2461
        %vm2676 = vcmp.eq.s32.totalorder %v605, %v2468
        %vm2677 = vcmp.eq.s32.totalorder %v605, %v2475
        %vm2678 = vcmp.eq.s32.totalorder %v605, %v2482
        %vm2679 = vcmp.eq.s32.totalorder %v605, %v2489
        %vm2680 = vcmp.eq.s32.totalorder %v605, %v2496
        %vm2681 = vcmp.eq.s32.totalorder %v605, %v2503
        %vm2682 = vcmp.eq.s32.totalorder %v605, %v2510
        %vm2683 = vcmp.eq.s32.totalorder %v605, %v2517
        %vm2684 = vcmp.eq.s32.totalorder %v605, %v2524
        %vm2685 = vcmp.eq.s32.totalorder %v605, %v2531
        %vm2686 = vcmp.eq.s32.totalorder %v605, %v2538
        %vm2687 = vcmp.eq.s32.totalorder %v605, %v2545
        %vm2688 = vcmp.eq.s32.totalorder %v605, %v2552
        %vm2689 = vcmp.eq.s32.totalorder %v605, %v2559
        %vm2690 = vcmp.eq.s32.totalorder %v605, %v2566
        %vm2691 = vcmp.eq.s32.totalorder %v605, %v2573
        %vm2692 = vcmp.eq.s32.totalorder %v605, %v2580
        %vm2693 = vcmp.eq.s32.totalorder %v605, %v2587
        %vm2694 = vcmp.eq.s32.totalorder %v605, %v2594
        %vm2695 = vcmp.eq.s32.totalorder %v605, %v2601
        %vm2696 = vcmp.eq.s32.totalorder %v605, %v2608
        %vm2697 = vcmp.eq.s32.totalorder %v605, %v2615
        %vm2698 = vcmp.eq.s32.totalorder %v605, %v2622
        %vm2699 = vcmp.eq.s32.totalorder %v605, %v2629
        %vm2700 = vcmp.eq.s32.totalorder %v605, %v2636
        %v2701 = vsel %vm2637, %v540, 0.0
        %v2702 = vsel %vm2638, %v541, 0.0
        %v2703 = vsel %vm2639, %v542, 0.0
        %v2704 = vsel %vm2640, %v543, 0.0
        %v2705 = vsel %vm2641, %v544, 0.0
        %v2706 = vsel %vm2642, %v545, 0.0
        %v2707 = vsel %vm2643, %v546, 0.0
        %v2708 = vsel %vm2644, %v547, 0.0
        %v2709 = vsel %vm2645, %v548, 0.0
        %v2710 = vsel %vm2646, %v549, 0.0
        %v2711 = vsel %vm2647, %v550, 0.0
        %v2712 = vsel %vm2648, %v551, 0.0
        %v2713 = vsel %vm2649, %v552, 0.0
        %v2714 = vsel %vm2650, %v553, 0.0
        %v2715 = vsel %vm2651, %v554, 0.0
        %v2716 = vsel %vm2652, %v555, 0.0
        %v2717 = vsel %vm2653, %v556, 0.0
        %v2718 = vsel %vm2654, %v557, 0.0
        %v2719 = vsel %vm2655, %v558, 0.0
        %v2720 = vsel %vm2656, %v559, 0.0
        %v2721 = vsel %vm2657, %v560, 0.0
        %v2722 = vsel %vm2658, %v561, 0.0
        %v2723 = vsel %vm2659, %v562, 0.0
        %v2724 = vsel %vm2660, %v563, 0.0
        %v2725 = vsel %vm2661, %v564, 0.0
        %v2726 = vsel %vm2662, %v565, 0.0
        %v2727 = vsel %vm2663, %v566, 0.0
        %v2728 = vsel %vm2664, %v567, 0.0
        %v2729 = vsel %vm2665, %v568, 0.0
        %v2730 = vsel %vm2666, %v569, 0.0
        %v2731 = vsel %vm2667, %v570, 0.0
        %v2732 = vsel %vm2668, %v571, 0.0
        %v2733 = vsel %vm2669, %v572, 0.0
        %v2734 = vsel %vm2670, %v573, 0.0
        %v2735 = vsel %vm2671, %v574, 0.0
        %v2736 = vsel %vm2672, %v575, 0.0
        %v2737 = vsel %vm2673, %v576, 0.0
        %v2738 = vsel %vm2674, %v577, 0.0
        %v2739 = vsel %vm2675, %v578, 0.0
        %v2740 = vsel %vm2676, %v579, 0.0
        %v2741 = vsel %vm2677, %v580, 0.0
        %v2742 = vsel %vm2678, %v581, 0.0
        %v2743 = vsel %vm2679, %v582, 0.0
        %v2744 = vsel %vm2680, %v583, 0.0
        %v2745 = vsel %vm2681, %v584, 0.0
        %v2746 = vsel %vm2682, %v585, 0.0
        %v2747 = vsel %vm2683, %v586, 0.0
        %v2748 = vsel %vm2684, %v587, 0.0
        %v2749 = vsel %vm2685, %v588, 0.0
        %v2750 = vsel %vm2686, %v589, 0.0
        %v2751 = vsel %vm2687, %v590, 0.0
        %v2752 = vsel %vm2688, %v591, 0.0
        %v2753 = vsel %vm2689, %v592, 0.0
        %v2754 = vsel %vm2690, %v593, 0.0
        %v2755 = vsel %vm2691, %v594, 0.0
        %v2756 = vsel %vm2692, %v595, 0.0
        %v2757 = vsel %vm2693, %v596, 0.0
        %v2758 = vsel %vm2694, %v597, 0.0
        %v2759 = vsel %vm2695, %v598, 0.0
        %v2760 = vsel %vm2696, %v599, 0.0
        %v2761 = vsel %vm2697, %v600, 0.0
        %v2762 = vsel %vm2698, %v601, 0.0
        %v2763 = vsel %vm2699, %v602, 0.0
        %v2764 = vsel %vm2700, %v603, 0.0
        %v2765 = vsel %vm1412, %v2701, 0.0
        %2766 = vadd.xlane.f32.xlu0 %v2765
        %v2767 = vpop.xlane.xlu0 %2766
        %v2768 = vsel %vm1412, %v2702, 0.0
        %2769 = vadd.xlane.f32.xlu0 %v2768
        %v2770 = vpop.xlane.xlu0 %2769
        %v2771 = vsel %vm1412, %v2703, 0.0
        %2772 = vadd.xlane.f32.xlu0 %v2771
        %v2773 = vpop.xlane.xlu0 %2772
        %v2774 = vsel %vm1412, %v2704, 0.0
        %2775 = vadd.xlane.f32.xlu0 %v2774
        %v2776 = vpop.xlane.xlu0 %2775
        %v2777 = vsel %vm1412, %v2705, 0.0
        %2778 = vadd.xlane.f32.xlu0 %v2777
        %v2779 = vpop.xlane.xlu0 %2778
        %v2780 = vsel %vm1412, %v2706, 0.0
        %2781 = vadd.xlane.f32.xlu0 %v2780
        %v2782 = vpop.xlane.xlu0 %2781
        %v2783 = vsel %vm1412, %v2707, 0.0
        %2784 = vadd.xlane.f32.xlu0 %v2783
        %v2785 = vpop.xlane.xlu0 %2784
        %v2786 = vsel %vm1412, %v2708, 0.0
        %2787 = vadd.xlane.f32.xlu0 %v2786
        %v2788 = vpop.xlane.xlu0 %2787
        %v2789 = vsel %vm1412, %v2709, 0.0
        %2790 = vadd.xlane.f32.xlu0 %v2789
        %v2791 = vpop.xlane.xlu0 %2790
        %v2792 = vsel %vm1412, %v2710, 0.0
        %2793 = vadd.xlane.f32.xlu0 %v2792
        %v2794 = vpop.xlane.xlu0 %2793
        %v2795 = vsel %vm1412, %v2711, 0.0
        %2796 = vadd.xlane.f32.xlu0 %v2795
        %v2797 = vpop.xlane.xlu0 %2796
        %v2798 = vsel %vm1412, %v2712, 0.0
        %2799 = vadd.xlane.f32.xlu0 %v2798
        %v2800 = vpop.xlane.xlu0 %2799
        %v2801 = vsel %vm1412, %v2713, 0.0
        %2802 = vadd.xlane.f32.xlu0 %v2801
        %v2803 = vpop.xlane.xlu0 %2802
        %v2804 = vsel %vm1412, %v2714, 0.0
        %2805 = vadd.xlane.f32.xlu0 %v2804
        %v2806 = vpop.xlane.xlu0 %2805
        %v2807 = vsel %vm1412, %v2715, 0.0
        %2808 = vadd.xlane.f32.xlu0 %v2807
        %v2809 = vpop.xlane.xlu0 %2808
        %v2810 = vsel %vm1412, %v2716, 0.0
        %2811 = vadd.xlane.f32.xlu0 %v2810
        %v2812 = vpop.xlane.xlu0 %2811
        %v2813 = vsel %vm1412, %v2717, 0.0
        %2814 = vadd.xlane.f32.xlu0 %v2813
        %v2815 = vpop.xlane.xlu0 %2814
        %v2816 = vsel %vm1412, %v2718, 0.0
        %2817 = vadd.xlane.f32.xlu0 %v2816
        %v2818 = vpop.xlane.xlu0 %2817
        %v2819 = vsel %vm1412, %v2719, 0.0
        %2820 = vadd.xlane.f32.xlu0 %v2819
        %v2821 = vpop.xlane.xlu0 %2820
        %v2822 = vsel %vm1412, %v2720, 0.0
        %2823 = vadd.xlane.f32.xlu0 %v2822
        %v2824 = vpop.xlane.xlu0 %2823
        %v2825 = vsel %vm1412, %v2721, 0.0
        %2826 = vadd.xlane.f32.xlu0 %v2825
        %v2827 = vpop.xlane.xlu0 %2826
        %v2828 = vsel %vm1412, %v2722, 0.0
        %2829 = vadd.xlane.f32.xlu0 %v2828
        %v2830 = vpop.xlane.xlu0 %2829
        %v2831 = vsel %vm1412, %v2723, 0.0
        %2832 = vadd.xlane.f32.xlu0 %v2831
        %v2833 = vpop.xlane.xlu0 %2832
        %v2834 = vsel %vm1412, %v2724, 0.0
        %2835 = vadd.xlane.f32.xlu0 %v2834
        %v2836 = vpop.xlane.xlu0 %2835
        %v2837 = vsel %vm1412, %v2725, 0.0
        %2838 = vadd.xlane.f32.xlu0 %v2837
        %v2839 = vpop.xlane.xlu0 %2838
        %v2840 = vsel %vm1412, %v2726, 0.0
        %2841 = vadd.xlane.f32.xlu0 %v2840
        %v2842 = vpop.xlane.xlu0 %2841
        %v2843 = vsel %vm1412, %v2727, 0.0
        %2844 = vadd.xlane.f32.xlu0 %v2843
        %v2845 = vpop.xlane.xlu0 %2844
        %v2846 = vsel %vm1412, %v2728, 0.0
        %2847 = vadd.xlane.f32.xlu0 %v2846
        %v2848 = vpop.xlane.xlu0 %2847
        %v2849 = vsel %vm1412, %v2729, 0.0
        %2850 = vadd.xlane.f32.xlu0 %v2849
        %v2851 = vpop.xlane.xlu0 %2850
        %v2852 = vsel %vm1412, %v2730, 0.0
        %2853 = vadd.xlane.f32.xlu0 %v2852
        %v2854 = vpop.xlane.xlu0 %2853
        %v2855 = vsel %vm1412, %v2731, 0.0
        %2856 = vadd.xlane.f32.xlu0 %v2855
        %v2857 = vpop.xlane.xlu0 %2856
        %v2858 = vsel %vm1412, %v2732, 0.0
        %2859 = vadd.xlane.f32.xlu0 %v2858
        %v2860 = vpop.xlane.xlu0 %2859
        %v2861 = vsel %vm1412, %v2733, 0.0
        %2862 = vadd.xlane.f32.xlu0 %v2861
        %v2863 = vpop.xlane.xlu0 %2862
        %v2864 = vsel %vm1412, %v2734, 0.0
        %2865 = vadd.xlane.f32.xlu0 %v2864
        %v2866 = vpop.xlane.xlu0 %2865
        %v2867 = vsel %vm1412, %v2735, 0.0
        %2868 = vadd.xlane.f32.xlu0 %v2867
        %v2869 = vpop.xlane.xlu0 %2868
        %v2870 = vsel %vm1412, %v2736, 0.0
        %2871 = vadd.xlane.f32.xlu0 %v2870
        %v2872 = vpop.xlane.xlu0 %2871
        %v2873 = vsel %vm1412, %v2737, 0.0
        %2874 = vadd.xlane.f32.xlu0 %v2873
        %v2875 = vpop.xlane.xlu0 %2874
        %v2876 = vsel %vm1412, %v2738, 0.0
        %2877 = vadd.xlane.f32.xlu0 %v2876
        %v2878 = vpop.xlane.xlu0 %2877
        %v2879 = vsel %vm1412, %v2739, 0.0
        %2880 = vadd.xlane.f32.xlu0 %v2879
        %v2881 = vpop.xlane.xlu0 %2880
        %v2882 = vsel %vm1412, %v2740, 0.0
        %2883 = vadd.xlane.f32.xlu0 %v2882
        %v2884 = vpop.xlane.xlu0 %2883
        %v2885 = vsel %vm1412, %v2741, 0.0
        %2886 = vadd.xlane.f32.xlu0 %v2885
        %v2887 = vpop.xlane.xlu0 %2886
        %v2888 = vsel %vm1412, %v2742, 0.0
        %2889 = vadd.xlane.f32.xlu0 %v2888
        %v2890 = vpop.xlane.xlu0 %2889
        %v2891 = vsel %vm1412, %v2743, 0.0
        %2892 = vadd.xlane.f32.xlu0 %v2891
        %v2893 = vpop.xlane.xlu0 %2892
        %v2894 = vsel %vm1412, %v2744, 0.0
        %2895 = vadd.xlane.f32.xlu0 %v2894
        %v2896 = vpop.xlane.xlu0 %2895
        %v2897 = vsel %vm1412, %v2745, 0.0
        %2898 = vadd.xlane.f32.xlu0 %v2897
        %v2899 = vpop.xlane.xlu0 %2898
        %v2900 = vsel %vm1412, %v2746, 0.0
        %2901 = vadd.xlane.f32.xlu0 %v2900
        %v2902 = vpop.xlane.xlu0 %2901
        %v2903 = vsel %vm1412, %v2747, 0.0
        %2904 = vadd.xlane.f32.xlu0 %v2903
        %v2905 = vpop.xlane.xlu0 %2904
        %v2906 = vsel %vm1412, %v2748, 0.0
        %2907 = vadd.xlane.f32.xlu0 %v2906
        %v2908 = vpop.xlane.xlu0 %2907
        %v2909 = vsel %vm1412, %v2749, 0.0
        %2910 = vadd.xlane.f32.xlu0 %v2909
        %v2911 = vpop.xlane.xlu0 %2910
        %v2912 = vsel %vm1412, %v2750, 0.0
        %2913 = vadd.xlane.f32.xlu0 %v2912
        %v2914 = vpop.xlane.xlu0 %2913
        %v2915 = vsel %vm1412, %v2751, 0.0
        %2916 = vadd.xlane.f32.xlu0 %v2915
        %v2917 = vpop.xlane.xlu0 %2916
        %v2918 = vsel %vm1412, %v2752, 0.0
        %2919 = vadd.xlane.f32.xlu0 %v2918
        %v2920 = vpop.xlane.xlu0 %2919
        %v2921 = vsel %vm1412, %v2753, 0.0
        %2922 = vadd.xlane.f32.xlu0 %v2921
        %v2923 = vpop.xlane.xlu0 %2922
        %v2924 = vsel %vm1412, %v2754, 0.0
        %2925 = vadd.xlane.f32.xlu0 %v2924
        %v2926 = vpop.xlane.xlu0 %2925
        %v2927 = vsel %vm1412, %v2755, 0.0
        %2928 = vadd.xlane.f32.xlu0 %v2927
        %v2929 = vpop.xlane.xlu0 %2928
        %v2930 = vsel %vm1412, %v2756, 0.0
        %2931 = vadd.xlane.f32.xlu0 %v2930
        %v2932 = vpop.xlane.xlu0 %2931
        %v2933 = vsel %vm1412, %v2757, 0.0
        %2934 = vadd.xlane.f32.xlu0 %v2933
        %v2935 = vpop.xlane.xlu0 %2934
        %v2936 = vsel %vm1412, %v2758, 0.0
        %2937 = vadd.xlane.f32.xlu0 %v2936
        %v2938 = vpop.xlane.xlu0 %2937
        %v2939 = vsel %vm1412, %v2759, 0.0
        %2940 = vadd.xlane.f32.xlu0 %v2939
        %v2941 = vpop.xlane.xlu0 %2940
        %v2942 = vsel %vm1412, %v2760, 0.0
        %2943 = vadd.xlane.f32.xlu0 %v2942
        %v2944 = vpop.xlane.xlu0 %2943
        %v2945 = vsel %vm1412, %v2761, 0.0
        %2946 = vadd.xlane.f32.xlu0 %v2945
        %v2947 = vpop.xlane.xlu0 %2946
        %v2948 = vsel %vm1412, %v2762, 0.0
        %2949 = vadd.xlane.f32.xlu0 %v2948
        %v2950 = vpop.xlane.xlu0 %2949
        %v2951 = vsel %vm1412, %v2763, 0.0
        %2952 = vadd.xlane.f32.xlu0 %v2951
        %v2953 = vpop.xlane.xlu0 %2952
        %v2954 = vsel %vm1412, %v2764, 0.0
        %2955 = vadd.xlane.f32.xlu0 %v2954
        %v2956 = vpop.xlane.xlu0 %2955
        %v2957 = vsub.f32 %v2117, %v2767
        %v2958 = vsub.f32 %v2118, %v2770
        %v2959 = vsub.f32 %v2119, %v2773
        %v2960 = vsub.f32 %v2120, %v2776
        %v2961 = vsub.f32 %v2121, %v2779
        %v2962 = vsub.f32 %v2122, %v2782
        %v2963 = vsub.f32 %v2123, %v2785
        %v2964 = vsub.f32 %v2124, %v2788
        %v2965 = vsub.f32 %v2125, %v2791
        %v2966 = vsub.f32 %v2126, %v2794
        %v2967 = vsub.f32 %v2127, %v2797
        %v2968 = vsub.f32 %v2128, %v2800
        %v2969 = vsub.f32 %v2129, %v2803
        %v2970 = vsub.f32 %v2130, %v2806
        %v2971 = vsub.f32 %v2131, %v2809
        %v2972 = vsub.f32 %v2132, %v2812
        %v2973 = vsub.f32 %v2133, %v2815
        %v2974 = vsub.f32 %v2134, %v2818
        %v2975 = vsub.f32 %v2135, %v2821
        %v2976 = vsub.f32 %v2136, %v2824
        %v2977 = vsub.f32 %v2137, %v2827
        %v2978 = vsub.f32 %v2138, %v2830
        %v2979 = vsub.f32 %v2139, %v2833
        %v2980 = vsub.f32 %v2140, %v2836
        %v2981 = vsub.f32 %v2141, %v2839
        %v2982 = vsub.f32 %v2142, %v2842
        %v2983 = vsub.f32 %v2143, %v2845
        %v2984 = vsub.f32 %v2144, %v2848
        %v2985 = vsub.f32 %v2145, %v2851
        %v2986 = vsub.f32 %v2146, %v2854
        %v2987 = vsub.f32 %v2147, %v2857
        %v2988 = vsub.f32 %v2148, %v2860
        %v2989 = vsub.f32 %v2149, %v2863
        %v2990 = vsub.f32 %v2150, %v2866
        %v2991 = vsub.f32 %v2151, %v2869
        %v2992 = vsub.f32 %v2152, %v2872
        %v2993 = vsub.f32 %v2153, %v2875
        %v2994 = vsub.f32 %v2154, %v2878
        %v2995 = vsub.f32 %v2155, %v2881
        %v2996 = vsub.f32 %v2156, %v2884
        %v2997 = vsub.f32 %v2157, %v2887
        %v2998 = vsub.f32 %v2158, %v2890
        %v2999 = vsub.f32 %v2159, %v2893
        %v3000 = vsub.f32 %v2160, %v2896
        %v3001 = vsub.f32 %v2161, %v2899
        %v3002 = vsub.f32 %v2162, %v2902
        %v3003 = vsub.f32 %v2163, %v2905
        %v3004 = vsub.f32 %v2164, %v2908
        %v3005 = vsub.f32 %v2165, %v2911
        %v3006 = vsub.f32 %v2166, %v2914
        %v3007 = vsub.f32 %v2167, %v2917
        %v3008 = vsub.f32 %v2168, %v2920
        %v3009 = vsub.f32 %v2169, %v2923
        %v3010 = vsub.f32 %v2170, %v2926
        %v3011 = vsub.f32 %v2171, %v2929
        %v3012 = vsub.f32 %v2172, %v2932
        %v3013 = vsub.f32 %v2173, %v2935
        %v3014 = vsub.f32 %v2174, %v2938
        %v3015 = vsub.f32 %v2175, %v2941
        %v3016 = vsub.f32 %v2176, %v2944
        %v3017 = vsub.f32 %v2177, %v2947
        %v3018 = vsub.f32 %v2178, %v2950
        %v3019 = vsub.f32 %v2179, %v2953
        %v3020 = vsub.f32 %v2180, %v2956
        %v3085 = vlaneseq
        %v3086 = vshrl.u32 %v3085, 7
        %v3087 = vsub.s32 %v605, %v3086
        %v3088 = vrot.slane %v2957, %v3087
        %v3089 = vlaneseq
        %v3090 = vshrl.u32 %v3089, 7
        %v3091 = vsub.s32 %v605, %v3090
        %v3092 = vrot.slane %v2958, %v3091
        %v3093 = vlaneseq
        %v3094 = vshrl.u32 %v3093, 7
        %v3095 = vsub.s32 %v605, %v3094
        %v3096 = vrot.slane %v2959, %v3095
        %v3097 = vlaneseq
        %v3098 = vshrl.u32 %v3097, 7
        %v3099 = vsub.s32 %v605, %v3098
        %v3100 = vrot.slane %v2960, %v3099
        %v3101 = vlaneseq
        %v3102 = vshrl.u32 %v3101, 7
        %v3103 = vsub.s32 %v605, %v3102
        %v3104 = vrot.slane %v2961, %v3103
        %v3105 = vlaneseq
        %v3106 = vshrl.u32 %v3105, 7
        %v3107 = vsub.s32 %v605, %v3106
        %v3108 = vrot.slane %v2962, %v3107
        %v3109 = vlaneseq
        %v3110 = vshrl.u32 %v3109, 7
        %v3111 = vsub.s32 %v605, %v3110
        %v3112 = vrot.slane %v2963, %v3111
        %v3113 = vlaneseq
        %v3114 = vshrl.u32 %v3113, 7
        %v3115 = vsub.s32 %v605, %v3114
        %v3116 = vrot.slane %v2964, %v3115
        %v3117 = vlaneseq
        %v3118 = vshrl.u32 %v3117, 7
        %v3119 = vsub.s32 %v605, %v3118
        %v3120 = vrot.slane %v2965, %v3119
        %v3121 = vlaneseq
        %v3122 = vshrl.u32 %v3121, 7
        %v3123 = vsub.s32 %v605, %v3122
        %v3124 = vrot.slane %v2966, %v3123
        %v3125 = vlaneseq
        %v3126 = vshrl.u32 %v3125, 7
        %v3127 = vsub.s32 %v605, %v3126
        %v3128 = vrot.slane %v2967, %v3127
        %v3129 = vlaneseq
        %v3130 = vshrl.u32 %v3129, 7
        %v3131 = vsub.s32 %v605, %v3130
        %v3132 = vrot.slane %v2968, %v3131
        %v3133 = vlaneseq
        %v3134 = vshrl.u32 %v3133, 7
        %v3135 = vsub.s32 %v605, %v3134
        %v3136 = vrot.slane %v2969, %v3135
        %v3137 = vlaneseq
        %v3138 = vshrl.u32 %v3137, 7
        %v3139 = vsub.s32 %v605, %v3138
        %v3140 = vrot.slane %v2970, %v3139
        %v3141 = vlaneseq
        %v3142 = vshrl.u32 %v3141, 7
        %v3143 = vsub.s32 %v605, %v3142
        %v3144 = vrot.slane %v2971, %v3143
        %v3145 = vlaneseq
        %v3146 = vshrl.u32 %v3145, 7
        %v3147 = vsub.s32 %v605, %v3146
        %v3148 = vrot.slane %v2972, %v3147
        %v3149 = vlaneseq
        %v3150 = vshrl.u32 %v3149, 7
        %v3151 = vsub.s32 %v605, %v3150
        %v3152 = vrot.slane %v2973, %v3151
        %v3153 = vlaneseq
        %v3154 = vshrl.u32 %v3153, 7
        %v3155 = vsub.s32 %v605, %v3154
        %v3156 = vrot.slane %v2974, %v3155
        %v3157 = vlaneseq
        %v3158 = vshrl.u32 %v3157, 7
        %v3159 = vsub.s32 %v605, %v3158
        %v3160 = vrot.slane %v2975, %v3159
        %v3161 = vlaneseq
        %v3162 = vshrl.u32 %v3161, 7
        %v3163 = vsub.s32 %v605, %v3162
        %v3164 = vrot.slane %v2976, %v3163
        %v3165 = vlaneseq
        %v3166 = vshrl.u32 %v3165, 7
        %v3167 = vsub.s32 %v605, %v3166
        %v3168 = vrot.slane %v2977, %v3167
        %v3169 = vlaneseq
        %v3170 = vshrl.u32 %v3169, 7
        %v3171 = vsub.s32 %v605, %v3170
        %v3172 = vrot.slane %v2978, %v3171
        %v3173 = vlaneseq
        %v3174 = vshrl.u32 %v3173, 7
        %v3175 = vsub.s32 %v605, %v3174
        %v3176 = vrot.slane %v2979, %v3175
        %v3177 = vlaneseq
        %v3178 = vshrl.u32 %v3177, 7
        %v3179 = vsub.s32 %v605, %v3178
        %v3180 = vrot.slane %v2980, %v3179
        %v3181 = vlaneseq
        %v3182 = vshrl.u32 %v3181, 7
        %v3183 = vsub.s32 %v605, %v3182
        %v3184 = vrot.slane %v2981, %v3183
        %v3185 = vlaneseq
        %v3186 = vshrl.u32 %v3185, 7
        %v3187 = vsub.s32 %v605, %v3186
        %v3188 = vrot.slane %v2982, %v3187
        %v3189 = vlaneseq
        %v3190 = vshrl.u32 %v3189, 7
        %v3191 = vsub.s32 %v605, %v3190
        %v3192 = vrot.slane %v2983, %v3191
        %v3193 = vlaneseq
        %v3194 = vshrl.u32 %v3193, 7
        %v3195 = vsub.s32 %v605, %v3194
        %v3196 = vrot.slane %v2984, %v3195
        %v3197 = vlaneseq
        %v3198 = vshrl.u32 %v3197, 7
        %v3199 = vsub.s32 %v605, %v3198
        %v3200 = vrot.slane %v2985, %v3199
        %v3201 = vlaneseq
        %v3202 = vshrl.u32 %v3201, 7
        %v3203 = vsub.s32 %v605, %v3202
        %v3204 = vrot.slane %v2986, %v3203
        %v3205 = vlaneseq
        %v3206 = vshrl.u32 %v3205, 7
        %v3207 = vsub.s32 %v605, %v3206
        %v3208 = vrot.slane %v2987, %v3207
        %v3209 = vlaneseq
        %v3210 = vshrl.u32 %v3209, 7
        %v3211 = vsub.s32 %v605, %v3210
        %v3212 = vrot.slane %v2988, %v3211
        %v3213 = vlaneseq
        %v3214 = vshrl.u32 %v3213, 7
        %v3215 = vsub.s32 %v605, %v3214
        %v3216 = vrot.slane %v2989, %v3215
        %v3217 = vlaneseq
        %v3218 = vshrl.u32 %v3217, 7
        %v3219 = vsub.s32 %v605, %v3218
        %v3220 = vrot.slane %v2990, %v3219
        %v3221 = vlaneseq
        %v3222 = vshrl.u32 %v3221, 7
        %v3223 = vsub.s32 %v605, %v3222
        %v3224 = vrot.slane %v2991, %v3223
        %v3225 = vlaneseq
        %v3226 = vshrl.u32 %v3225, 7
        %v3227 = vsub.s32 %v605, %v3226
        %v3228 = vrot.slane %v2992, %v3227
        %v3229 = vlaneseq
        %v3230 = vshrl.u32 %v3229, 7
        %v3231 = vsub.s32 %v605, %v3230
        %v3232 = vrot.slane %v2993, %v3231
        %v3233 = vlaneseq
        %v3234 = vshrl.u32 %v3233, 7
        %v3235 = vsub.s32 %v605, %v3234
        %v3236 = vrot.slane %v2994, %v3235
        %v3237 = vlaneseq
        %v3238 = vshrl.u32 %v3237, 7
        %v3239 = vsub.s32 %v605, %v3238
        %v3240 = vrot.slane %v2995, %v3239
        %v3241 = vlaneseq
        %v3242 = vshrl.u32 %v3241, 7
        %v3243 = vsub.s32 %v605, %v3242
        %v3244 = vrot.slane %v2996, %v3243
        %v3245 = vlaneseq
        %v3246 = vshrl.u32 %v3245, 7
        %v3247 = vsub.s32 %v605, %v3246
        %v3248 = vrot.slane %v2997, %v3247
        %v3249 = vlaneseq
        %v3250 = vshrl.u32 %v3249, 7
        %v3251 = vsub.s32 %v605, %v3250
        %v3252 = vrot.slane %v2998, %v3251
        %v3253 = vlaneseq
        %v3254 = vshrl.u32 %v3253, 7
        %v3255 = vsub.s32 %v605, %v3254
        %v3256 = vrot.slane %v2999, %v3255
        %v3257 = vlaneseq
        %v3258 = vshrl.u32 %v3257, 7
        %v3259 = vsub.s32 %v605, %v3258
        %v3260 = vrot.slane %v3000, %v3259
        %v3261 = vlaneseq
        %v3262 = vshrl.u32 %v3261, 7
        %v3263 = vsub.s32 %v605, %v3262
        %v3264 = vrot.slane %v3001, %v3263
        %v3265 = vlaneseq
        %v3266 = vshrl.u32 %v3265, 7
        %v3267 = vsub.s32 %v605, %v3266
        %v3268 = vrot.slane %v3002, %v3267
        %v3269 = vlaneseq
        %v3270 = vshrl.u32 %v3269, 7
        %v3271 = vsub.s32 %v605, %v3270
        %v3272 = vrot.slane %v3003, %v3271
        %v3273 = vlaneseq
        %v3274 = vshrl.u32 %v3273, 7
        %v3275 = vsub.s32 %v605, %v3274
        %v3276 = vrot.slane %v3004, %v3275
        %v3277 = vlaneseq
        %v3278 = vshrl.u32 %v3277, 7
        %v3279 = vsub.s32 %v605, %v3278
        %v3280 = vrot.slane %v3005, %v3279
        %v3281 = vlaneseq
        %v3282 = vshrl.u32 %v3281, 7
        %v3283 = vsub.s32 %v605, %v3282
        %v3284 = vrot.slane %v3006, %v3283
        %v3285 = vlaneseq
        %v3286 = vshrl.u32 %v3285, 7
        %v3287 = vsub.s32 %v605, %v3286
        %v3288 = vrot.slane %v3007, %v3287
        %v3289 = vlaneseq
        %v3290 = vshrl.u32 %v3289, 7
        %v3291 = vsub.s32 %v605, %v3290
        %v3292 = vrot.slane %v3008, %v3291
        %v3293 = vlaneseq
        %v3294 = vshrl.u32 %v3293, 7
        %v3295 = vsub.s32 %v605, %v3294
        %v3296 = vrot.slane %v3009, %v3295
        %v3297 = vlaneseq
        %v3298 = vshrl.u32 %v3297, 7
        %v3299 = vsub.s32 %v605, %v3298
        %v3300 = vrot.slane %v3010, %v3299
        %v3301 = vlaneseq
        %v3302 = vshrl.u32 %v3301, 7
        %v3303 = vsub.s32 %v605, %v3302
        %v3304 = vrot.slane %v3011, %v3303
        %v3305 = vlaneseq
        %v3306 = vshrl.u32 %v3305, 7
        %v3307 = vsub.s32 %v605, %v3306
        %v3308 = vrot.slane %v3012, %v3307
        %v3309 = vlaneseq
        %v3310 = vshrl.u32 %v3309, 7
        %v3311 = vsub.s32 %v605, %v3310
        %v3312 = vrot.slane %v3013, %v3311
        %v3313 = vlaneseq
        %v3314 = vshrl.u32 %v3313, 7
        %v3315 = vsub.s32 %v605, %v3314
        %v3316 = vrot.slane %v3014, %v3315
        %v3317 = vlaneseq
        %v3318 = vshrl.u32 %v3317, 7
        %v3319 = vsub.s32 %v605, %v3318
        %v3320 = vrot.slane %v3015, %v3319
        %v3321 = vlaneseq
        %v3322 = vshrl.u32 %v3321, 7
        %v3323 = vsub.s32 %v605, %v3322
        %v3324 = vrot.slane %v3016, %v3323
        %v3325 = vlaneseq
        %v3326 = vshrl.u32 %v3325, 7
        %v3327 = vsub.s32 %v605, %v3326
        %v3328 = vrot.slane %v3017, %v3327
        %v3329 = vlaneseq
        %v3330 = vshrl.u32 %v3329, 7
        %v3331 = vsub.s32 %v605, %v3330
        %v3332 = vrot.slane %v3018, %v3331
        %v3333 = vlaneseq
        %v3334 = vshrl.u32 %v3333, 7
        %v3335 = vsub.s32 %v605, %v3334
        %v3336 = vrot.slane %v3019, %v3335
        %v3337 = vlaneseq
        %v3338 = vshrl.u32 %v3337, 7
        %v3339 = vsub.s32 %v605, %v3338
        %v3340 = vrot.slane %v3020, %v3339
        %vm3341 = vcmask 1041409
        %v3342 = vsel %vm3341, %v3092, %v3088
        %vm3343 = vcmask 1042434
        %v3344 = vsel %vm3343, %v3096, %v3342
        %vm3345 = vcmask 1043459
        %v3346 = vsel %vm3345, %v3100, %v3344
        %vm3347 = vcmask 1044484
        %v3348 = vsel %vm3347, %v3104, %v3346
        %vm3349 = vcmask 1045509
        %v3350 = vsel %vm3349, %v3108, %v3348
        %vm3351 = vcmask 1046534
        %v3352 = vsel %vm3351, %v3112, %v3350
        %vm3353 = vcmask 1047559
        %v3354 = vsel %vm3353, %v3116, %v3352
        %v3355 = vsel %vm3341, %v3124, %v3120
        %v3356 = vsel %vm3343, %v3128, %v3355
        %v3357 = vsel %vm3345, %v3132, %v3356
        %v3358 = vsel %vm3347, %v3136, %v3357
        %v3359 = vsel %vm3349, %v3140, %v3358
        %v3360 = vsel %vm3351, %v3144, %v3359
        %v3361 = vsel %vm3353, %v3148, %v3360
        %v3362 = vsel %vm3341, %v3156, %v3152
        %v3363 = vsel %vm3343, %v3160, %v3362
        %v3364 = vsel %vm3345, %v3164, %v3363
        %v3365 = vsel %vm3347, %v3168, %v3364
        %v3366 = vsel %vm3349, %v3172, %v3365
        %v3367 = vsel %vm3351, %v3176, %v3366
        %v3368 = vsel %vm3353, %v3180, %v3367
        %v3369 = vsel %vm3341, %v3188, %v3184
        %v3370 = vsel %vm3343, %v3192, %v3369
        %v3371 = vsel %vm3345, %v3196, %v3370
        %v3372 = vsel %vm3347, %v3200, %v3371
        %v3373 = vsel %vm3349, %v3204, %v3372
        %v3374 = vsel %vm3351, %v3208, %v3373
        %v3375 = vsel %vm3353, %v3212, %v3374
        %v3376 = vsel %vm3341, %v3220, %v3216
        %v3377 = vsel %vm3343, %v3224, %v3376
        %v3378 = vsel %vm3345, %v3228, %v3377
        %v3379 = vsel %vm3347, %v3232, %v3378
        %v3380 = vsel %vm3349, %v3236, %v3379
        %v3381 = vsel %vm3351, %v3240, %v3380
        %v3382 = vsel %vm3353, %v3244, %v3381
        %v3383 = vsel %vm3341, %v3252, %v3248
        %v3384 = vsel %vm3343, %v3256, %v3383
        %v3385 = vsel %vm3345, %v3260, %v3384
        %v3386 = vsel %vm3347, %v3264, %v3385
        %v3387 = vsel %vm3349, %v3268, %v3386
        %v3388 = vsel %vm3351, %v3272, %v3387
        %v3389 = vsel %vm3353, %v3276, %v3388
        %v3390 = vsel %vm3341, %v3284, %v3280
        %v3391 = vsel %vm3343, %v3288, %v3390
        %v3392 = vsel %vm3345, %v3292, %v3391
        %v3393 = vsel %vm3347, %v3296, %v3392
        %v3394 = vsel %vm3349, %v3300, %v3393
        %v3395 = vsel %vm3351, %v3304, %v3394
        %v3396 = vsel %vm3353, %v3308, %v3395
        %v3397 = vsel %vm3341, %v3316, %v3312
        %v3398 = vsel %vm3343, %v3320, %v3397
        %v3399 = vsel %vm3345, %v3324, %v3398
        %v3400 = vsel %vm3347, %v3328, %v3399
        %v3401 = vsel %vm3349, %v3332, %v3400
        %v3402 = vsel %vm3351, %v3336, %v3401
        %v3403 = vsel %vm3353, %v3340, %v3402
        %v3412 = vmul.f32 %v1404, %v3354
        %v3413 = vmul.f32 %v1405, %v3361
        %v3414 = vmul.f32 %v1406, %v3368
        %v3415 = vmul.f32 %v1407, %v3375
        %v3416 = vmul.f32 %v1408, %v3382
        %v3417 = vmul.f32 %v1409, %v3389
        %v3418 = vmul.f32 %v1410, %v3396
        %v3419 = vmul.f32 %v1411, %v3403
        %vm3420 = vcmask 31744
        %v3421 = vsel %vm3420, %v3412, 0.0
        %v3422 = vsel %vm3420, %v3413, 0.0
        %v3423 = vadd.f32 %v3421, %v3422
        %v3424 = vsel %vm3420, %v3414, 0.0
        %v3425 = vadd.f32 %v3423, %v3424
        %v3426 = vsel %vm3420, %v3415, 0.0
        %v3427 = vadd.f32 %v3425, %v3426
        %v3428 = vsel %vm3420, %v3416, 0.0
        %v3429 = vadd.f32 %v3427, %v3428
        %v3430 = vsel %vm3420, %v3417, 0.0
        %v3431 = vadd.f32 %v3429, %v3430
        %v3432 = vsel %vm3420, %v3418, 0.0
        %v3433 = vadd.f32 %v3431, %v3432
        %v3434 = vsel %vm3420, %v3419, 0.0
        %v3435 = vadd.f32 %v3433, %v3434
        %3436 = vadd.xlane.f32.xlu0 %v3435
        %v3437 = vpop.xlane.xlu0 %3436
        %v3438 = vrot.slane %v3437, 4
        %v3439 = vadd.f32 %v3437, %v3438
        %v3440 = vrot.slane %v3439, 2
        %v3441 = vadd.f32 %v3439, %v3440
        %v3442 = vrot.slane %v3441, 1
        %v3443 = vadd.f32 %v3441, %v3442
        %s3444 = vtos %v3443
        %v3445 = vsel %vm3420, %v1404, 0.0
        %v3446 = vsel %vm3420, %v1405, 0.0
        %v3447 = vadd.f32 %v3445, %v3446
        %v3448 = vsel %vm3420, %v1406, 0.0
        %v3449 = vadd.f32 %v3447, %v3448
        %v3450 = vsel %vm3420, %v1407, 0.0
        %v3451 = vadd.f32 %v3449, %v3450
        %v3452 = vsel %vm3420, %v1408, 0.0
        %v3453 = vadd.f32 %v3451, %v3452
        %v3454 = vsel %vm3420, %v1409, 0.0
        %v3455 = vadd.f32 %v3453, %v3454
        %v3456 = vsel %vm3420, %v1410, 0.0
        %v3457 = vadd.f32 %v3455, %v3456
        %v3458 = vsel %vm3420, %v1411, 0.0
        %v3459 = vadd.f32 %v3457, %v3458
        %3460 = vadd.xlane.f32.xlu0 %v3459
        %v3461 = vpop.xlane.xlu0 %3460
        %v3462 = vrot.slane %v3461, 4
        %v3463 = vadd.f32 %v3461, %v3462
        %v3464 = vrot.slane %v3463, 2
        %v3465 = vadd.f32 %v3463, %v3464
        %v3466 = vrot.slane %v3465, 1
        %v3467 = vadd.f32 %v3465, %v3466
        %s3468 = vtos %v3467
        %v3469 = vld [vmem:[%s508] sm:$0xff]
        %v3470 = vld [vmem:[%s512] sm:$0xff]
        %v3471 = vadd.f32 %v3470, 1.0
        %v3472 = vmul.f32 %v3469, %v3469
        %v3473 = vsub.f32 %v3471, %v3472
        %v3474 = vmul.f32 %v3470, 1.442695
        %v3475 = vpow.pop %v3474
        %v3476 = vsub.f32 %v3473, %v3475
        %vm3477 = vcmask 261120
        %v3478 = vsel %vm3477, %v3476, 0.0
        %3479 = vadd.xlane.f32.xlu0 %v3478
        %v3480 = vpop.xlane.xlu0 %3479
        %v3481 = vrot.slane %v3480, 4
        %v3482 = vadd.f32 %v3480, %v3481
        %v3483 = vrot.slane %v3482, 2
        %v3484 = vadd.f32 %v3482, %v3483
        %v3485 = vrot.slane %v3484, 1
        %v3486 = vadd.f32 %v3484, %v3485
        %s3487 = vtos %v3486
        %v3488 = vrcp.pop %v691
        %v3489 = vmul.f32 1.0, %v3488
        %v3490 = vrcp.pop %v694
        %v3491 = vmul.f32 1.0, %v3490
        %v3492 = vrcp.pop %v697
        %v3493 = vmul.f32 1.0, %v3492
        %v3494 = vrcp.pop %v700
        %v3495 = vmul.f32 1.0, %v3494
        %v3496 = vrcp.pop %v703
        %v3497 = vmul.f32 1.0, %v3496
        %v3498 = vrcp.pop %v706
        %v3499 = vmul.f32 1.0, %v3498
        %v3500 = vrcp.pop %v709
        %v3501 = vmul.f32 1.0, %v3500
        %v3502 = vrcp.pop %v712
        %v3503 = vmul.f32 1.0, %v3502
        %v3504 = vmul.f32 %v674, %v3489
        %v3505 = vmul.f32 %v676, %v3491
        %v3506 = vmul.f32 %v678, %v3493
        %v3507 = vmul.f32 %v680, %v3495
        %v3508 = vmul.f32 %v682, %v3497
        %v3509 = vmul.f32 %v684, %v3499
        %v3510 = vmul.f32 %v686, %v3501
        %v3511 = vmul.f32 %v688, %v3503
        %v3512 = vsel %vm640, %v3504, 0.0
        %v3513 = vrot.slane %v3512, 4
        %v3514 = vadd.f32 %v3512, %v3513
        %v3515 = vrot.slane %v3514, 2
        %v3516 = vadd.f32 %v3514, %v3515
        %v3517 = vrot.slane %v3516, 1
        %v3518 = vadd.f32 %v3516, %v3517
        %v3519 = vsel %vm640, %v3505, 0.0
        %v3520 = vrot.slane %v3519, 4
        %v3521 = vadd.f32 %v3519, %v3520
        %v3522 = vrot.slane %v3521, 2
        %v3523 = vadd.f32 %v3521, %v3522
        %v3524 = vrot.slane %v3523, 1
        %v3525 = vadd.f32 %v3523, %v3524
        %v3526 = vsel %vm640, %v3506, 0.0
        %v3527 = vrot.slane %v3526, 4
        %v3528 = vadd.f32 %v3526, %v3527
        %v3529 = vrot.slane %v3528, 2
        %v3530 = vadd.f32 %v3528, %v3529
        %v3531 = vrot.slane %v3530, 1
        %v3532 = vadd.f32 %v3530, %v3531
        %v3533 = vsel %vm640, %v3507, 0.0
        %v3534 = vrot.slane %v3533, 4
        %v3535 = vadd.f32 %v3533, %v3534
        %v3536 = vrot.slane %v3535, 2
        %v3537 = vadd.f32 %v3535, %v3536
        %v3538 = vrot.slane %v3537, 1
        %v3539 = vadd.f32 %v3537, %v3538
        %v3540 = vsel %vm640, %v3508, 0.0
        %v3541 = vrot.slane %v3540, 4
        %v3542 = vadd.f32 %v3540, %v3541
        %v3543 = vrot.slane %v3542, 2
        %v3544 = vadd.f32 %v3542, %v3543
        %v3545 = vrot.slane %v3544, 1
        %v3546 = vadd.f32 %v3544, %v3545
        %v3547 = vsel %vm640, %v3509, 0.0
        %v3548 = vrot.slane %v3547, 4
        %v3549 = vadd.f32 %v3547, %v3548
        %v3550 = vrot.slane %v3549, 2
        %v3551 = vadd.f32 %v3549, %v3550
        %v3552 = vrot.slane %v3551, 1
        %v3553 = vadd.f32 %v3551, %v3552
        %v3554 = vsel %vm640, %v3510, 0.0
        %v3555 = vrot.slane %v3554, 4
        %v3556 = vadd.f32 %v3554, %v3555
        %v3557 = vrot.slane %v3556, 2
        %v3558 = vadd.f32 %v3556, %v3557
        %v3559 = vrot.slane %v3558, 1
        %v3560 = vadd.f32 %v3558, %v3559
        %v3561 = vsel %vm640, %v3511, 0.0
        %v3562 = vrot.slane %v3561, 4
        %v3563 = vadd.f32 %v3561, %v3562
        %v3564 = vrot.slane %v3563, 2
        %v3565 = vadd.f32 %v3563, %v3564
        %v3566 = vrot.slane %v3565, 1
        %v3567 = vadd.f32 %v3565, %v3566
        %v3568 = vmul.f32 %v3518, 0.125
        %v3569 = vmul.f32 %v3525, 0.125
        %v3570 = vmul.f32 %v3532, 0.125
        %v3571 = vmul.f32 %v3539, 0.125
        %v3572 = vmul.f32 %v3546, 0.125
        %v3573 = vmul.f32 %v3553, 0.125
        %v3574 = vmul.f32 %v3560, 0.125
        %v3575 = vmul.f32 %v3567, 0.125
        %v3576 = vrcp.pop %v1799
        %v3577 = vmul.f32 1.0, %v3576
        %v3578 = vrcp.pop %v1802
        %v3579 = vmul.f32 1.0, %v3578
        %v3580 = vrcp.pop %v1805
        %v3581 = vmul.f32 1.0, %v3580
        %v3582 = vrcp.pop %v1808
        %v3583 = vmul.f32 1.0, %v3582
        %v3584 = vrcp.pop %v1811
        %v3585 = vmul.f32 1.0, %v3584
        %v3586 = vrcp.pop %v1814
        %v3587 = vmul.f32 1.0, %v3586
        %v3588 = vrcp.pop %v1817
        %v3589 = vmul.f32 1.0, %v3588
        %v3590 = vrcp.pop %v1820
        %v3591 = vmul.f32 1.0, %v3590
        %v3592 = vrcp.pop %v1823
        %v3593 = vmul.f32 1.0, %v3592
        %v3594 = vrcp.pop %v1826
        %v3595 = vmul.f32 1.0, %v3594
        %v3596 = vrcp.pop %v1829
        %v3597 = vmul.f32 1.0, %v3596
        %v3598 = vrcp.pop %v1832
        %v3599 = vmul.f32 1.0, %v3598
        %v3600 = vrcp.pop %v1835
        %v3601 = vmul.f32 1.0, %v3600
        %v3602 = vrcp.pop %v1838
        %v3603 = vmul.f32 1.0, %v3602
        %v3604 = vrcp.pop %v1841
        %v3605 = vmul.f32 1.0, %v3604
        %v3606 = vrcp.pop %v1844
        %v3607 = vmul.f32 1.0, %v3606
        %v3608 = vrcp.pop %v1847
        %v3609 = vmul.f32 1.0, %v3608
        %v3610 = vrcp.pop %v1850
        %v3611 = vmul.f32 1.0, %v3610
        %v3612 = vrcp.pop %v1853
        %v3613 = vmul.f32 1.0, %v3612
        %v3614 = vrcp.pop %v1856
        %v3615 = vmul.f32 1.0, %v3614
        %v3616 = vrcp.pop %v1859
        %v3617 = vmul.f32 1.0, %v3616
        %v3618 = vrcp.pop %v1862
        %v3619 = vmul.f32 1.0, %v3618
        %v3620 = vrcp.pop %v1865
        %v3621 = vmul.f32 1.0, %v3620
        %v3622 = vrcp.pop %v1868
        %v3623 = vmul.f32 1.0, %v3622
        %v3624 = vrcp.pop %v1871
        %v3625 = vmul.f32 1.0, %v3624
        %v3626 = vrcp.pop %v1874
        %v3627 = vmul.f32 1.0, %v3626
        %v3628 = vrcp.pop %v1877
        %v3629 = vmul.f32 1.0, %v3628
        %v3630 = vrcp.pop %v1880
        %v3631 = vmul.f32 1.0, %v3630
        %v3632 = vrcp.pop %v1883
        %v3633 = vmul.f32 1.0, %v3632
        %v3634 = vrcp.pop %v1886
        %v3635 = vmul.f32 1.0, %v3634
        %v3636 = vrcp.pop %v1889
        %v3637 = vmul.f32 1.0, %v3636
        %v3638 = vrcp.pop %v1892
        %v3639 = vmul.f32 1.0, %v3638
        %v3640 = vrcp.pop %v1895
        %v3641 = vmul.f32 1.0, %v3640
        %v3642 = vrcp.pop %v1898
        %v3643 = vmul.f32 1.0, %v3642
        %v3644 = vrcp.pop %v1901
        %v3645 = vmul.f32 1.0, %v3644
        %v3646 = vrcp.pop %v1904
        %v3647 = vmul.f32 1.0, %v3646
        %v3648 = vrcp.pop %v1907
        %v3649 = vmul.f32 1.0, %v3648
        %v3650 = vrcp.pop %v1910
        %v3651 = vmul.f32 1.0, %v3650
        %v3652 = vrcp.pop %v1913
        %v3653 = vmul.f32 1.0, %v3652
        %v3654 = vrcp.pop %v1916
        %v3655 = vmul.f32 1.0, %v3654
        %v3656 = vrcp.pop %v1919
        %v3657 = vmul.f32 1.0, %v3656
        %v3658 = vrcp.pop %v1922
        %v3659 = vmul.f32 1.0, %v3658
        %v3660 = vrcp.pop %v1925
        %v3661 = vmul.f32 1.0, %v3660
        %v3662 = vrcp.pop %v1928
        %v3663 = vmul.f32 1.0, %v3662
        %v3664 = vrcp.pop %v1931
        %v3665 = vmul.f32 1.0, %v3664
        %v3666 = vrcp.pop %v1934
        %v3667 = vmul.f32 1.0, %v3666
        %v3668 = vrcp.pop %v1937
        %v3669 = vmul.f32 1.0, %v3668
        %v3670 = vrcp.pop %v1940
        %v3671 = vmul.f32 1.0, %v3670
        %v3672 = vrcp.pop %v1943
        %v3673 = vmul.f32 1.0, %v3672
        %v3674 = vrcp.pop %v1946
        %v3675 = vmul.f32 1.0, %v3674
        %v3676 = vrcp.pop %v1949
        %v3677 = vmul.f32 1.0, %v3676
        %v3678 = vrcp.pop %v1952
        %v3679 = vmul.f32 1.0, %v3678
        %v3680 = vrcp.pop %v1955
        %v3681 = vmul.f32 1.0, %v3680
        %v3682 = vrcp.pop %v1958
        %v3683 = vmul.f32 1.0, %v3682
        %v3684 = vrcp.pop %v1961
        %v3685 = vmul.f32 1.0, %v3684
        %v3686 = vrcp.pop %v1964
        %v3687 = vmul.f32 1.0, %v3686
        %v3688 = vrcp.pop %v1967
        %v3689 = vmul.f32 1.0, %v3688
        %v3690 = vrcp.pop %v1970
        %v3691 = vmul.f32 1.0, %v3690
        %v3692 = vrcp.pop %v1973
        %v3693 = vmul.f32 1.0, %v3692
        %v3694 = vrcp.pop %v1976
        %v3695 = vmul.f32 1.0, %v3694
        %v3696 = vrcp.pop %v1979
        %v3697 = vmul.f32 1.0, %v3696
        %v3698 = vrcp.pop %v1982
        %v3699 = vmul.f32 1.0, %v3698
        %v3700 = vrcp.pop %v1985
        %v3701 = vmul.f32 1.0, %v3700
        %v3702 = vrcp.pop %v1988
        %v3703 = vmul.f32 1.0, %v3702
        %v3704 = vmul.f32 %v1670, %v3577
        %v3705 = vmul.f32 %v1672, %v3579
        %v3706 = vmul.f32 %v1674, %v3581
        %v3707 = vmul.f32 %v1676, %v3583
        %v3708 = vmul.f32 %v1678, %v3585
        %v3709 = vmul.f32 %v1680, %v3587
        %v3710 = vmul.f32 %v1682, %v3589
        %v3711 = vmul.f32 %v1684, %v3591
        %v3712 = vmul.f32 %v1686, %v3593
        %v3713 = vmul.f32 %v1688, %v3595
        %v3714 = vmul.f32 %v1690, %v3597
        %v3715 = vmul.f32 %v1692, %v3599
        %v3716 = vmul.f32 %v1694, %v3601
        %v3717 = vmul.f32 %v1696, %v3603
        %v3718 = vmul.f32 %v1698, %v3605
        %v3719 = vmul.f32 %v1700, %v3607
        %v3720 = vmul.f32 %v1702, %v3609
        %v3721 = vmul.f32 %v1704, %v3611
        %v3722 = vmul.f32 %v1706, %v3613
        %v3723 = vmul.f32 %v1708, %v3615
        %v3724 = vmul.f32 %v1710, %v3617
        %v3725 = vmul.f32 %v1712, %v3619
        %v3726 = vmul.f32 %v1714, %v3621
        %v3727 = vmul.f32 %v1716, %v3623
        %v3728 = vmul.f32 %v1718, %v3625
        %v3729 = vmul.f32 %v1720, %v3627
        %v3730 = vmul.f32 %v1722, %v3629
        %v3731 = vmul.f32 %v1724, %v3631
        %v3732 = vmul.f32 %v1726, %v3633
        %v3733 = vmul.f32 %v1728, %v3635
        %v3734 = vmul.f32 %v1730, %v3637
        %v3735 = vmul.f32 %v1732, %v3639
        %v3736 = vmul.f32 %v1734, %v3641
        %v3737 = vmul.f32 %v1736, %v3643
        %v3738 = vmul.f32 %v1738, %v3645
        %v3739 = vmul.f32 %v1740, %v3647
        %v3740 = vmul.f32 %v1742, %v3649
        %v3741 = vmul.f32 %v1744, %v3651
        %v3742 = vmul.f32 %v1746, %v3653
        %v3743 = vmul.f32 %v1748, %v3655
        %v3744 = vmul.f32 %v1750, %v3657
        %v3745 = vmul.f32 %v1752, %v3659
        %v3746 = vmul.f32 %v1754, %v3661
        %v3747 = vmul.f32 %v1756, %v3663
        %v3748 = vmul.f32 %v1758, %v3665
        %v3749 = vmul.f32 %v1760, %v3667
        %v3750 = vmul.f32 %v1762, %v3669
        %v3751 = vmul.f32 %v1764, %v3671
        %v3752 = vmul.f32 %v1766, %v3673
        %v3753 = vmul.f32 %v1768, %v3675
        %v3754 = vmul.f32 %v1770, %v3677
        %v3755 = vmul.f32 %v1772, %v3679
        %v3756 = vmul.f32 %v1774, %v3681
        %v3757 = vmul.f32 %v1776, %v3683
        %v3758 = vmul.f32 %v1778, %v3685
        %v3759 = vmul.f32 %v1780, %v3687
        %v3760 = vmul.f32 %v1782, %v3689
        %v3761 = vmul.f32 %v1784, %v3691
        %v3762 = vmul.f32 %v1786, %v3693
        %v3763 = vmul.f32 %v1788, %v3695
        %v3764 = vmul.f32 %v1790, %v3697
        %v3765 = vmul.f32 %v1792, %v3699
        %v3766 = vmul.f32 %v1794, %v3701
        %v3767 = vmul.f32 %v1796, %v3703
        %v3768 = vsel %vm1412, %v3704, 0.0
        %v3769 = vsel %vm1412, %v3705, 0.0
        %v3770 = vadd.f32 %v3768, %v3769
        %v3771 = vsel %vm1412, %v3706, 0.0
        %v3772 = vadd.f32 %v3770, %v3771
        %v3773 = vsel %vm1412, %v3707, 0.0
        %v3774 = vadd.f32 %v3772, %v3773
        %v3775 = vsel %vm1412, %v3708, 0.0
        %v3776 = vadd.f32 %v3774, %v3775
        %v3777 = vsel %vm1412, %v3709, 0.0
        %v3778 = vadd.f32 %v3776, %v3777
        %v3779 = vsel %vm1412, %v3710, 0.0
        %v3780 = vadd.f32 %v3778, %v3779
        %v3781 = vsel %vm1412, %v3711, 0.0
        %v3782 = vadd.f32 %v3780, %v3781
        %v3783 = vsel %vm1412, %v3712, 0.0
        %v3784 = vsel %vm1412, %v3713, 0.0
        %v3785 = vadd.f32 %v3783, %v3784
        %v3786 = vsel %vm1412, %v3714, 0.0
        %v3787 = vadd.f32 %v3785, %v3786
        %v3788 = vsel %vm1412, %v3715, 0.0
        %v3789 = vadd.f32 %v3787, %v3788
        %v3790 = vsel %vm1412, %v3716, 0.0
        %v3791 = vadd.f32 %v3789, %v3790
        %v3792 = vsel %vm1412, %v3717, 0.0
        %v3793 = vadd.f32 %v3791, %v3792
        %v3794 = vsel %vm1412, %v3718, 0.0
        %v3795 = vadd.f32 %v3793, %v3794
        %v3796 = vsel %vm1412, %v3719, 0.0
        %v3797 = vadd.f32 %v3795, %v3796
        %v3798 = vsel %vm1412, %v3720, 0.0
        %v3799 = vsel %vm1412, %v3721, 0.0
        %v3800 = vadd.f32 %v3798, %v3799
        %v3801 = vsel %vm1412, %v3722, 0.0
        %v3802 = vadd.f32 %v3800, %v3801
        %v3803 = vsel %vm1412, %v3723, 0.0
        %v3804 = vadd.f32 %v3802, %v3803
        %v3805 = vsel %vm1412, %v3724, 0.0
        %v3806 = vadd.f32 %v3804, %v3805
        %v3807 = vsel %vm1412, %v3725, 0.0
        %v3808 = vadd.f32 %v3806, %v3807
        %v3809 = vsel %vm1412, %v3726, 0.0
        %v3810 = vadd.f32 %v3808, %v3809
        %v3811 = vsel %vm1412, %v3727, 0.0
        %v3812 = vadd.f32 %v3810, %v3811
        %v3813 = vsel %vm1412, %v3728, 0.0
        %v3814 = vsel %vm1412, %v3729, 0.0
        %v3815 = vadd.f32 %v3813, %v3814
        %v3816 = vsel %vm1412, %v3730, 0.0
        %v3817 = vadd.f32 %v3815, %v3816
        %v3818 = vsel %vm1412, %v3731, 0.0
        %v3819 = vadd.f32 %v3817, %v3818
        %v3820 = vsel %vm1412, %v3732, 0.0
        %v3821 = vadd.f32 %v3819, %v3820
        %v3822 = vsel %vm1412, %v3733, 0.0
        %v3823 = vadd.f32 %v3821, %v3822
        %v3824 = vsel %vm1412, %v3734, 0.0
        %v3825 = vadd.f32 %v3823, %v3824
        %v3826 = vsel %vm1412, %v3735, 0.0
        %v3827 = vadd.f32 %v3825, %v3826
        %v3828 = vsel %vm1412, %v3736, 0.0
        %v3829 = vsel %vm1412, %v3737, 0.0
        %v3830 = vadd.f32 %v3828, %v3829
        %v3831 = vsel %vm1412, %v3738, 0.0
        %v3832 = vadd.f32 %v3830, %v3831
        %v3833 = vsel %vm1412, %v3739, 0.0
        %v3834 = vadd.f32 %v3832, %v3833
        %v3835 = vsel %vm1412, %v3740, 0.0
        %v3836 = vadd.f32 %v3834, %v3835
        %v3837 = vsel %vm1412, %v3741, 0.0
        %v3838 = vadd.f32 %v3836, %v3837
        %v3839 = vsel %vm1412, %v3742, 0.0
        %v3840 = vadd.f32 %v3838, %v3839
        %v3841 = vsel %vm1412, %v3743, 0.0
        %v3842 = vadd.f32 %v3840, %v3841
        %v3843 = vsel %vm1412, %v3744, 0.0
        %v3844 = vsel %vm1412, %v3745, 0.0
        %v3845 = vadd.f32 %v3843, %v3844
        %v3846 = vsel %vm1412, %v3746, 0.0
        %v3847 = vadd.f32 %v3845, %v3846
        %v3848 = vsel %vm1412, %v3747, 0.0
        %v3849 = vadd.f32 %v3847, %v3848
        %v3850 = vsel %vm1412, %v3748, 0.0
        %v3851 = vadd.f32 %v3849, %v3850
        %v3852 = vsel %vm1412, %v3749, 0.0
        %v3853 = vadd.f32 %v3851, %v3852
        %v3854 = vsel %vm1412, %v3750, 0.0
        %v3855 = vadd.f32 %v3853, %v3854
        %v3856 = vsel %vm1412, %v3751, 0.0
        %v3857 = vadd.f32 %v3855, %v3856
        %v3858 = vsel %vm1412, %v3752, 0.0
        %v3859 = vsel %vm1412, %v3753, 0.0
        %v3860 = vadd.f32 %v3858, %v3859
        %v3861 = vsel %vm1412, %v3754, 0.0
        %v3862 = vadd.f32 %v3860, %v3861
        %v3863 = vsel %vm1412, %v3755, 0.0
        %v3864 = vadd.f32 %v3862, %v3863
        %v3865 = vsel %vm1412, %v3756, 0.0
        %v3866 = vadd.f32 %v3864, %v3865
        %v3867 = vsel %vm1412, %v3757, 0.0
        %v3868 = vadd.f32 %v3866, %v3867
        %v3869 = vsel %vm1412, %v3758, 0.0
        %v3870 = vadd.f32 %v3868, %v3869
        %v3871 = vsel %vm1412, %v3759, 0.0
        %v3872 = vadd.f32 %v3870, %v3871
        %v3873 = vsel %vm1412, %v3760, 0.0
        %v3874 = vsel %vm1412, %v3761, 0.0
        %v3875 = vadd.f32 %v3873, %v3874
        %v3876 = vsel %vm1412, %v3762, 0.0
        %v3877 = vadd.f32 %v3875, %v3876
        %v3878 = vsel %vm1412, %v3763, 0.0
        %v3879 = vadd.f32 %v3877, %v3878
        %v3880 = vsel %vm1412, %v3764, 0.0
        %v3881 = vadd.f32 %v3879, %v3880
        %v3882 = vsel %vm1412, %v3765, 0.0
        %v3883 = vadd.f32 %v3881, %v3882
        %v3884 = vsel %vm1412, %v3766, 0.0
        %v3885 = vadd.f32 %v3883, %v3884
        %v3886 = vsel %vm1412, %v3767, 0.0
        %v3887 = vadd.f32 %v3885, %v3886
        %v3888 = vsel %vm1412, %v3782, 0.0
        %v3889 = vrot.slane %v3888, 4
        %v3890 = vadd.f32 %v3888, %v3889
        %v3891 = vrot.slane %v3890, 2
        %v3892 = vadd.f32 %v3890, %v3891
        %v3893 = vrot.slane %v3892, 1
        %v3894 = vadd.f32 %v3892, %v3893
        %v3895 = vsel %vm1412, %v3797, 0.0
        %v3896 = vrot.slane %v3895, 4
        %v3897 = vadd.f32 %v3895, %v3896
        %v3898 = vrot.slane %v3897, 2
        %v3899 = vadd.f32 %v3897, %v3898
        %v3900 = vrot.slane %v3899, 1
        %v3901 = vadd.f32 %v3899, %v3900
        %v3902 = vsel %vm1412, %v3812, 0.0
        %v3903 = vrot.slane %v3902, 4
        %v3904 = vadd.f32 %v3902, %v3903
        %v3905 = vrot.slane %v3904, 2
        %v3906 = vadd.f32 %v3904, %v3905
        %v3907 = vrot.slane %v3906, 1
        %v3908 = vadd.f32 %v3906, %v3907
        %v3909 = vsel %vm1412, %v3827, 0.0
        %v3910 = vrot.slane %v3909, 4
        %v3911 = vadd.f32 %v3909, %v3910
        %v3912 = vrot.slane %v3911, 2
        %v3913 = vadd.f32 %v3911, %v3912
        %v3914 = vrot.slane %v3913, 1
        %v3915 = vadd.f32 %v3913, %v3914
        %v3916 = vsel %vm1412, %v3842, 0.0
        %v3917 = vrot.slane %v3916, 4
        %v3918 = vadd.f32 %v3916, %v3917
        %v3919 = vrot.slane %v3918, 2
        %v3920 = vadd.f32 %v3918, %v3919
        %v3921 = vrot.slane %v3920, 1
        %v3922 = vadd.f32 %v3920, %v3921
        %v3923 = vsel %vm1412, %v3857, 0.0
        %v3924 = vrot.slane %v3923, 4
        %v3925 = vadd.f32 %v3923, %v3924
        %v3926 = vrot.slane %v3925, 2
        %v3927 = vadd.f32 %v3925, %v3926
        %v3928 = vrot.slane %v3927, 1
        %v3929 = vadd.f32 %v3927, %v3928
        %v3930 = vsel %vm1412, %v3872, 0.0
        %v3931 = vrot.slane %v3930, 4
        %v3932 = vadd.f32 %v3930, %v3931
        %v3933 = vrot.slane %v3932, 2
        %v3934 = vadd.f32 %v3932, %v3933
        %v3935 = vrot.slane %v3934, 1
        %v3936 = vadd.f32 %v3934, %v3935
        %v3937 = vsel %vm1412, %v3887, 0.0
        %v3938 = vrot.slane %v3937, 4
        %v3939 = vadd.f32 %v3937, %v3938
        %v3940 = vrot.slane %v3939, 2
        %v3941 = vadd.f32 %v3939, %v3940
        %v3942 = vrot.slane %v3941, 1
        %v3943 = vadd.f32 %v3941, %v3942
        %v3944 = vmul.f32 %v3894, 0.03125
        %v3945 = vmul.f32 %v3901, 0.03125
        %v3946 = vmul.f32 %v3908, 0.03125
        %v3947 = vmul.f32 %v3915, 0.03125
        %v3948 = vmul.f32 %v3922, 0.03125
        %v3949 = vmul.f32 %v3929, 0.03125
        %v3950 = vmul.f32 %v3936, 0.03125
        %v3951 = vmul.f32 %v3943, 0.03125
        %v3952 = vld [vmem:[%s9] sm:$0x3]
        %v3953 = vld [vmem:[%s10] sm:$0x3]
        %v3954 = vld [vmem:[%s11] sm:$0x1]
        %v3955 = vlaneseq
        %v3956 = vshrl.u32 %v3955, 7
        %v3957 = vsub.s32 0, %v3956
        %v3958 = vrot.slane %v3952, %v3957
        %v3959 = vmul.f32 %v3568, %v3958
        %v3960 = vmul.f32 %v3569, %v3958
        %v3961 = vmul.f32 %v3570, %v3958
        %v3962 = vmul.f32 %v3571, %v3958
        %v3963 = vmul.f32 %v3572, %v3958
        %v3964 = vmul.f32 %v3573, %v3958
        %v3965 = vmul.f32 %v3574, %v3958
        %v3966 = vmul.f32 %v3575, %v3958
        %v3975 = vrot.slane %v3960, 7
        %v3976 = vsel %vm3341, %v3975, %v3959
        %v3977 = vrot.slane %v3961, 6
        %v3978 = vsel %vm3343, %v3977, %v3976
        %v3979 = vrot.slane %v3962, 5
        %v3980 = vsel %vm3345, %v3979, %v3978
        %v3981 = vrot.slane %v3963, 4
        %v3982 = vsel %vm3347, %v3981, %v3980
        %v3983 = vrot.slane %v3964, 3
        %v3984 = vsel %vm3349, %v3983, %v3982
        %v3985 = vrot.slane %v3965, 2
        %v3986 = vsel %vm3351, %v3985, %v3984
        %v3987 = vrot.slane %v3966, 1
        %v3988 = vsel %vm3353, %v3987, %v3986
        %v3990 = vsel %vm640, %v3988, 0.0
        %3991 = vadd.xlane.f32.xlu0 %v3990
        %v3992 = vpop.xlane.xlu0 %3991
        %v3993 = vlaneseq
        %v3994 = vshrl.u32 %v3993, 7
        %v3995 = vsub.s32 0, %v3994
        %v3996 = vrot.slane %v3953, %v3995
        %v3997 = vmul.f32 %v3944, %v3996
        %v3998 = vmul.f32 %v3945, %v3996
        %v3999 = vmul.f32 %v3946, %v3996
        %v4000 = vmul.f32 %v3947, %v3996
        %v4001 = vmul.f32 %v3948, %v3996
        %v4002 = vmul.f32 %v3949, %v3996
        %v4003 = vmul.f32 %v3950, %v3996
        %v4004 = vmul.f32 %v3951, %v3996
        %v4013 = vrot.slane %v3998, 7
        %v4014 = vsel %vm3341, %v4013, %v3997
        %v4015 = vrot.slane %v3999, 6
        %v4016 = vsel %vm3343, %v4015, %v4014
        %v4017 = vrot.slane %v4000, 5
        %v4018 = vsel %vm3345, %v4017, %v4016
        %v4019 = vrot.slane %v4001, 4
        %v4020 = vsel %vm3347, %v4019, %v4018
        %v4021 = vrot.slane %v4002, 3
        %v4022 = vsel %vm3349, %v4021, %v4020
        %v4023 = vrot.slane %v4003, 2
        %v4024 = vsel %vm3351, %v4023, %v4022
        %v4025 = vrot.slane %v4004, 1
        %v4026 = vsel %vm3353, %v4025, %v4024
        %vm4028 = vcmask 72704
        %v4029 = vsel %vm4028, %v4026, 0.0
        %4030 = vadd.xlane.f32.xlu0 %v4029
        %v4031 = vpop.xlane.xlu0 %4030
        %v4032 = vadd.f32 %v3992, %v4031
        %v4034 = vlaneseq
        %v4035 = vshrl.u32 %v4034, 7
        %v4036 = vsub.s32 0, %v4035
        %v4037 = vrot.slane %v3954, %v4036
        %v4039 = vadd.f32 %v4032, %v4037
        %v4040 = vlaneseq
        %v4041 = vshrl.u32 %v4040, 7
        %v4042 = vsub.s32 1, %v4041
        %v4043 = vrot.slane %v3952, %v4042
        %v4044 = vmul.f32 %v3568, %v4043
        %v4045 = vmul.f32 %v3569, %v4043
        %v4046 = vmul.f32 %v3570, %v4043
        %v4047 = vmul.f32 %v3571, %v4043
        %v4048 = vmul.f32 %v3572, %v4043
        %v4049 = vmul.f32 %v3573, %v4043
        %v4050 = vmul.f32 %v3574, %v4043
        %v4051 = vmul.f32 %v3575, %v4043
        %v4060 = vrot.slane %v4045, 7
        %v4061 = vsel %vm3341, %v4060, %v4044
        %v4062 = vrot.slane %v4046, 6
        %v4063 = vsel %vm3343, %v4062, %v4061
        %v4064 = vrot.slane %v4047, 5
        %v4065 = vsel %vm3345, %v4064, %v4063
        %v4066 = vrot.slane %v4048, 4
        %v4067 = vsel %vm3347, %v4066, %v4065
        %v4068 = vrot.slane %v4049, 3
        %v4069 = vsel %vm3349, %v4068, %v4067
        %v4070 = vrot.slane %v4050, 2
        %v4071 = vsel %vm3351, %v4070, %v4069
        %v4072 = vrot.slane %v4051, 1
        %v4073 = vsel %vm3353, %v4072, %v4071
        %v4075 = vsel %vm640, %v4073, 0.0
        %4076 = vadd.xlane.f32.xlu0 %v4075
        %v4077 = vpop.xlane.xlu0 %4076
        %v4078 = vlaneseq
        %v4079 = vshrl.u32 %v4078, 7
        %v4080 = vsub.s32 1, %v4079
        %v4081 = vrot.slane %v3953, %v4080
        %v4082 = vmul.f32 %v3944, %v4081
        %v4083 = vmul.f32 %v3945, %v4081
        %v4084 = vmul.f32 %v3946, %v4081
        %v4085 = vmul.f32 %v3947, %v4081
        %v4086 = vmul.f32 %v3948, %v4081
        %v4087 = vmul.f32 %v3949, %v4081
        %v4088 = vmul.f32 %v3950, %v4081
        %v4089 = vmul.f32 %v3951, %v4081
        %v4098 = vrot.slane %v4083, 7
        %v4099 = vsel %vm3341, %v4098, %v4082
        %v4100 = vrot.slane %v4084, 6
        %v4101 = vsel %vm3343, %v4100, %v4099
        %v4102 = vrot.slane %v4085, 5
        %v4103 = vsel %vm3345, %v4102, %v4101
        %v4104 = vrot.slane %v4086, 4
        %v4105 = vsel %vm3347, %v4104, %v4103
        %v4106 = vrot.slane %v4087, 3
        %v4107 = vsel %vm3349, %v4106, %v4105
        %v4108 = vrot.slane %v4088, 2
        %v4109 = vsel %vm3351, %v4108, %v4107
        %v4110 = vrot.slane %v4089, 1
        %v4111 = vsel %vm3353, %v4110, %v4109
        %v4113 = vsel %vm4028, %v4111, 0.0
        %4114 = vadd.xlane.f32.xlu0 %v4113
        %v4115 = vpop.xlane.xlu0 %4114
        %v4116 = vadd.f32 %v4077, %v4115
        %v4117 = vadd.f32 %v4116, %v4037
        %v4118 = vld [vmem:[%s516] sm:$0xff]
        %v4119 = vld [vmem:[%s8] sm:$0x1]
        %v4121 = vlaneseq
        %v4122 = vshrl.u32 %v4121, 7
        %v4123 = vsub.s32 0, %v4122
        %v4124 = vrot.slane %v4119, %v4123
        %4125 = vrot.lane.b32.xlu0 %v4124, 3
        %v4126 = vpop.permute.xlu0 %4125
        %v4128 = vmul.f32 %v4118, %v4126
        %4130 = vrot.lane.b32.xlu0 %v4128, 125
        %v4131 = vpop.permute.xlu0 %4130
        %v4133 = vsel %vm640, %v4131, 0.0
        %4134 = vadd.xlane.f32.xlu0 %v4133
        %v4135 = vpop.xlane.xlu0 %4134
        %v4136 = vadd.f32 %v4135, 1e-06
        %v4137 = vrcp.pop %v4136
        %v4138 = vmul.f32 %v4118, %v4137
        %4140 = vrot.lane.b32.xlu0 %v4138, 127
        %v4141 = vpop.permute.xlu0 %4140
        %v4143 = vmin.f32 %v4118, %v4141
        %v4144 = vsub.f32 %v4039, %v4143
        %v4145 = vmax.f32 %v4144, 0.0
        %v4146 = vsel %vm905, %v4145, 0.0
        %4147 = vadd.xlane.f32.xlu0 %v4146
        %v4148 = vpop.xlane.xlu0 %4147
        %v4149 = vrot.slane %v4148, 4
        %v4150 = vadd.f32 %v4148, %v4149
        %v4151 = vrot.slane %v4150, 2
        %v4152 = vadd.f32 %v4150, %v4151
        %v4153 = vrot.slane %v4152, 1
        %v4154 = vadd.f32 %v4152, %v4153
        %s4155 = vtos %v4154
        %4157 = vrot.lane.b32.xlu0 %v4117, 1
        %v4158 = vpop.permute.xlu0 %4157
        %v4160 = vsub.f32 %v4118, %v4158
        %v4161 = vmax.f32 %v4160, 0.0
        %4163 = vrot.lane.b32.xlu0 %v4161, 126
        %v4164 = vpop.permute.xlu0 %4163
        %v4166 = vsel %vm905, %v4164, 0.0
        %4167 = vadd.xlane.f32.xlu0 %v4166
        %v4168 = vpop.xlane.xlu0 %4167
        %v4169 = vrot.slane %v4168, 4
        %v4170 = vadd.f32 %v4168, %v4169
        %v4171 = vrot.slane %v4170, 2
        %v4172 = vadd.f32 %v4170, %v4171
        %v4173 = vrot.slane %v4172, 1
        %v4174 = vadd.f32 %v4172, %v4173
        %s4175 = vtos %v4174
        %vm4176 = vcmp.eq.s32.totalorder %v605, 0
        %v4177 = vstv %s929
        %v4178 = vsel %vm4176, %v4177, 0.0
        %vm4179 = vcmp.eq.s32.totalorder %v605, 1
        %v4180 = vstv %s939
        %v4181 = vsel %vm4179, %v4180, 0.0
        %v4182 = vadd.f32 %v4178, %v4181
        %vm4183 = vcmp.eq.s32.totalorder %v605, 2
        %v4184 = vstv %s3444
        %v4185 = vsel %vm4183, %v4184, 0.0
        %v4186 = vadd.f32 %v4182, %v4185
        %vm4187 = vcmp.eq.s32.totalorder %v605, 3
        %v4188 = vstv %s3468
        %v4189 = vsel %vm4187, %v4188, 0.0
        %v4190 = vadd.f32 %v4186, %v4189
        %vm4191 = vcmp.eq.s32.totalorder %v605, 4
        %v4192 = vstv %s3487
        %v4193 = vsel %vm4191, %v4192, 0.0
        %v4194 = vadd.f32 %v4190, %v4193
        %vm4195 = vcmp.eq.s32.totalorder %v605, 5
        %v4196 = vstv %s4155
        %v4197 = vsel %vm4195, %v4196, 0.0
        %v4198 = vadd.f32 %v4194, %v4197
        %vm4199 = vcmp.eq.s32.totalorder %v605, 6
        %v4200 = vstv %s4175
        %v4201 = vsel %vm4199, %v4200, 0.0
        %v4202 = vadd.f32 %v4198, %v4201
        %v4203 = vld [vmem:[#allocation2] sm:$0x1]
        %v4204 = vadd.f32 %v4203, %v4202
        %vm4205 = vcmask 57344
        %4206 = vst.msk [vmem:[#allocation2] sm:$0x1] %vm4205, %v4204
        %p4207 = scmp.eq.s32.totalorder %s24, 1
        // Predicated region
        $region73: #{tpu_custom_call.1} parent=67 // pred_check
          %p4208 = pneg %p4207
        $region74: #{tpu_custom_call.1} parent=67 // pred_check_branch
          %4210 = sbr.rel (%p4208) target = $region76
        $region75: #{tpu_custom_call.1} parent=67 // pred_region
          %v4211 = vld [vmem:[#allocation2] sm:$0x1]
          %v4212 = vsel %vm4176, %v4211, 0.0
          %v4213 = vsel %vm4205, %v4212, 0.0
          %4214 = vadd.xlane.f32.xlu0 %v4213
          %v4215 = vpop.xlane.xlu0 %4214
          %v4216 = vrot.slane %v4215, 4
          %v4217 = vadd.f32 %v4215, %v4216
          %v4218 = vrot.slane %v4217, 2
          %v4219 = vadd.f32 %v4217, %v4218
          %v4220 = vrot.slane %v4219, 1
          %v4221 = vadd.f32 %v4219, %v4220
          %s4222 = vtos %v4221
          %v4223 = vsel %vm4179, %v4211, 0.0
          %v4224 = vsel %vm4205, %v4223, 0.0
          %4225 = vadd.xlane.f32.xlu0 %v4224
          %v4226 = vpop.xlane.xlu0 %4225
          %v4227 = vrot.slane %v4226, 4
          %v4228 = vadd.f32 %v4226, %v4227
          %v4229 = vrot.slane %v4228, 2
          %v4230 = vadd.f32 %v4228, %v4229
          %v4231 = vrot.slane %v4230, 1
          %v4232 = vadd.f32 %v4230, %v4231
          %s4233 = vtos %v4232
          %v4234 = vstv %s4233
          %v4235 = vrcp.pop %v4234
          %s4236 = vtos %v4235
          %s4237 = smul.f32 %s4222, %s4236
          %v4238 = vsel %vm4183, %v4211, 0.0
          %v4239 = vsel %vm4205, %v4238, 0.0
          %4240 = vadd.xlane.f32.xlu0 %v4239
          %v4241 = vpop.xlane.xlu0 %4240
          %v4242 = vrot.slane %v4241, 4
          %v4243 = vadd.f32 %v4241, %v4242
          %v4244 = vrot.slane %v4243, 2
          %v4245 = vadd.f32 %v4243, %v4244
          %v4246 = vrot.slane %v4245, 1
          %v4247 = vadd.f32 %v4245, %v4246
          %s4248 = vtos %v4247
          %s4249 = smul.f32 %s4248, 2.0
          %v4250 = vsel %vm4187, %v4211, 0.0
          %v4251 = vsel %vm4205, %v4250, 0.0
          %4252 = vadd.xlane.f32.xlu0 %v4251
          %v4253 = vpop.xlane.xlu0 %4252
          %v4254 = vrot.slane %v4253, 4
          %v4255 = vadd.f32 %v4253, %v4254
          %v4256 = vrot.slane %v4255, 2
          %v4257 = vadd.f32 %v4255, %v4256
          %v4258 = vrot.slane %v4257, 1
          %v4259 = vadd.f32 %v4257, %v4258
          %s4260 = vtos %v4259
          %v4261 = vstv %s4260
          %v4262 = vrcp.pop %v4261
          %s4263 = vtos %v4262
          %s4264 = smul.f32 %s4249, %s4263
          %v4265 = vsel %vm4191, %v4211, 0.0
          %v4266 = vsel %vm4205, %v4265, 0.0
          %4267 = vadd.xlane.f32.xlu0 %v4266
          %v4268 = vpop.xlane.xlu0 %4267
          %v4269 = vrot.slane %v4268, 4
          %v4270 = vadd.f32 %v4268, %v4269
          %v4271 = vrot.slane %v4270, 2
          %v4272 = vadd.f32 %v4270, %v4271
          %v4273 = vrot.slane %v4272, 1
          %v4274 = vadd.f32 %v4272, %v4273
          %s4275 = vtos %v4274
          %s4276 = smul.f32 %s4275, -0.25
          %s4277 = smul.f32 %s4276, 0.03125
          %v4278 = vsel %vm4195, %v4211, 0.0
          %v4279 = vsel %vm4205, %v4278, 0.0
          %4280 = vadd.xlane.f32.xlu0 %v4279
          %v4281 = vpop.xlane.xlu0 %4280
          %v4282 = vrot.slane %v4281, 4
          %v4283 = vadd.f32 %v4281, %v4282
          %v4284 = vrot.slane %v4283, 2
          %v4285 = vadd.f32 %v4283, %v4284
          %v4286 = vrot.slane %v4285, 1
          %v4287 = vadd.f32 %v4285, %v4286
          %s4288 = vtos %v4287
          %v4289 = vsel %vm4199, %v4211, 0.0
          %v4290 = vsel %vm4205, %v4289, 0.0
          %4291 = vadd.xlane.f32.xlu0 %v4290
          %v4292 = vpop.xlane.xlu0 %4291
          %v4293 = vrot.slane %v4292, 4
          %v4294 = vadd.f32 %v4292, %v4293
          %v4295 = vrot.slane %v4294, 2
          %v4296 = vadd.f32 %v4294, %v4295
          %v4297 = vrot.slane %v4296, 1
          %v4298 = vadd.f32 %v4296, %v4297
          %s4299 = vtos %v4298
          %s4300 = sadd.f32 %s4288, %s4299
          %s4301 = smul.f32 %s4300, 0.0625
          %s4302 = sadd.f32 %s4237, %s4264
          %s4303 = sadd.f32 %s4302, %s4277
          %s4304 = sadd.f32 %s4303, %s4301
          %v4305 = vstv %s4237
          %v4306 = vsel %vm4176, %v4305, 0.0
          %v4307 = vstv %s4264
          %v4308 = vsel %vm4179, %v4307, 0.0
          %v4309 = vadd.f32 %v4306, %v4308
          %v4310 = vstv %s4277
          %v4311 = vsel %vm4183, %v4310, 0.0
          %v4312 = vadd.f32 %v4309, %v4311
          %v4313 = vstv %s4301
          %v4314 = vsel %vm4187, %v4313, 0.0
          %v4315 = vadd.f32 %v4312, %v4314
          %v4316 = vstv %s4304
          %v4317 = vsel %vm4191, %v4316, 0.0
          %v4318 = vadd.f32 %v4315, %v4317
          %4319 = vst.msk [vmem:[#allocation3] sm:$0x1] %vm4205, %v4318
        $region76: #{tpu_custom_call.1} parent=67 // pred_fallthru
          _
        // Predicated region
        $region77: #{tpu_custom_call.1} parent=67 // pred_check
          %p4320 = pneg %p324
        $region78: #{tpu_custom_call.1} parent=67 // pred_check_branch
          %4322 = sbr.rel (%p4320) target = $region80
        $region79: #{tpu_custom_call.1} parent=67 // pred_region
          %s4324 = ssub.s32 16, 16
          %4325 = vsyncadd [#allocation4], %s4324
          %s4327 = sshll.u32 [#allocation3], 4
          %s4328 = int_to_ptr.vmem [resolvable:$true] %s4327
          %4330 = dma.vmem_to_hbm [thread:$0]  %s4328, 16, %s12, [#allocation4]
        $region80: #{tpu_custom_call.1} parent=67 // pred_fallthru
          _
        // Predicated region
        $region81: #{tpu_custom_call.1} parent=67 // pred_check
          %p4331 = pneg %p324
        $region82: #{tpu_custom_call.1} parent=67 // pred_check_branch
          %4333 = sbr.rel (%p4331) target = $region84
        $region83: #{tpu_custom_call.1} parent=67 // pred_region
          %4334 = dma.done [#allocation4], 16
        $region84: #{tpu_custom_call.1} parent=67 // pred_fallthru
          _
      $region68: #{tpu_custom_call.1} parent=5 // pred_fallthru
        _
      %p4335 = scmp.le.s32.totalorder 2, %s19
      // Predicated region
      $region85: #{tpu_custom_call.1} parent=5 // pred_check
        %p4336 = pneg %p4335
      $region86: #{tpu_custom_call.1} parent=5 // pred_check_branch
        %4338 = sbr.rel (%p4336) target = $region88
      $region87: #{tpu_custom_call.1} parent=5 // pred_region
        %s4339 = ssub.s32 %s19, 2
      $region88: #{tpu_custom_call.1} parent=5 // pred_fallthru
        _
    $region6: #{tpu_custom_call.1} parent=1 // loop_footer
      %s23 = sadd.s32 1, %s19
    $region7: #{tpu_custom_call.1} parent=1 // loop_footer_branch
      %18 = sbr.rel target = $region3
    $region8: #{tpu_custom_call.1} parent=1 // loop_exit
      _
    %4340 = vsyncpa [#allocation4], 1
    %s4341 = scalar_lea.sflag [#allocation4], 1
    %4342 = vsyncpa %s4341, 1

</llo_original>
